<compile_context>
chip_gen: v6e
topology: v6e:2x2x1
jax: 0.10.0
libtpu: 0.0.40
codegen_flags: <defaults>
</compile_context>

<pallas_src>
import functools

import jax
import jax.numpy as jnp
from jax.experimental import pallas as pl
from jax.experimental.pallas import tpu as pltpu


def _round_up(x, m):
    return (x + m - 1) // m * m


# --------------------------- generation config ----------------------------- #
def _tpu_config():
    """Per-generation tiling / VMEM budget (conservative default if unknown)."""
    cfg = {"tm_max": 512, "vmem_limit": 32 * 1024 * 1024, "min_m_tiles": 1}
    try:
        kind = jax.devices()[0].device_kind.lower()
    except Exception:
        return cfg
    if "v5" in kind or "v6" in kind:
        # 128 MiB VMEM: big tiles, generous scoped limit.
        cfg.update(tm_max=1024, vmem_limit=64 * 1024 * 1024)
    elif "7" in kind:
        # v7x: 64 MiB VMEM per TensorCore, 2 TCs -> keep >=2 parallel tiles.
        cfg.update(tm_max=512, vmem_limit=48 * 1024 * 1024, min_m_tiles=2)
    return cfg


def _choose_m_tiling(m, cfg):
    """Pick (tm, padded M, n_tiles) minimizing padding; >=2 tiles on v7x."""
    min_tiles = cfg["min_m_tiles"] if m >= 32 else 1
    n_tiles = max(pl.cdiv(m, cfg["tm_max"]), min_tiles)
    tm = _round_up(pl.cdiv(m, n_tiles), 16)
    return tm, tm * n_tiles, n_tiles


# ----------------------- fused conv-as-GEMM kernel ------------------------- #
def _conv_gemm_kernel(x_ref, w_ref, b_ref, o_ref, *, taps_off, tm):
    """One (tm, OCp) output tile of a stride-1 conv expressed as per-tap GEMMs.

    x_ref: (rows, C)  full flat activation, VMEM-resident across the grid.
    w_ref: (T, C, OCp) per-tap weight matrices (bf16).
    b_ref: (1, OCp)   f32 bias.
    """
    m0 = pl.multiple_of(pl.program_id(0) * tm, tm)
    acc = jnp.zeros(o_ref.shape, jnp.float32)
    for t, off in enumerate(taps_off):                       # static unroll
        xt = x_ref[pl.ds(m0 + off, tm), :].astype(jnp.bfloat16)
        acc = acc + jnp.dot(xt, w_ref[t], preferred_element_type=jnp.float32)
    o_ref[...] = jnp.maximum(acc + b_ref[...], 0.0).astype(o_ref.dtype)


def _space_to_depth(x, s):
    """(N, H, W, C) -> (N, H/s, W/s, s*s*C), channel order (a, b, c)."""
    if s == 1:
        return x
    n, h, w, c = x.shape
    hp, wp = _round_up(h, s), _round_up(w, s)
    if (hp, wp) != (h, w):                      # pad tail; never read by valid outputs
        x = jnp.pad(x, ((0, 0), (0, hp - h), (0, wp - w), (0, 0)))
    ht, wt = hp // s, wp // s
    x = x.reshape(n, ht, s, wt, s, c)
    x = jnp.transpose(x, (0, 1, 3, 2, 4, 5))
    return x.reshape(n, ht, wt, s * s * c)


def conv_layer(x_nhwc, w_taps, b, oc, kernel, stride, cfg):
    """relu(conv2d(x)) with the fused Pallas kernel.  x_nhwc: (N, H, W, C) f32."""
    n, h, w, _ = x_nhwc.shape
    oh = (h - kernel) // stride + 1
    ow = (w - kernel) // stride + 1
    kt = kernel // stride                       # taps per axis after space-to-depth

    xs = _space_to_depth(x_nhwc, stride)        # stride-1 conv with kt x kt kernel
    _, ht, wt, cs = xs.shape
    taps_off = tuple(u * wt + v for u in range(kt) for v in range(kt))

    m = n * ht * wt                             # flat (over-computed) output rows
    tm, mp, n_tiles = _choose_m_tiling(m, cfg)
    rows = mp + taps_off[-1]                    # halo so every tap read is in-bounds
    x_flat = xs.reshape(m, cs)
    if rows != m:
        x_flat = jnp.pad(x_flat, ((0, rows - m), (0, 0)))

    ocp = w_taps.shape[-1]
    out = pl.pallas_call(
        functools.partial(_conv_gemm_kernel, taps_off=taps_off, tm=tm),
        out_shape=jax.ShapeDtypeStruct((mp, ocp), jnp.float32),
        grid=(n_tiles,),
        in_specs=[
            pl.BlockSpec((rows, cs), lambda i: (0, 0)),        # resident activation
            pl.BlockSpec(w_taps.shape, lambda i: (0, 0, 0)),   # resident tap weights
            pl.BlockSpec((1, ocp), lambda i: (0, 0)),          # bias
        ],
        out_specs=pl.BlockSpec((tm, ocp), lambda i: (i, 0)),
        compiler_params=pltpu.CompilerParams(
            dimension_semantics=("parallel",),
            vmem_limit_bytes=cfg["vmem_limit"],
        ),
    )(x_flat, w_taps, b)

    y = out[:m].reshape(n, ht, wt, ocp)
    return y[:, :oh, :ow, :oc]                  # drop over-computed rows/cols + OC pad


# --------------------------- fused fc1+fc2 head ---------------------------- #
def _head_kernel(x_ref, w1_ref, b1_ref, w2_ref, b2_ref, o_ref):
    h = jnp.dot(x_ref[...].astype(jnp.bfloat16), w1_ref[...],
                preferred_element_type=jnp.float32)
    h = jnp.maximum(h + b1_ref[...], 0.0)
    q = jnp.dot(h.astype(jnp.bfloat16), w2_ref[...],
                preferred_element_type=jnp.float32)
    o_ref[...] = (q + b2_ref[...]).astype(o_ref.dtype)


def dqn_head(x_flat, w1, b1, w2, b2, cfg):
    """q = (relu(x @ w1 + b1)) @ w2 + b2 in a single pallas_call."""
    m, k = x_flat.shape
    tm, mp, n_tiles = _choose_m_tiling(m, cfg)
    if mp != m:
        x_flat = jnp.pad(x_flat, ((0, mp - m), (0, 0)))
    ap = w2.shape[-1]
    out = pl.pallas_call(
        _head_kernel,
        out_shape=jax.ShapeDtypeStruct((mp, ap), jnp.float32),
        grid=(n_tiles,),
        in_specs=[
            pl.BlockSpec((tm, k), lambda i: (i, 0)),
            pl.BlockSpec(w1.shape, lambda i: (0, 0)),
            pl.BlockSpec(b1.shape, lambda i: (0, 0)),
            pl.BlockSpec(w2.shape, lambda i: (0, 0)),
            pl.BlockSpec(b2.shape, lambda i: (0, 0)),
        ],
        out_specs=pl.BlockSpec((tm, ap), lambda i: (i, 0)),
        compiler_params=pltpu.CompilerParams(
            dimension_semantics=("parallel",),
            vmem_limit_bytes=cfg["vmem_limit"],
        ),
    )(x_flat, w1, b1, w2, b2)
    return out[:m]


# --------------------------------- QNet ------------------------------------ #
CONV_DEFS = ((32, 8, 4), (64, 4, 2), (64, 3, 1))   # (out_channels, kernel, stride)


def conv_out_hw(h, w):
    for _, k, s in CONV_DEFS:
        h = (h - k) // s + 1
        w = (w - k) // s + 1
    return h, w


def init_qnet_params(key, state_shape, num_actions):
    """PyTorch-layout parameters: conv (OC, C, KH, KW), linear (OUT, IN)."""
    c, h, w = state_shape
    oh, ow = conv_out_hw(h, w)
    flat = 64 * oh * ow
    shapes = {
        "conv1_w": (32, c, 8, 8), "conv1_b": (32,),
        "conv2_w": (64, 32, 4, 4), "conv2_b": (64,),
        "conv3_w": (64, 64, 3, 3), "conv3_b": (64,),
        "fc1_w": (512, flat), "fc1_b": (512,),
        "fc2_w": (num_actions, 512), "fc2_b": (num_actions,),
    }
    params = {}
    keys = jax.random.split(key, len(shapes))
    for k_rng, (name, shp) in zip(keys, shapes.items()):
        if name.endswith("_b"):
            params[name] = 0.1 * jax.random.normal(k_rng, shp, jnp.float32)
        else:
            fan_in = 1
            for d in shp[1:]:
                fan_in *= d
            scale = 1.0 / jnp.sqrt(jnp.float32(fan_in))
            params[name] = scale * jax.random.normal(k_rng, shp, jnp.float32)
    return params


def _prep_conv(w, b, stride):
    """(OC, C, KH, KW) -> per-tap weights (kt*kt, s*s*C, OCp) bf16 + bias (1, OCp)."""
    oc, c, kh, kw = w.shape
    assert kh == kw and kh % stride == 0
    s, kt = stride, kh // stride
    wt = jnp.transpose(w, (2, 3, 1, 0))                    # (KH, KW, C, OC)
    wt = wt.reshape(kt, s, kt, s, c, oc)                   # (u, a, v, b, C, OC)
    wt = jnp.transpose(wt, (0, 2, 1, 3, 4, 5))             # (u, v, a, b, C, OC)
    wt = wt.reshape(kt * kt, s * s * c, oc)                # rows match s2d channels
    ocp = _round_up(oc, 128)
    wt = jnp.pad(wt, ((0, 0), (0, 0), (0, ocp - oc))).astype(jnp.bfloat16)
    bp = jnp.pad(b.astype(jnp.float32), (0, ocp - oc)).reshape(1, ocp)
    return {"w": wt, "b": bp}


def prepare_qnet_params(params, state_shape):
    """One-time hoist of all weight-side work (transpose, tap split, pad, bf16)."""
    _, h, w = state_shape
    oh, ow = conv_out_hw(h, w)
    prep = {
        "conv1": _prep_conv(params["conv1_w"], params["conv1_b"], 4),
        "conv2": _prep_conv(params["conv2_w"], params["conv2_b"], 2),
        "conv3": _prep_conv(params["conv3_w"], params["conv3_b"], 1),
    }
    # fc1 columns reordered from PyTorch's (C, H, W) flatten to our NHWC flatten.
    fc1 = params["fc1_w"].reshape(512, 64, oh, ow)
    fc1 = jnp.transpose(fc1, (0, 2, 3, 1)).reshape(512, oh * ow * 64).T
    a = params["fc2_w"].shape[0]
    ap = _round_up(a, 128)
    w2 = jnp.pad(params["fc2_w"].T, ((0, 0), (0, ap - a))).astype(jnp.bfloat16)
    b2 = jnp.pad(params["fc2_b"].astype(jnp.float32), (0, ap - a)).reshape(1, ap)
    prep["head"] = {
        "w1": fc1.astype(jnp.bfloat16),
        "b1": params["fc1_b"].astype(jnp.float32).reshape(1, 512),
        "w2": w2,
        "b2": b2,
    }
    return prep


def make_qnet_forward(num_actions, cfg=None):
    """Returns forward(prep, x): x (N, C, H, W) f32 -> Q-values (N, A) f32."""
    cfg = dict(_tpu_config() if cfg is None else cfg)

    def forward(prep, x):
        n = x.shape[0]
        x = jnp.transpose(x, (0, 2, 3, 1))                 # NCHW -> NHWC, once
        for idx, (oc, k, s) in enumerate(CONV_DEFS):
            layer = prep["conv%d" % (idx + 1)]
            x = conv_layer(x, layer["w"], layer["b"], oc, k, s, cfg)
        x = x.reshape(n, -1)                               # NHWC flatten
        q = dqn_head(x, prep["head"]["w1"], prep["head"]["b1"],
                     prep["head"]["w2"], prep["head"]["b2"], cfg)
        return q[:, :num_actions]

    return forward


# --------------------------- Pure-XLA reference ---------------------------- #
def qnet_reference(params, x):
    def conv(x, w, b, s):
        y = jax.lax.conv_general_dilated(
            x, w, window_strides=(s, s), padding="VALID",
            dimension_numbers=("NCHW", "OIHW", "NCHW"))
        return jax.nn.relu(y + b[None, :, None, None])

    x = conv(x, params["conv1_w"], params["conv1_b"], 4)
    x = conv(x, params["conv2_w"], params["conv2_b"], 2)
    x = conv(x, params["conv3_w"], params["conv3_b"], 1)
    x = x.reshape(x.shape[0], -1)
    x = jax.nn.relu(x @ params["fc1_w"].T + params["fc1_b"])
    return x @ params["fc2_w"].T + params["fc2_b"]


if __name__ == "__main__":
    # Small but conv-chain-valid shapes: (C=4, H=W=44) -> 10 -> 4 -> 2 spatial.
    state_shape = (4, 44, 44)
    num_actions = 6
    batch = 2

    key = jax.random.PRNGKey(0)
    k_params, k_x = jax.random.split(key)
    params = init_qnet_params(k_params, state_shape, num_actions)
    prep = prepare_qnet_params(params, state_shape)    # one-time weight prep
    x = jax.random.normal(k_x, (batch,) + state_shape, jnp.float32)

    qnet_forward = jax.jit(make_qnet_forward(num_actions))
    q = qnet_forward(prep, x)
    jax.block_until_ready(q)
    assert q.shape == (batch, num_actions), q.shape
    assert bool(jnp.all(jnp.isfinite(q)))

    # Loose check vs. a pure-XLA f32 reference (MXU inputs are bf16 in-kernel).
    q_ref = qnet_reference(params, x)
    err = float(jnp.max(jnp.abs(q - q_ref)))
    scale = float(jnp.max(jnp.abs(q_ref)))
    assert err <= 0.1 + 0.1 * scale, (err, scale)

    print("KERNEL_OK")
</pallas_src>

<mosaic_0001>
module attributes {stable_mosaic.version = 11 : i64} {
  func.func @_conv_gemm_kernel(%arg0: i32, %arg1: memref<268x64xf32, #tpu.memory_space<vmem>>, %arg2: memref<4x64x128xbf16, #tpu.memory_space<vmem>>, %arg3: memref<1x128xf32, #tpu.memory_space<vmem>>, %arg4: memref<256x128xf32, #tpu.memory_space<vmem>>) attributes {dimension_semantics = [#tpu.dimension_semantics<parallel>], iteration_bounds = array<i64: 1>, scalar_prefetch = 0 : i64, scratch_operands = 0 : i64, tpu.core_type = #tpu.core_type<tc>, window_params = [{pipeline_mode = #tpu.pipeline_mode<synchronous>, transform_indices = @transform_0, window_bounds = array<i64: 268, 64>}, {pipeline_mode = #tpu.pipeline_mode<synchronous>, transform_indices = @transform_1, window_bounds = array<i64: 4, 64, 128>}, {pipeline_mode = #tpu.pipeline_mode<synchronous>, transform_indices = @transform_2, window_bounds = array<i64: 1, 128>}, {transform_indices = @transform_3, window_bounds = array<i64: 256, 128>}]} {
    %c256_i32 = arith.constant 256 : i32
    %0 = arith.muli %arg0, %c256_i32 : i32
    %1 = tpu.assume_multiple %0, 256 : i32
    %cst = arith.constant 0.000000e+00 : f32
    %2 = vector.broadcast %cst : f32 to vector<256x128xf32>
    %c0_i32 = arith.constant 0 : i32
    %3 = arith.addi %1, %c0_i32 : i32
    %4 = arith.index_cast %3 : i32 to index
    %c0 = arith.constant 0 : index
    %5 = vector.load %arg1[%4, %c0] : memref<268x64xf32, #tpu.memory_space<vmem>>, vector<256x64xf32>
    %6 = arith.truncf %5 : vector<256x64xf32> to vector<256x64xbf16>
    %c0_0 = arith.constant 0 : index
    %c0_1 = arith.constant 0 : index
    %c0_2 = arith.constant 0 : index
    %7 = vector.load %arg2[%c0_0, %c0_1, %c0_2] : memref<4x64x128xbf16, #tpu.memory_space<vmem>>, vector<1x64x128xbf16>
    %8 = vector.shape_cast %7 : vector<1x64x128xbf16> to vector<64x128xbf16>
    %cst_3 = arith.constant dense<0.000000e+00> : vector<256x128xf32>
    %9 = tpu.matmul %6, %8, %cst_3 {dimension_numbers = #tpu.dot_dimension_numbers<[1], [0], [0], [1], [0, 0, 1, 1], [], []>} : vector<256x64xbf16>, vector<64x128xbf16>, vector<256x128xf32> -> vector<256x128xf32>
    %10 = arith.addf %2, %9 : vector<256x128xf32>
    %c1_i32 = arith.constant 1 : i32
    %11 = arith.addi %1, %c1_i32 : i32
    %12 = arith.index_cast %11 : i32 to index
    %c0_4 = arith.constant 0 : index
    %13 = vector.load %arg1[%12, %c0_4] : memref<268x64xf32, #tpu.memory_space<vmem>>, vector<256x64xf32>
    %14 = arith.truncf %13 : vector<256x64xf32> to vector<256x64xbf16>
    %c1 = arith.constant 1 : index
    %c0_5 = arith.constant 0 : index
    %c0_6 = arith.constant 0 : index
    %15 = vector.load %arg2[%c1, %c0_5, %c0_6] : memref<4x64x128xbf16, #tpu.memory_space<vmem>>, vector<1x64x128xbf16>
    %16 = vector.shape_cast %15 : vector<1x64x128xbf16> to vector<64x128xbf16>
    %cst_7 = arith.constant dense<0.000000e+00> : vector<256x128xf32>
    %17 = tpu.matmul %14, %16, %cst_7 {dimension_numbers = #tpu.dot_dimension_numbers<[1], [0], [0], [1], [0, 0, 1, 1], [], []>} : vector<256x64xbf16>, vector<64x128xbf16>, vector<256x128xf32> -> vector<256x128xf32>
    %18 = arith.addf %10, %17 : vector<256x128xf32>
    %c11_i32 = arith.constant 11 : i32
    %19 = arith.addi %1, %c11_i32 : i32
    %20 = arith.index_cast %19 : i32 to index
    %c0_8 = arith.constant 0 : index
    %21 = vector.load %arg1[%20, %c0_8] : memref<268x64xf32, #tpu.memory_space<vmem>>, vector<256x64xf32>
    %22 = arith.truncf %21 : vector<256x64xf32> to vector<256x64xbf16>
    %c2 = arith.constant 2 : index
    %c0_9 = arith.constant 0 : index
    %c0_10 = arith.constant 0 : index
    %23 = vector.load %arg2[%c2, %c0_9, %c0_10] : memref<4x64x128xbf16, #tpu.memory_space<vmem>>, vector<1x64x128xbf16>
    %24 = vector.shape_cast %23 : vector<1x64x128xbf16> to vector<64x128xbf16>
    %cst_11 = arith.constant dense<0.000000e+00> : vector<256x128xf32>
    %25 = tpu.matmul %22, %24, %cst_11 {dimension_numbers = #tpu.dot_dimension_numbers<[1], [0], [0], [1], [0, 0, 1, 1], [], []>} : vector<256x64xbf16>, vector<64x128xbf16>, vector<256x128xf32> -> vector<256x128xf32>
    %26 = arith.addf %18, %25 : vector<256x128xf32>
    %c12_i32 = arith.constant 12 : i32
    %27 = arith.addi %1, %c12_i32 : i32
    %28 = arith.index_cast %27 : i32 to index
    %c0_12 = arith.constant 0 : index
    %29 = vector.load %arg1[%28, %c0_12] : memref<268x64xf32, #tpu.memory_space<vmem>>, vector<256x64xf32>
    %30 = arith.truncf %29 : vector<256x64xf32> to vector<256x64xbf16>
    %c3 = arith.constant 3 : index
    %c0_13 = arith.constant 0 : index
    %c0_14 = arith.constant 0 : index
    %31 = vector.load %arg2[%c3, %c0_13, %c0_14] : memref<4x64x128xbf16, #tpu.memory_space<vmem>>, vector<1x64x128xbf16>
    %32 = vector.shape_cast %31 : vector<1x64x128xbf16> to vector<64x128xbf16>
    %cst_15 = arith.constant dense<0.000000e+00> : vector<256x128xf32>
    %33 = tpu.matmul %30, %32, %cst_15 {dimension_numbers = #tpu.dot_dimension_numbers<[1], [0], [0], [1], [0, 0, 1, 1], [], []>} : vector<256x64xbf16>, vector<64x128xbf16>, vector<256x128xf32> -> vector<256x128xf32>
    %34 = arith.addf %26, %33 : vector<256x128xf32>
    %c0_16 = arith.constant 0 : index
    %c0_17 = arith.constant 0 : index
    %35 = vector.load %arg3[%c0_16, %c0_17] : memref<1x128xf32, #tpu.memory_space<vmem>>, vector<1x128xf32>
    %36 = vector.broadcast %35 : vector<1x128xf32> to vector<256x128xf32>
    %37 = arith.addf %34, %36 : vector<256x128xf32>
    %cst_18 = arith.constant 0.000000e+00 : f32
    %38 = vector.broadcast %cst_18 : f32 to vector<256x128xf32>
    %39 = arith.maximumf %37, %38 : vector<256x128xf32>
    %c0_19 = arith.constant 0 : index
    %c0_20 = arith.constant 0 : index
    %40 = vector.load %arg4[%c0_19, %c0_20] : memref<256x128xf32, #tpu.memory_space<vmem>>, vector<256x128xf32>
    tpu.vector_store %arg4[%c0_19, %c0_20], %39 {strides = array<i32>} : memref<256x128xf32, #tpu.memory_space<vmem>>, vector<256x128xf32>,
    return
  }
  func.func @transform_0(%arg0: i32) -> (i32, i32) {
    %c0_i32 = arith.constant 0 : i32
    %c0_i32_0 = arith.constant 0 : i32
    %c0_i32_1 = arith.constant 0 : i32
    return %c0_i32, %c0_i32_0 : i32, i32
  }
  func.func @transform_1(%arg0: i32) -> (i32, i32, i32) {
    %c0_i32 = arith.constant 0 : i32
    %c0_i32_0 = arith.constant 0 : i32
    %c0_i32_1 = arith.constant 0 : i32
    %c0_i32_2 = arith.constant 0 : i32
    return %c0_i32, %c0_i32_0, %c0_i32_1 : i32, i32, i32
  }
  func.func @transform_2(%arg0: i32) -> (i32, i32) {
    %c0_i32 = arith.constant 0 : i32
    %c0_i32_0 = arith.constant 0 : i32
    %c0_i32_1 = arith.constant 0 : i32
    return %c0_i32, %c0_i32_0 : i32, i32
  }
  func.func @transform_3(%arg0: i32) -> (i32, i32) {
    %c0_i32 = arith.constant 0 : i32
    %c0_i32_0 = arith.constant 0 : i32
    return %arg0, %c0_i32 : i32, i32
  }
}

module attributes {stable_mosaic.version = 11 : i64} {
  func.func @_conv_gemm_kernel(%arg0: i32, %arg1: memref<70x128xf32, #tpu.memory_space<vmem>>, %arg2: memref<4x128x128xbf16, #tpu.memory_space<vmem>>, %arg3: memref<1x128xf32, #tpu.memory_space<vmem>>, %arg4: memref<64x128xf32, #tpu.memory_space<vmem>>) attributes {dimension_semantics = [#tpu.dimension_semantics<parallel>], iteration_bounds = array<i64: 1>, scalar_prefetch = 0 : i64, scratch_operands = 0 : i64, tpu.core_type = #tpu.core_type<tc>, window_params = [{pipeline_mode = #tpu.pipeline_mode<synchronous>, transform_indices = @transform_0, window_bounds = array<i64: 70, 128>}, {pipeline_mode = #tpu.pipeline_mode<synchronous>, transform_indices = @transform_1, window_bounds = array<i64: 4, 128, 128>}, {pipeline_mode = #tpu.pipeline_mode<synchronous>, transform_indices = @transform_2, window_bounds = array<i64: 1, 128>}, {transform_indices = @transform_3, window_bounds = array<i64: 64, 128>}]} {
    %c64_i32 = arith.constant 64 : i32
    %0 = arith.muli %arg0, %c64_i32 : i32
    %1 = tpu.assume_multiple %0, 64 : i32
    %cst = arith.constant 0.000000e+00 : f32
    %2 = vector.broadcast %cst : f32 to vector<64x128xf32>
    %c0_i32 = arith.constant 0 : i32
    %3 = arith.addi %1, %c0_i32 : i32
    %4 = arith.index_cast %3 : i32 to index
    %c0 = arith.constant 0 : index
    %5 = vector.load %arg1[%4, %c0] : memref<70x128xf32, #tpu.memory_space<vmem>>, vector<64x128xf32>
    %6 = arith.truncf %5 : vector<64x128xf32> to vector<64x128xbf16>
    %c0_0 = arith.constant 0 : index
    %c0_1 = arith.constant 0 : index
    %c0_2 = arith.constant 0 : index
    %7 = vector.load %arg2[%c0_0, %c0_1, %c0_2] : memref<4x128x128xbf16, #tpu.memory_space<vmem>>, vector<1x128x128xbf16>
    %8 = vector.shape_cast %7 : vector<1x128x128xbf16> to vector<128x128xbf16>
    %cst_3 = arith.constant dense<0.000000e+00> : vector<64x128xf32>
    %9 = tpu.matmul %6, %8, %cst_3 {dimension_numbers = #tpu.dot_dimension_numbers<[1], [0], [0], [1], [0, 0, 1, 1], [], []>} : vector<64x128xbf16>, vector<128x128xbf16>, vector<64x128xf32> -> vector<64x128xf32>
    %10 = arith.addf %2, %9 : vector<64x128xf32>
    %c1_i32 = arith.constant 1 : i32
    %11 = arith.addi %1, %c1_i32 : i32
    %12 = arith.index_cast %11 : i32 to index
    %c0_4 = arith.constant 0 : index
    %13 = vector.load %arg1[%12, %c0_4] : memref<70x128xf32, #tpu.memory_space<vmem>>, vector<64x128xf32>
    %14 = arith.truncf %13 : vector<64x128xf32> to vector<64x128xbf16>
    %c1 = arith.constant 1 : index
    %c0_5 = arith.constant 0 : index
    %c0_6 = arith.constant 0 : index
    %15 = vector.load %arg2[%c1, %c0_5, %c0_6] : memref<4x128x128xbf16, #tpu.memory_space<vmem>>, vector<1x128x128xbf16>
    %16 = vector.shape_cast %15 : vector<1x128x128xbf16> to vector<128x128xbf16>
    %cst_7 = arith.constant dense<0.000000e+00> : vector<64x128xf32>
    %17 = tpu.matmul %14, %16, %cst_7 {dimension_numbers = #tpu.dot_dimension_numbers<[1], [0], [0], [1], [0, 0, 1, 1], [], []>} : vector<64x128xbf16>, vector<128x128xbf16>, vector<64x128xf32> -> vector<64x128xf32>
    %18 = arith.addf %10, %17 : vector<64x128xf32>
    %c5_i32 = arith.constant 5 : i32
    %19 = arith.addi %1, %c5_i32 : i32
    %20 = arith.index_cast %19 : i32 to index
    %c0_8 = arith.constant 0 : index
    %21 = vector.load %arg1[%20, %c0_8] : memref<70x128xf32, #tpu.memory_space<vmem>>, vector<64x128xf32>
    %22 = arith.truncf %21 : vector<64x128xf32> to vector<64x128xbf16>
    %c2 = arith.constant 2 : index
    %c0_9 = arith.constant 0 : index
    %c0_10 = arith.constant 0 : index
    %23 = vector.load %arg2[%c2, %c0_9, %c0_10] : memref<4x128x128xbf16, #tpu.memory_space<vmem>>, vector<1x128x128xbf16>
    %24 = vector.shape_cast %23 : vector<1x128x128xbf16> to vector<128x128xbf16>
    %cst_11 = arith.constant dense<0.000000e+00> : vector<64x128xf32>
    %25 = tpu.matmul %22, %24, %cst_11 {dimension_numbers = #tpu.dot_dimension_numbers<[1], [0], [0], [1], [0, 0, 1, 1], [], []>} : vector<64x128xbf16>, vector<128x128xbf16>, vector<64x128xf32> -> vector<64x128xf32>
    %26 = arith.addf %18, %25 : vector<64x128xf32>
    %c6_i32 = arith.constant 6 : i32
    %27 = arith.addi %1, %c6_i32 : i32
    %28 = arith.index_cast %27 : i32 to index
    %c0_12 = arith.constant 0 : index
    %29 = vector.load %arg1[%28, %c0_12] : memref<70x128xf32, #tpu.memory_space<vmem>>, vector<64x128xf32>
    %30 = arith.truncf %29 : vector<64x128xf32> to vector<64x128xbf16>
    %c3 = arith.constant 3 : index
    %c0_13 = arith.constant 0 : index
    %c0_14 = arith.constant 0 : index
    %31 = vector.load %arg2[%c3, %c0_13, %c0_14] : memref<4x128x128xbf16, #tpu.memory_space<vmem>>, vector<1x128x128xbf16>
    %32 = vector.shape_cast %31 : vector<1x128x128xbf16> to vector<128x128xbf16>
    %cst_15 = arith.constant dense<0.000000e+00> : vector<64x128xf32>
    %33 = tpu.matmul %30, %32, %cst_15 {dimension_numbers = #tpu.dot_dimension_numbers<[1], [0], [0], [1], [0, 0, 1, 1], [], []>} : vector<64x128xbf16>, vector<128x128xbf16>, vector<64x128xf32> -> vector<64x128xf32>
    %34 = arith.addf %26, %33 : vector<64x128xf32>
    %c0_16 = arith.constant 0 : index
    %c0_17 = arith.constant 0 : index
    %35 = vector.load %arg3[%c0_16, %c0_17] : memref<1x128xf32, #tpu.memory_space<vmem>>, vector<1x128xf32>
    %36 = vector.broadcast %35 : vector<1x128xf32> to vector<64x128xf32>
    %37 = arith.addf %34, %36 : vector<64x128xf32>
    %cst_18 = arith.constant 0.000000e+00 : f32
    %38 = vector.broadcast %cst_18 : f32 to vector<64x128xf32>
    %39 = arith.maximumf %37, %38 : vector<64x128xf32>
    %c0_19 = arith.constant 0 : index
    %c0_20 = arith.constant 0 : index
    %40 = vector.load %arg4[%c0_19, %c0_20] : memref<64x128xf32, #tpu.memory_space<vmem>>, vector<64x128xf32>
    tpu.vector_store %arg4[%c0_19, %c0_20], %39 {strides = array<i32>} : memref<64x128xf32, #tpu.memory_space<vmem>>, vector<64x128xf32>,
    return
  }
  func.func @transform_0(%arg0: i32) -> (i32, i32) {
    %c0_i32 = arith.constant 0 : i32
    %c0_i32_0 = arith.constant 0 : i32
    %c0_i32_1 = arith.constant 0 : i32
    return %c0_i32, %c0_i32_0 : i32, i32
  }
  func.func @transform_1(%arg0: i32) -> (i32, i32, i32) {
    %c0_i32 = arith.constant 0 : i32
    %c0_i32_0 = arith.constant 0 : i32
    %c0_i32_1 = arith.constant 0 : i32
    %c0_i32_2 = arith.constant 0 : i32
    return %c0_i32, %c0_i32_0, %c0_i32_1 : i32, i32, i32
  }
  func.func @transform_2(%arg0: i32) -> (i32, i32) {
    %c0_i32 = arith.constant 0 : i32
    %c0_i32_0 = arith.constant 0 : i32
    %c0_i32_1 = arith.constant 0 : i32
    return %c0_i32, %c0_i32_0 : i32, i32
  }
  func.func @transform_3(%arg0: i32) -> (i32, i32) {
    %c0_i32 = arith.constant 0 : i32
    %c0_i32_0 = arith.constant 0 : i32
    return %arg0, %c0_i32 : i32, i32
  }
}

module attributes {stable_mosaic.version = 11 : i64} {
  func.func @_conv_gemm_kernel(%arg0: i32, %arg1: memref<42x64xf32, #tpu.memory_space<vmem>>, %arg2: memref<9x64x128xbf16, #tpu.memory_space<vmem>>, %arg3: memref<1x128xf32, #tpu.memory_space<vmem>>, %arg4: memref<32x128xf32, #tpu.memory_space<vmem>>) attributes {dimension_semantics = [#tpu.dimension_semantics<parallel>], iteration_bounds = array<i64: 1>, scalar_prefetch = 0 : i64, scratch_operands = 0 : i64, tpu.core_type = #tpu.core_type<tc>, window_params = [{pipeline_mode = #tpu.pipeline_mode<synchronous>, transform_indices = @transform_0, window_bounds = array<i64: 42, 64>}, {pipeline_mode = #tpu.pipeline_mode<synchronous>, transform_indices = @transform_1, window_bounds = array<i64: 9, 64, 128>}, {pipeline_mode = #tpu.pipeline_mode<synchronous>, transform_indices = @transform_2, window_bounds = array<i64: 1, 128>}, {transform_indices = @transform_3, window_bounds = array<i64: 32, 128>}]} {
    %c32_i32 = arith.constant 32 : i32
    %0 = arith.muli %arg0, %c32_i32 : i32
    %1 = tpu.assume_multiple %0, 32 : i32
    %cst = arith.constant 0.000000e+00 : f32
    %2 = vector.broadcast %cst : f32 to vector<32x128xf32>
    %c0_i32 = arith.constant 0 : i32
    %3 = arith.addi %1, %c0_i32 : i32
    %4 = arith.index_cast %3 : i32 to index
    %c0 = arith.constant 0 : index
    %5 = vector.load %arg1[%4, %c0] : memref<42x64xf32, #tpu.memory_space<vmem>>, vector<32x64xf32>
    %6 = arith.truncf %5 : vector<32x64xf32> to vector<32x64xbf16>
    %c0_0 = arith.constant 0 : index
    %c0_1 = arith.constant 0 : index
    %c0_2 = arith.constant 0 : index
    %7 = vector.load %arg2[%c0_0, %c0_1, %c0_2] : memref<9x64x128xbf16, #tpu.memory_space<vmem>>, vector<1x64x128xbf16>
    %8 = vector.shape_cast %7 : vector<1x64x128xbf16> to vector<64x128xbf16>
    %cst_3 = arith.constant dense<0.000000e+00> : vector<32x128xf32>
    %9 = tpu.matmul %6, %8, %cst_3 {dimension_numbers = #tpu.dot_dimension_numbers<[1], [0], [0], [1], [0, 0, 1, 1], [], []>} : vector<32x64xbf16>, vector<64x128xbf16>, vector<32x128xf32> -> vector<32x128xf32>
    %10 = arith.addf %2, %9 : vector<32x128xf32>
    %c1_i32 = arith.constant 1 : i32
    %11 = arith.addi %1, %c1_i32 : i32
    %12 = arith.index_cast %11 : i32 to index
    %c0_4 = arith.constant 0 : index
    %13 = vector.load %arg1[%12, %c0_4] : memref<42x64xf32, #tpu.memory_space<vmem>>, vector<32x64xf32>
    %14 = arith.truncf %13 : vector<32x64xf32> to vector<32x64xbf16>
    %c1 = arith.constant 1 : index
    %c0_5 = arith.constant 0 : index
    %c0_6 = arith.constant 0 : index
    %15 = vector.load %arg2[%c1, %c0_5, %c0_6] : memref<9x64x128xbf16, #tpu.memory_space<vmem>>, vector<1x64x128xbf16>
    %16 = vector.shape_cast %15 : vector<1x64x128xbf16> to vector<64x128xbf16>
    %cst_7 = arith.constant dense<0.000000e+00> : vector<32x128xf32>
    %17 = tpu.matmul %14, %16, %cst_7 {dimension_numbers = #tpu.dot_dimension_numbers<[1], [0], [0], [1], [0, 0, 1, 1], [], []>} : vector<32x64xbf16>, vector<64x128xbf16>, vector<32x128xf32> -> vector<32x128xf32>
    %18 = arith.addf %10, %17 : vector<32x128xf32>
    %c2_i32 = arith.constant 2 : i32
    %19 = arith.addi %1, %c2_i32 : i32
    %20 = arith.index_cast %19 : i32 to index
    %c0_8 = arith.constant 0 : index
    %21 = vector.load %arg1[%20, %c0_8] : memref<42x64xf32, #tpu.memory_space<vmem>>, vector<32x64xf32>
    %22 = arith.truncf %21 : vector<32x64xf32> to vector<32x64xbf16>
    %c2 = arith.constant 2 : index
    %c0_9 = arith.constant 0 : index
    %c0_10 = arith.constant 0 : index
    %23 = vector.load %arg2[%c2, %c0_9, %c0_10] : memref<9x64x128xbf16, #tpu.memory_space<vmem>>, vector<1x64x128xbf16>
    %24 = vector.shape_cast %23 : vector<1x64x128xbf16> to vector<64x128xbf16>
    %cst_11 = arith.constant dense<0.000000e+00> : vector<32x128xf32>
    %25 = tpu.matmul %22, %24, %cst_11 {dimension_numbers = #tpu.dot_dimension_numbers<[1], [0], [0], [1], [0, 0, 1, 1], [], []>} : vector<32x64xbf16>, vector<64x128xbf16>, vector<32x128xf32> -> vector<32x128xf32>
    %26 = arith.addf %18, %25 : vector<32x128xf32>
    %c4_i32 = arith.constant 4 : i32
    %27 = arith.addi %1, %c4_i32 : i32
    %28 = arith.index_cast %27 : i32 to index
    %c0_12 = arith.constant 0 : index
    %29 = vector.load %arg1[%28, %c0_12] : memref<42x64xf32, #tpu.memory_space<vmem>>, vector<32x64xf32>
    %30 = arith.truncf %29 : vector<32x64xf32> to vector<32x64xbf16>
    %c3 = arith.constant 3 : index
    %c0_13 = arith.constant 0 : index
    %c0_14 = arith.constant 0 : index
    %31 = vector.load %arg2[%c3, %c0_13, %c0_14] : memref<9x64x128xbf16, #tpu.memory_space<vmem>>, vector<1x64x128xbf16>
    %32 = vector.shape_cast %31 : vector<1x64x128xbf16> to vector<64x128xbf16>
    %cst_15 = arith.constant dense<0.000000e+00> : vector<32x128xf32>
    %33 = tpu.matmul %30, %32, %cst_15 {dimension_numbers = #tpu.dot_dimension_numbers<[1], [0], [0], [1], [0, 0, 1, 1], [], []>} : vector<32x64xbf16>, vector<64x128xbf16>, vector<32x128xf32> -> vector<32x128xf32>
    %34 = arith.addf %26, %33 : vector<32x128xf32>
    %c5_i32 = arith.constant 5 : i32
    %35 = arith.addi %1, %c5_i32 : i32
    %36 = arith.index_cast %35 : i32 to index
    %c0_16 = arith.constant 0 : index
    %37 = vector.load %arg1[%36, %c0_16] : memref<42x64xf32, #tpu.memory_space<vmem>>, vector<32x64xf32>
    %38 = arith.truncf %37 : vector<32x64xf32> to vector<32x64xbf16>
    %c4 = arith.constant 4 : index
    %c0_17 = arith.constant 0 : index
    %c0_18 = arith.constant 0 : index
    %39 = vector.load %arg2[%c4, %c0_17, %c0_18] : memref<9x64x128xbf16, #tpu.memory_space<vmem>>, vector<1x64x128xbf16>
    %40 = vector.shape_cast %39 : vector<1x64x128xbf16> to vector<64x128xbf16>
    %cst_19 = arith.constant dense<0.000000e+00> : vector<32x128xf32>
    %41 = tpu.matmul %38, %40, %cst_19 {dimension_numbers = #tpu.dot_dimension_numbers<[1], [0], [0], [1], [0, 0, 1, 1], [], []>} : vector<32x64xbf16>, vector<64x128xbf16>, vector<32x128xf32> -> vector<32x128xf32>
    %42 = arith.addf %34, %41 : vector<32x128xf32>
    %c6_i32 = arith.constant 6 : i32
    %43 = arith.addi %1, %c6_i32 : i32
    %44 = arith.index_cast %43 : i32 to index
    %c0_20 = arith.constant 0 : index
    %45 = vector.load %arg1[%44, %c0_20] : memref<42x64xf32, #tpu.memory_space<vmem>>, vector<32x64xf32>
    %46 = arith.truncf %45 : vector<32x64xf32> to vector<32x64xbf16>
    %c5 = arith.constant 5 : index
    %c0_21 = arith.constant 0 : index
    %c0_22 = arith.constant 0 : index
    %47 = vector.load %arg2[%c5, %c0_21, %c0_22] : memref<9x64x128xbf16, #tpu.memory_space<vmem>>, vector<1x64x128xbf16>
    %48 = vector.shape_cast %47 : vector<1x64x128xbf16> to vector<64x128xbf16>
    %cst_23 = arith.constant dense<0.000000e+00> : vector<32x128xf32>
    %49 = tpu.matmul %46, %48, %cst_23 {dimension_numbers = #tpu.dot_dimension_numbers<[1], [0], [0], [1], [0, 0, 1, 1], [], []>} : vector<32x64xbf16>, vector<64x128xbf16>, vector<32x128xf32> -> vector<32x128xf32>
    %50 = arith.addf %42, %49 : vector<32x128xf32>
    %c8_i32 = arith.constant 8 : i32
    %51 = arith.addi %1, %c8_i32 : i32
    %52 = arith.index_cast %51 : i32 to index
    %c0_24 = arith.constant 0 : index
    %53 = vector.load %arg1[%52, %c0_24] : memref<42x64xf32, #tpu.memory_space<vmem>>, vector<32x64xf32>
    %54 = arith.truncf %53 : vector<32x64xf32> to vector<32x64xbf16>
    %c6 = arith.constant 6 : index
    %c0_25 = arith.constant 0 : index
    %c0_26 = arith.constant 0 : index
    %55 = vector.load %arg2[%c6, %c0_25, %c0_26] : memref<9x64x128xbf16, #tpu.memory_space<vmem>>, vector<1x64x128xbf16>
    %56 = vector.shape_cast %55 : vector<1x64x128xbf16> to vector<64x128xbf16>
    %cst_27 = arith.constant dense<0.000000e+00> : vector<32x128xf32>
    %57 = tpu.matmul %54, %56, %cst_27 {dimension_numbers = #tpu.dot_dimension_numbers<[1], [0], [0], [1], [0, 0, 1, 1], [], []>} : vector<32x64xbf16>, vector<64x128xbf16>, vector<32x128xf32> -> vector<32x128xf32>
    %58 = arith.addf %50, %57 : vector<32x128xf32>
    %c9_i32 = arith.constant 9 : i32
    %59 = arith.addi %1, %c9_i32 : i32
    %60 = arith.index_cast %59 : i32 to index
    %c0_28 = arith.constant 0 : index
    %61 = vector.load %arg1[%60, %c0_28] : memref<42x64xf32, #tpu.memory_space<vmem>>, vector<32x64xf32>
    %62 = arith.truncf %61 : vector<32x64xf32> to vector<32x64xbf16>
    %c7 = arith.constant 7 : index
    %c0_29 = arith.constant 0 : index
    %c0_30 = arith.constant 0 : index
    %63 = vector.load %arg2[%c7, %c0_29, %c0_30] : memref<9x64x128xbf16, #tpu.memory_space<vmem>>, vector<1x64x128xbf16>
    %64 = vector.shape_cast %63 : vector<1x64x128xbf16> to vector<64x128xbf16>
    %cst_31 = arith.constant dense<0.000000e+00> : vector<32x128xf32>
    %65 = tpu.matmul %62, %64, %cst_31 {dimension_numbers = #tpu.dot_dimension_numbers<[1], [0], [0], [1], [0, 0, 1, 1], [], []>} : vector<32x64xbf16>, vector<64x128xbf16>, vector<32x128xf32> -> vector<32x128xf32>
    %66 = arith.addf %58, %65 : vector<32x128xf32>
    %c10_i32 = arith.constant 10 : i32
    %67 = arith.addi %1, %c10_i32 : i32
    %68 = arith.index_cast %67 : i32 to index
    %c0_32 = arith.constant 0 : index
    %69 = vector.load %arg1[%68, %c0_32] : memref<42x64xf32, #tpu.memory_space<vmem>>, vector<32x64xf32>
    %70 = arith.truncf %69 : vector<32x64xf32> to vector<32x64xbf16>
    %c8 = arith.constant 8 : index
    %c0_33 = arith.constant 0 : index
    %c0_34 = arith.constant 0 : index
    %71 = vector.load %arg2[%c8, %c0_33, %c0_34] : memref<9x64x128xbf16, #tpu.memory_space<vmem>>, vector<1x64x128xbf16>
    %72 = vector.shape_cast %71 : vector<1x64x128xbf16> to vector<64x128xbf16>
    %cst_35 = arith.constant dense<0.000000e+00> : vector<32x128xf32>
    %73 = tpu.matmul %70, %72, %cst_35 {dimension_numbers = #tpu.dot_dimension_numbers<[1], [0], [0], [1], [0, 0, 1, 1], [], []>} : vector<32x64xbf16>, vector<64x128xbf16>, vector<32x128xf32> -> vector<32x128xf32>
    %74 = arith.addf %66, %73 : vector<32x128xf32>
    %c0_36 = arith.constant 0 : index
    %c0_37 = arith.constant 0 : index
    %75 = vector.load %arg3[%c0_36, %c0_37] : memref<1x128xf32, #tpu.memory_space<vmem>>, vector<1x128xf32>
    %76 = vector.broadcast %75 : vector<1x128xf32> to vector<32x128xf32>
    %77 = arith.addf %74, %76 : vector<32x128xf32>
    %cst_38 = arith.constant 0.000000e+00 : f32
    %78 = vector.broadcast %cst_38 : f32 to vector<32x128xf32>
    %79 = arith.maximumf %77, %78 : vector<32x128xf32>
    %c0_39 = arith.constant 0 : index
    %c0_40 = arith.constant 0 : index
    %80 = vector.load %arg4[%c0_39, %c0_40] : memref<32x128xf32, #tpu.memory_space<vmem>>, vector<32x128xf32>
    tpu.vector_store %arg4[%c0_39, %c0_40], %79 {strides = array<i32>} : memref<32x128xf32, #tpu.memory_space<vmem>>, vector<32x128xf32>,
    return
  }
  func.func @transform_0(%arg0: i32) -> (i32, i32) {
    %c0_i32 = arith.constant 0 : i32
    %c0_i32_0 = arith.constant 0 : i32
    %c0_i32_1 = arith.constant 0 : i32
    return %c0_i32, %c0_i32_0 : i32, i32
  }
  func.func @transform_1(%arg0: i32) -> (i32, i32, i32) {
    %c0_i32 = arith.constant 0 : i32
    %c0_i32_0 = arith.constant 0 : i32
    %c0_i32_1 = arith.constant 0 : i32
    %c0_i32_2 = arith.constant 0 : i32
    return %c0_i32, %c0_i32_0, %c0_i32_1 : i32, i32, i32
  }
  func.func @transform_2(%arg0: i32) -> (i32, i32) {
    %c0_i32 = arith.constant 0 : i32
    %c0_i32_0 = arith.constant 0 : i32
    %c0_i32_1 = arith.constant 0 : i32
    return %c0_i32, %c0_i32_0 : i32, i32
  }
  func.func @transform_3(%arg0: i32) -> (i32, i32) {
    %c0_i32 = arith.constant 0 : i32
    %c0_i32_0 = arith.constant 0 : i32
    return %arg0, %c0_i32 : i32, i32
  }
}

module attributes {stable_mosaic.version = 11 : i64} {
  func.func @_head_kernel(%arg0: i32, %arg1: memref<16x256xf32, #tpu.memory_space<vmem>>, %arg2: memref<256x512xbf16, #tpu.memory_space<vmem>>, %arg3: memref<1x512xf32, #tpu.memory_space<vmem>>, %arg4: memref<512x128xbf16, #tpu.memory_space<vmem>>, %arg5: memref<1x128xf32, #tpu.memory_space<vmem>>, %arg6: memref<16x128xf32, #tpu.memory_space<vmem>>) attributes {dimension_semantics = [#tpu.dimension_semantics<parallel>], iteration_bounds = array<i64: 1>, scalar_prefetch = 0 : i64, scratch_operands = 0 : i64, tpu.core_type = #tpu.core_type<tc>, window_params = [{transform_indices = @transform_0, window_bounds = array<i64: 16, 256>}, {pipeline_mode = #tpu.pipeline_mode<synchronous>, transform_indices = @transform_1, window_bounds = array<i64: 256, 512>}, {pipeline_mode = #tpu.pipeline_mode<synchronous>, transform_indices = @transform_2, window_bounds = array<i64: 1, 512>}, {pipeline_mode = #tpu.pipeline_mode<synchronous>, transform_indices = @transform_3, window_bounds = array<i64: 512, 128>}, {pipeline_mode = #tpu.pipeline_mode<synchronous>, transform_indices = @transform_4, window_bounds = array<i64: 1, 128>}, {transform_indices = @transform_5, window_bounds = array<i64: 16, 128>}]} {
    %c0 = arith.constant 0 : index
    %c0_0 = arith.constant 0 : index
    %0 = vector.load %arg1[%c0, %c0_0] : memref<16x256xf32, #tpu.memory_space<vmem>>, vector<16x256xf32>
    %1 = arith.truncf %0 : vector<16x256xf32> to vector<16x256xbf16>
    %c0_1 = arith.constant 0 : index
    %c0_2 = arith.constant 0 : index
    %2 = vector.load %arg2[%c0_1, %c0_2] : memref<256x512xbf16, #tpu.memory_space<vmem>>, vector<256x512xbf16>
    %cst = arith.constant dense<0.000000e+00> : vector<16x512xf32>
    %3 = tpu.matmul %1, %2, %cst {dimension_numbers = #tpu.dot_dimension_numbers<[1], [0], [0], [1], [0, 0, 1, 1], [], []>} : vector<16x256xbf16>, vector<256x512xbf16>, vector<16x512xf32> -> vector<16x512xf32>
    %c0_3 = arith.constant 0 : index
    %c0_4 = arith.constant 0 : index
    %4 = vector.load %arg3[%c0_3, %c0_4] : memref<1x512xf32, #tpu.memory_space<vmem>>, vector<1x512xf32>
    %5 = vector.broadcast %4 : vector<1x512xf32> to vector<16x512xf32>
    %6 = arith.addf %3, %5 : vector<16x512xf32>
    %cst_5 = arith.constant 0.000000e+00 : f32
    %7 = vector.broadcast %cst_5 : f32 to vector<16x512xf32>
    %8 = arith.maximumf %6, %7 : vector<16x512xf32>
    %9 = arith.truncf %8 : vector<16x512xf32> to vector<16x512xbf16>
    %c0_6 = arith.constant 0 : index
    %c0_7 = arith.constant 0 : index
    %10 = vector.load %arg4[%c0_6, %c0_7] : memref<512x128xbf16, #tpu.memory_space<vmem>>, vector<512x128xbf16>
    %cst_8 = arith.constant dense<0.000000e+00> : vector<16x128xf32>
    %11 = tpu.matmul %9, %10, %cst_8 {dimension_numbers = #tpu.dot_dimension_numbers<[1], [0], [0], [1], [0, 0, 1, 1], [], []>} : vector<16x512xbf16>, vector<512x128xbf16>, vector<16x128xf32> -> vector<16x128xf32>
    %c0_9 = arith.constant 0 : index
    %c0_10 = arith.constant 0 : index
    %12 = vector.load %arg5[%c0_9, %c0_10] : memref<1x128xf32, #tpu.memory_space<vmem>>, vector<1x128xf32>
    %13 = vector.broadcast %12 : vector<1x128xf32> to vector<16x128xf32>
    %14 = arith.addf %11, %13 : vector<16x128xf32>
    %c0_11 = arith.constant 0 : index
    %c0_12 = arith.constant 0 : index
    %15 = vector.load %arg6[%c0_11, %c0_12] : memref<16x128xf32, #tpu.memory_space<vmem>>, vector<16x128xf32>
    tpu.vector_store %arg6[%c0_11, %c0_12], %14 {strides = array<i32>} : memref<16x128xf32, #tpu.memory_space<vmem>>, vector<16x128xf32>,
    return
  }
  func.func @transform_0(%arg0: i32) -> (i32, i32) {
    %c0_i32 = arith.constant 0 : i32
    %c0_i32_0 = arith.constant 0 : i32
    return %arg0, %c0_i32 : i32, i32
  }
  func.func @transform_1(%arg0: i32) -> (i32, i32) {
    %c0_i32 = arith.constant 0 : i32
    %c0_i32_0 = arith.constant 0 : i32
    %c0_i32_1 = arith.constant 0 : i32
    return %c0_i32, %c0_i32_0 : i32, i32
  }
  func.func @transform_2(%arg0: i32) -> (i32, i32) {
    %c0_i32 = arith.constant 0 : i32
    %c0_i32_0 = arith.constant 0 : i32
    %c0_i32_1 = arith.constant 0 : i32
    return %c0_i32, %c0_i32_0 : i32, i32
  }
  func.func @transform_3(%arg0: i32) -> (i32, i32) {
    %c0_i32 = arith.constant 0 : i32
    %c0_i32_0 = arith.constant 0 : i32
    %c0_i32_1 = arith.constant 0 : i32
    return %c0_i32, %c0_i32_0 : i32, i32
  }
  func.func @transform_4(%arg0: i32) -> (i32, i32) {
    %c0_i32 = arith.constant 0 : i32
    %c0_i32_0 = arith.constant 0 : i32
    %c0_i32_1 = arith.constant 0 : i32
    return %c0_i32, %c0_i32_0 : i32, i32
  }
  func.func @transform_5(%arg0: i32) -> (i32, i32) {
    %c0_i32 = arith.constant 0 : i32
    %c0_i32_0 = arith.constant 0 : i32
    return %arg0, %c0_i32 : i32, i32
  }
}

</mosaic_0001>

<llo_original>
// kernel: forward.4
$region0: #{forward.4}
  #allocation0 [shape = 'u32[]', space=smem, size = 0x4, offset = 0x4, fixed_abs, tag = 'smem constant byte address 0x4 - core index']
  #allocation1 [shape = 'u32[144,128]{1,0:T(1,128)}', space=vmem, size = 0x12000, scoped, tag = 'internal scratch']
  %s0 = inlined_call_operand.vmem [shape: f32[268,64], index: 0, kind: input, shape index: {}]
  %s1 = inlined_call_operand.vmem [shape: bf16[4,64,128], index: 1, kind: input, shape index: {}]
  %s2 = inlined_call_operand.vmem [shape: f32[1,128], index: 2, kind: input, shape index: {}]
  %s3 = inlined_call_operand.vmem [shape: f32[256,128], index: 3, kind: output, shape index: {}]
  %s4 = sld [smem:[#allocation0]]
  $region22: #{forward.4} parent=0
    _
  %s6 = ssub.s32 1, %s4
  %s7 = scalar_select 0, %s6, %s4
  // Predicated region
  $region2: #{forward.4} parent=0 // pred_check
    _
  $region3: #{forward.4} parent=0 // pred_check_branch
    %9 = sbr.rel (0) target = $region5
  $region4: #{forward.4} parent=0 // pred_region
    _
  $region5: #{forward.4} parent=0 // pred_fallthru
    _
  // Predicated region
  $region6: #{forward.4} parent=0 // pred_check
    _
  $region7: #{forward.4} parent=0 // pred_check_branch
    %11 = sbr.rel (0) target = $region9
  $region8: #{forward.4} parent=0 // pred_region
    _
  $region9: #{forward.4} parent=0 // pred_fallthru
    _
  // Predicated region
  $region10: #{forward.4} parent=0 // pred_check
    _
  $region11: #{forward.4} parent=0 // pred_check_branch
    %13 = sbr.rel (0) target = $region13
  $region12: #{forward.4} parent=0 // pred_region
    _
  $region13: #{forward.4} parent=0 // pred_fallthru
    _
  %s15 = smul.u32 0, 256
  %s16 = scalar_lea.vmem %s0, %s15
  %v17 = vld [vmem:[%s16] sm:$0xff]
  %v18 = vld [vmem:[%s16 + $0x8] sm:$0xff]
  %v19 = vld [vmem:[%s16 + $0x10] sm:$0xff]
  %v20 = vld [vmem:[%s16 + $0x18] sm:$0xff]
  %v21 = vld [vmem:[%s16 + $0x20] sm:$0xff]
  %v22 = vld [vmem:[%s16 + $0x28] sm:$0xff]
  %v23 = vld [vmem:[%s16 + $0x30] sm:$0xff]
  %v24 = vld [vmem:[%s16 + $0x38] sm:$0xff]
  %v25 = vld [vmem:[%s16 + $0x40] sm:$0xff]
  %v26 = vld [vmem:[%s16 + $0x48] sm:$0xff]
  %v27 = vld [vmem:[%s16 + $0x50] sm:$0xff]
  %v28 = vld [vmem:[%s16 + $0x58] sm:$0xff]
  %v29 = vld [vmem:[%s16 + $0x60] sm:$0xff]
  %v30 = vld [vmem:[%s16 + $0x68] sm:$0xff]
  %v31 = vld [vmem:[%s16 + $0x70] sm:$0xff]
  %v32 = vld [vmem:[%s16 + $0x78] sm:$0xff]
  %v33 = vld [vmem:[%s16 + $0x80] sm:$0xff]
  %v34 = vld [vmem:[%s16 + $0x88] sm:$0xff]
  %v35 = vld [vmem:[%s16 + $0x90] sm:$0xff]
  %v36 = vld [vmem:[%s16 + $0x98] sm:$0xff]
  %v37 = vld [vmem:[%s16 + $0xa0] sm:$0xff]
  %v38 = vld [vmem:[%s16 + $0xa8] sm:$0xff]
  %v39 = vld [vmem:[%s16 + $0xb0] sm:$0xff]
  %v40 = vld [vmem:[%s16 + $0xb8] sm:$0xff]
  %v41 = vld [vmem:[%s16 + $0xc0] sm:$0xff]
  %v42 = vld [vmem:[%s16 + $0xc8] sm:$0xff]
  %v43 = vld [vmem:[%s16 + $0xd0] sm:$0xff]
  %v44 = vld [vmem:[%s16 + $0xd8] sm:$0xff]
  %v45 = vld [vmem:[%s16 + $0xe0] sm:$0xff]
  %v46 = vld [vmem:[%s16 + $0xe8] sm:$0xff]
  %v47 = vld [vmem:[%s16 + $0xf0] sm:$0xff]
  %v48 = vld [vmem:[%s16 + $0xf8] sm:$0xff]
  %v49 = vpack.c.bf16 %v18, %v17
  %v50 = vpack.c.bf16 %v20, %v19
  %v51 = vpack.c.bf16 %v22, %v21
  %v52 = vpack.c.bf16 %v24, %v23
  %v53 = vpack.c.bf16 %v26, %v25
  %v54 = vpack.c.bf16 %v28, %v27
  %v55 = vpack.c.bf16 %v30, %v29
  %v56 = vpack.c.bf16 %v32, %v31
  %v57 = vpack.c.bf16 %v34, %v33
  %v58 = vpack.c.bf16 %v36, %v35
  %v59 = vpack.c.bf16 %v38, %v37
  %v60 = vpack.c.bf16 %v40, %v39
  %v61 = vpack.c.bf16 %v42, %v41
  %v62 = vpack.c.bf16 %v44, %v43
  %v63 = vpack.c.bf16 %v46, %v45
  %v64 = vpack.c.bf16 %v48, %v47
  %v65 = vld [vmem:[%s1] sm:$0xf]
  %v66 = vld [vmem:[%s1 + $0x4] sm:$0xf]
  %v67 = vld [vmem:[%s1 + $0x8] sm:$0xf]
  %v68 = vld [vmem:[%s1 + $0xc] sm:$0xf]
  %v69 = vld [vmem:[%s1 + $0x10] sm:$0xf]
  %v70 = vld [vmem:[%s1 + $0x14] sm:$0xf]
  %v71 = vld [vmem:[%s1 + $0x18] sm:$0xf]
  %v72 = vld [vmem:[%s1 + $0x1c] sm:$0xf]
  %s73 = sadd.s32 %s15, 1
  %s74 = scalar_lea.vmem %s0, %s73
  %v75 = vld [vmem:[%s74] sm:$0xff]
  %v76 = vld [vmem:[%s74 + $0x8] sm:$0xff]
  %v77 = vld [vmem:[%s74 + $0x10] sm:$0xff]
  %v78 = vld [vmem:[%s74 + $0x18] sm:$0xff]
  %v79 = vld [vmem:[%s74 + $0x20] sm:$0xff]
  %v80 = vld [vmem:[%s74 + $0x28] sm:$0xff]
  %v81 = vld [vmem:[%s74 + $0x30] sm:$0xff]
  %v82 = vld [vmem:[%s74 + $0x38] sm:$0xff]
  %v83 = vld [vmem:[%s74 + $0x40] sm:$0xff]
  %v84 = vld [vmem:[%s74 + $0x48] sm:$0xff]
  %v85 = vld [vmem:[%s74 + $0x50] sm:$0xff]
  %v86 = vld [vmem:[%s74 + $0x58] sm:$0xff]
  %v87 = vld [vmem:[%s74 + $0x60] sm:$0xff]
  %v88 = vld [vmem:[%s74 + $0x68] sm:$0xff]
  %v89 = vld [vmem:[%s74 + $0x70] sm:$0xff]
  %v90 = vld [vmem:[%s74 + $0x78] sm:$0xff]
  %v91 = vld [vmem:[%s74 + $0x80] sm:$0xff]
  %v92 = vld [vmem:[%s74 + $0x88] sm:$0xff]
  %v93 = vld [vmem:[%s74 + $0x90] sm:$0xff]
  %v94 = vld [vmem:[%s74 + $0x98] sm:$0xff]
  %v95 = vld [vmem:[%s74 + $0xa0] sm:$0xff]
  %v96 = vld [vmem:[%s74 + $0xa8] sm:$0xff]
  %v97 = vld [vmem:[%s74 + $0xb0] sm:$0xff]
  %v98 = vld [vmem:[%s74 + $0xb8] sm:$0xff]
  %v99 = vld [vmem:[%s74 + $0xc0] sm:$0xff]
  %v100 = vld [vmem:[%s74 + $0xc8] sm:$0xff]
  %v101 = vld [vmem:[%s74 + $0xd0] sm:$0xff]
  %v102 = vld [vmem:[%s74 + $0xd8] sm:$0xff]
  %v103 = vld [vmem:[%s74 + $0xe0] sm:$0xff]
  %v104 = vld [vmem:[%s74 + $0xe8] sm:$0xff]
  %v105 = vld [vmem:[%s74 + $0xf0] sm:$0xff]
  %v106 = vld [vmem:[%s74 + $0xf8] sm:$0xff]
  %v107 = vpack.c.bf16 %v76, %v75
  %v108 = vpack.c.bf16 %v78, %v77
  %v109 = vpack.c.bf16 %v80, %v79
  %v110 = vpack.c.bf16 %v82, %v81
  %v111 = vpack.c.bf16 %v84, %v83
  %v112 = vpack.c.bf16 %v86, %v85
  %v113 = vpack.c.bf16 %v88, %v87
  %v114 = vpack.c.bf16 %v90, %v89
  %v115 = vpack.c.bf16 %v92, %v91
  %v116 = vpack.c.bf16 %v94, %v93
  %v117 = vpack.c.bf16 %v96, %v95
  %v118 = vpack.c.bf16 %v98, %v97
  %v119 = vpack.c.bf16 %v100, %v99
  %v120 = vpack.c.bf16 %v102, %v101
  %v121 = vpack.c.bf16 %v104, %v103
  %v122 = vpack.c.bf16 %v106, %v105
  %s123 = scalar_lea.vmem %s1, 32
  %v124 = vld [vmem:[%s123] sm:$0xf]
  %v125 = vld [vmem:[%s123 + $0x4] sm:$0xf]
  %v126 = vld [vmem:[%s123 + $0x8] sm:$0xf]
  %v127 = vld [vmem:[%s123 + $0xc] sm:$0xf]
  %v128 = vld [vmem:[%s123 + $0x10] sm:$0xf]
  %v129 = vld [vmem:[%s123 + $0x14] sm:$0xf]
  %v130 = vld [vmem:[%s123 + $0x18] sm:$0xf]
  %v131 = vld [vmem:[%s123 + $0x1c] sm:$0xf]
  %v140 = vunpack.c.l.b16 %v124
  %v141 = vunpack.c.l.b16 %v125
  %v142 = vunpack.c.l.b16 %v126
  %v143 = vunpack.c.l.b16 %v127
  %v144 = vunpack.c.l.b16 %v128
  %v145 = vunpack.c.l.b16 %v129
  %v146 = vunpack.c.l.b16 %v130
  %v147 = vunpack.c.l.b16 %v131
  %v148 = vpack.c.b16 %v141, %v140
  %v149 = vpack.c.b16 %v143, %v142
  %v150 = vpack.c.b16 %v145, %v144
  %v151 = vpack.c.b16 %v147, %v146
  %vm156 = vcmask 523264
  %v158 = vsel %vm156, %v107, 0
  %v161 = vsel %vm156, %v108, 0
  %v164 = vsel %vm156, %v109, 0
  %v167 = vsel %vm156, %v110, 0
  %v170 = vsel %vm156, %v111, 0
  %v173 = vsel %vm156, %v112, 0
  %v176 = vsel %vm156, %v113, 0
  %v179 = vsel %vm156, %v114, 0
  %v182 = vsel %vm156, %v115, 0
  %v185 = vsel %vm156, %v116, 0
  %v188 = vsel %vm156, %v117, 0
  %v191 = vsel %vm156, %v118, 0
  %v194 = vsel %vm156, %v119, 0
  %v197 = vsel %vm156, %v120, 0
  %v200 = vsel %vm156, %v121, 0
  %v203 = vsel %vm156, %v122, 0
  %205 = vmatprep.subr.bf16.mxu0 0
  %206 = vmatpush1.bf16.msra.mxu0 0
  %207 = vmatprep.subr.bf16.mxu0 0
  %208 = vmatpush1.bf16.msra.mxu0 0
  %209 = vmatprep.subr.bf16.mxu0 0
  %210 = vmatpush1.bf16.msra.mxu0 0
  %211 = vmatprep.subr.bf16.mxu0 0
  %212 = vmatpush1.bf16.msra.mxu0 0
  %213 = vmatprep.subr.bf16.mxu0 0
  %214 = vmatpush1.bf16.msra.mxu0 %v151
  %215 = vmatprep.subr.bf16.mxu0 0
  %216 = vmatpush1.bf16.msra.mxu0 %v150
  %217 = vmatprep.subr.bf16.mxu0 0
  %218 = vmatpush1.bf16.msra.mxu0 %v149
  %219 = vmatprep.subr.bf16.mxu0 0
  %220 = vmatpush1.bf16.msra.mxu0 %v148
  %221 = vmatprep.subr.bf16.mxu0 0
  %222 = vmatpush2.bf16.msra.mxu0 0
  %223 = vmatprep.subr.bf16.mxu0 0
  %224 = vmatpush2.bf16.msra.mxu0 0
  %225 = vmatprep.subr.bf16.mxu0 0
  %226 = vmatpush2.bf16.msra.mxu0 0
  %227 = vmatprep.subr.bf16.mxu0 0
  %228 = vmatpush2.bf16.msra.mxu0 0
  %229 = vmatprep.subr.bf16.mxu0 0
  %230 = vmatpush2.bf16.msra.mxu0 0
  %231 = vmatprep.subr.bf16.mxu0 0
  %232 = vmatpush2.bf16.msra.mxu0 0
  %233 = vmatprep.subr.bf16.mxu0 0
  %234 = vmatpush2.bf16.msra.mxu0 0
  %235 = vmatprep.subr.bf16.mxu0 0
  %236 = vmatpush2.bf16.msra.mxu0 0
  %237 = vmatprep.mubr.bf16.mxu0 0
  %238 = vmatmul.mubr.bf16.gmra.mxu0 %v158
  %v239 = vpop.f32.mrf.mxu0
  %v240 = vadd.f32 0.0, %v239
  %v241 = vpop.f32.mrf.mxu0
  %v242 = vpop.f32.mrf.mxu0
  %v243 = vadd.f32 0.0, %v242
  %v244 = vpop.f32.mrf.mxu0
  %245 = vmatprep.mubr.bf16.mxu0 0
  %246 = vmatmul.mubr.bf16.gmra.mxu0 %v161
  %v247 = vpop.f32.mrf.mxu0
  %v248 = vadd.f32 0.0, %v247
  %v249 = vpop.f32.mrf.mxu0
  %v250 = vpop.f32.mrf.mxu0
  %v251 = vadd.f32 0.0, %v250
  %v252 = vpop.f32.mrf.mxu0
  %253 = vmatprep.mubr.bf16.mxu0 0
  %254 = vmatmul.mubr.bf16.gmra.mxu0 %v164
  %v255 = vpop.f32.mrf.mxu0
  %v256 = vadd.f32 0.0, %v255
  %v257 = vpop.f32.mrf.mxu0
  %v258 = vpop.f32.mrf.mxu0
  %v259 = vadd.f32 0.0, %v258
  %v260 = vpop.f32.mrf.mxu0
  %261 = vmatprep.mubr.bf16.mxu0 0
  %262 = vmatmul.mubr.bf16.gmra.mxu0 %v167
  %v263 = vpop.f32.mrf.mxu0
  %v264 = vadd.f32 0.0, %v263
  %v265 = vpop.f32.mrf.mxu0
  %v266 = vpop.f32.mrf.mxu0
  %v267 = vadd.f32 0.0, %v266
  %v268 = vpop.f32.mrf.mxu0
  %269 = vmatprep.mubr.bf16.mxu0 0
  %270 = vmatmul.mubr.bf16.gmra.mxu0 %v170
  %v271 = vpop.f32.mrf.mxu0
  %v272 = vadd.f32 0.0, %v271
  %v273 = vpop.f32.mrf.mxu0
  %v274 = vpop.f32.mrf.mxu0
  %v275 = vadd.f32 0.0, %v274
  %v276 = vpop.f32.mrf.mxu0
  %277 = vmatprep.mubr.bf16.mxu0 0
  %278 = vmatmul.mubr.bf16.gmra.mxu0 %v173
  %v279 = vpop.f32.mrf.mxu0
  %v280 = vadd.f32 0.0, %v279
  %v281 = vpop.f32.mrf.mxu0
  %v282 = vpop.f32.mrf.mxu0
  %v283 = vadd.f32 0.0, %v282
  %v284 = vpop.f32.mrf.mxu0
  %285 = vmatprep.mubr.bf16.mxu0 0
  %286 = vmatmul.mubr.bf16.gmra.mxu0 %v176
  %v287 = vpop.f32.mrf.mxu0
  %v288 = vadd.f32 0.0, %v287
  %v289 = vpop.f32.mrf.mxu0
  %v290 = vpop.f32.mrf.mxu0
  %v291 = vadd.f32 0.0, %v290
  %v292 = vpop.f32.mrf.mxu0
  %293 = vmatprep.mubr.bf16.mxu0 0
  %294 = vmatmul.mubr.bf16.gmra.mxu0 %v179
  %v295 = vpop.f32.mrf.mxu0
  %v296 = vadd.f32 0.0, %v295
  %v297 = vpop.f32.mrf.mxu0
  %v298 = vpop.f32.mrf.mxu0
  %v299 = vadd.f32 0.0, %v298
  %v300 = vpop.f32.mrf.mxu0
  %301 = vmatprep.mubr.bf16.mxu0 0
  %302 = vmatmul.mubr.bf16.gmra.mxu0 %v182
  %v303 = vpop.f32.mrf.mxu0
  %v304 = vadd.f32 0.0, %v303
  %v305 = vpop.f32.mrf.mxu0
  %v306 = vpop.f32.mrf.mxu0
  %v307 = vadd.f32 0.0, %v306
  %v308 = vpop.f32.mrf.mxu0
  %309 = vmatprep.mubr.bf16.mxu0 0
  %310 = vmatmul.mubr.bf16.gmra.mxu0 %v185
  %v311 = vpop.f32.mrf.mxu0
  %v312 = vadd.f32 0.0, %v311
  %v313 = vpop.f32.mrf.mxu0
  %v314 = vpop.f32.mrf.mxu0
  %v315 = vadd.f32 0.0, %v314
  %v316 = vpop.f32.mrf.mxu0
  %317 = vmatprep.mubr.bf16.mxu0 0
  %318 = vmatmul.mubr.bf16.gmra.mxu0 %v188
  %v319 = vpop.f32.mrf.mxu0
  %v320 = vadd.f32 0.0, %v319
  %v321 = vpop.f32.mrf.mxu0
  %v322 = vpop.f32.mrf.mxu0
  %v323 = vadd.f32 0.0, %v322
  %v324 = vpop.f32.mrf.mxu0
  %325 = vmatprep.mubr.bf16.mxu0 0
  %326 = vmatmul.mubr.bf16.gmra.mxu0 %v191
  %v327 = vpop.f32.mrf.mxu0
  %v328 = vadd.f32 0.0, %v327
  %v329 = vpop.f32.mrf.mxu0
  %v330 = vpop.f32.mrf.mxu0
  %v331 = vadd.f32 0.0, %v330
  %v332 = vpop.f32.mrf.mxu0
  %333 = vmatprep.mubr.bf16.mxu0 0
  %334 = vmatmul.mubr.bf16.gmra.mxu0 %v194
  %v335 = vpop.f32.mrf.mxu0
  %v336 = vadd.f32 0.0, %v335
  %v337 = vpop.f32.mrf.mxu0
  %v338 = vpop.f32.mrf.mxu0
  %v339 = vadd.f32 0.0, %v338
  %v340 = vpop.f32.mrf.mxu0
  %341 = vmatprep.mubr.bf16.mxu0 0
  %342 = vmatmul.mubr.bf16.gmra.mxu0 %v197
  %v343 = vpop.f32.mrf.mxu0
  %v344 = vadd.f32 0.0, %v343
  %v345 = vpop.f32.mrf.mxu0
  %v346 = vpop.f32.mrf.mxu0
  %v347 = vadd.f32 0.0, %v346
  %v348 = vpop.f32.mrf.mxu0
  %349 = vmatprep.mubr.bf16.mxu0 0
  %350 = vmatmul.mubr.bf16.gmra.mxu0 %v200
  %v351 = vpop.f32.mrf.mxu0
  %v352 = vadd.f32 0.0, %v351
  %v353 = vpop.f32.mrf.mxu0
  %v354 = vpop.f32.mrf.mxu0
  %v355 = vadd.f32 0.0, %v354
  %v356 = vpop.f32.mrf.mxu0
  %357 = vmatprep.mubr.bf16.mxu0 0
  %358 = vmatmul.mubr.bf16.gmra.mxu0 %v203
  %v359 = vpop.f32.mrf.mxu0
  %v360 = vadd.f32 0.0, %v359
  %v361 = vpop.f32.mrf.mxu0
  %v362 = vpop.f32.mrf.mxu0
  %v363 = vadd.f32 0.0, %v362
  %v364 = vpop.f32.mrf.mxu0
  %365 = vdwg.mxu0
  %v374 = vunpack.c.l.b16 %v65
  %v375 = vunpack.c.l.b16 %v66
  %v376 = vunpack.c.l.b16 %v67
  %v377 = vunpack.c.l.b16 %v68
  %v378 = vunpack.c.l.b16 %v69
  %v379 = vunpack.c.l.b16 %v70
  %v380 = vunpack.c.l.b16 %v71
  %v381 = vunpack.c.l.b16 %v72
  %v382 = vpack.c.b16 %v375, %v374
  %v383 = vpack.c.b16 %v377, %v376
  %v384 = vpack.c.b16 %v379, %v378
  %v385 = vpack.c.b16 %v381, %v380
  %v391 = vsel %vm156, %v49, 0
  %v394 = vsel %vm156, %v50, 0
  %v397 = vsel %vm156, %v51, 0
  %v400 = vsel %vm156, %v52, 0
  %v403 = vsel %vm156, %v53, 0
  %v406 = vsel %vm156, %v54, 0
  %v409 = vsel %vm156, %v55, 0
  %v412 = vsel %vm156, %v56, 0
  %v415 = vsel %vm156, %v57, 0
  %v418 = vsel %vm156, %v58, 0
  %v421 = vsel %vm156, %v59, 0
  %v424 = vsel %vm156, %v60, 0
  %v427 = vsel %vm156, %v61, 0
  %v430 = vsel %vm156, %v62, 0
  %v433 = vsel %vm156, %v63, 0
  %v436 = vsel %vm156, %v64, 0
  %438 = vmatprep.subr.bf16.mxu0 0
  %439 = vmatpush1.bf16.msra.mxu0 0
  %440 = vmatprep.subr.bf16.mxu0 0
  %441 = vmatpush1.bf16.msra.mxu0 0
  %442 = vmatprep.subr.bf16.mxu0 0
  %443 = vmatpush1.bf16.msra.mxu0 0
  %444 = vmatprep.subr.bf16.mxu0 0
  %445 = vmatpush1.bf16.msra.mxu0 0
  %446 = vmatprep.subr.bf16.mxu0 0
  %447 = vmatpush1.bf16.msra.mxu0 %v385
  %448 = vmatprep.subr.bf16.mxu0 0
  %449 = vmatpush1.bf16.msra.mxu0 %v384
  %450 = vmatprep.subr.bf16.mxu0 0
  %451 = vmatpush1.bf16.msra.mxu0 %v383
  %452 = vmatprep.subr.bf16.mxu0 0
  %453 = vmatpush1.bf16.msra.mxu0 %v382
  %454 = vmatprep.subr.bf16.mxu0 0
  %455 = vmatpush2.bf16.msra.mxu0 0
  %456 = vmatprep.subr.bf16.mxu0 0
  %457 = vmatpush2.bf16.msra.mxu0 0
  %458 = vmatprep.subr.bf16.mxu0 0
  %459 = vmatpush2.bf16.msra.mxu0 0
  %460 = vmatprep.subr.bf16.mxu0 0
  %461 = vmatpush2.bf16.msra.mxu0 0
  %462 = vmatprep.subr.bf16.mxu0 0
  %463 = vmatpush2.bf16.msra.mxu0 0
  %464 = vmatprep.subr.bf16.mxu0 0
  %465 = vmatpush2.bf16.msra.mxu0 0
  %466 = vmatprep.subr.bf16.mxu0 0
  %467 = vmatpush2.bf16.msra.mxu0 0
  %468 = vmatprep.subr.bf16.mxu0 0
  %469 = vmatpush2.bf16.msra.mxu0 0
  %470 = vmatprep.mubr.bf16.mxu0 0
  %471 = vmatmul.mubr.bf16.gmra.mxu0 %v391
  %v472 = vpop.f32.mrf.mxu0
  %v473 = vadd.f32 %v240, %v472
  %v474 = vpop.f32.mrf.mxu0
  %v475 = vpop.f32.mrf.mxu0
  %v476 = vadd.f32 %v243, %v475
  %v477 = vpop.f32.mrf.mxu0
  %478 = vmatprep.mubr.bf16.mxu0 0
  %479 = vmatmul.mubr.bf16.gmra.mxu0 %v394
  %v480 = vpop.f32.mrf.mxu0
  %v481 = vadd.f32 %v248, %v480
  %v482 = vpop.f32.mrf.mxu0
  %v483 = vpop.f32.mrf.mxu0
  %v484 = vadd.f32 %v251, %v483
  %v485 = vpop.f32.mrf.mxu0
  %486 = vmatprep.mubr.bf16.mxu0 0
  %487 = vmatmul.mubr.bf16.gmra.mxu0 %v397
  %v488 = vpop.f32.mrf.mxu0
  %v489 = vadd.f32 %v256, %v488
  %v490 = vpop.f32.mrf.mxu0
  %v491 = vpop.f32.mrf.mxu0
  %v492 = vadd.f32 %v259, %v491
  %v493 = vpop.f32.mrf.mxu0
  %494 = vmatprep.mubr.bf16.mxu0 0
  %495 = vmatmul.mubr.bf16.gmra.mxu0 %v400
  %v496 = vpop.f32.mrf.mxu0
  %v497 = vadd.f32 %v264, %v496
  %v498 = vpop.f32.mrf.mxu0
  %v499 = vpop.f32.mrf.mxu0
  %v500 = vadd.f32 %v267, %v499
  %v501 = vpop.f32.mrf.mxu0
  %502 = vmatprep.mubr.bf16.mxu0 0
  %503 = vmatmul.mubr.bf16.gmra.mxu0 %v403
  %v504 = vpop.f32.mrf.mxu0
  %v505 = vadd.f32 %v272, %v504
  %v506 = vpop.f32.mrf.mxu0
  %v507 = vpop.f32.mrf.mxu0
  %v508 = vadd.f32 %v275, %v507
  %v509 = vpop.f32.mrf.mxu0
  %510 = vmatprep.mubr.bf16.mxu0 0
  %511 = vmatmul.mubr.bf16.gmra.mxu0 %v406
  %v512 = vpop.f32.mrf.mxu0
  %v513 = vadd.f32 %v280, %v512
  %v514 = vpop.f32.mrf.mxu0
  %v515 = vpop.f32.mrf.mxu0
  %v516 = vadd.f32 %v283, %v515
  %v517 = vpop.f32.mrf.mxu0
  %518 = vmatprep.mubr.bf16.mxu0 0
  %519 = vmatmul.mubr.bf16.gmra.mxu0 %v409
  %v520 = vpop.f32.mrf.mxu0
  %v521 = vadd.f32 %v288, %v520
  %v522 = vpop.f32.mrf.mxu0
  %v523 = vpop.f32.mrf.mxu0
  %v524 = vadd.f32 %v291, %v523
  %v525 = vpop.f32.mrf.mxu0
  %526 = vmatprep.mubr.bf16.mxu0 0
  %527 = vmatmul.mubr.bf16.gmra.mxu0 %v412
  %v528 = vpop.f32.mrf.mxu0
  %v529 = vadd.f32 %v296, %v528
  %v530 = vpop.f32.mrf.mxu0
  %v531 = vpop.f32.mrf.mxu0
  %v532 = vadd.f32 %v299, %v531
  %v533 = vpop.f32.mrf.mxu0
  %534 = vmatprep.mubr.bf16.mxu0 0
  %535 = vmatmul.mubr.bf16.gmra.mxu0 %v415
  %v536 = vpop.f32.mrf.mxu0
  %v537 = vadd.f32 %v304, %v536
  %v538 = vpop.f32.mrf.mxu0
  %v539 = vpop.f32.mrf.mxu0
  %v540 = vadd.f32 %v307, %v539
  %v541 = vpop.f32.mrf.mxu0
  %542 = vmatprep.mubr.bf16.mxu0 0
  %543 = vmatmul.mubr.bf16.gmra.mxu0 %v418
  %v544 = vpop.f32.mrf.mxu0
  %v545 = vadd.f32 %v312, %v544
  %v546 = vpop.f32.mrf.mxu0
  %v547 = vpop.f32.mrf.mxu0
  %v548 = vadd.f32 %v315, %v547
  %v549 = vpop.f32.mrf.mxu0
  %550 = vmatprep.mubr.bf16.mxu0 0
  %551 = vmatmul.mubr.bf16.gmra.mxu0 %v421
  %v552 = vpop.f32.mrf.mxu0
  %v553 = vadd.f32 %v320, %v552
  %v554 = vpop.f32.mrf.mxu0
  %v555 = vpop.f32.mrf.mxu0
  %v556 = vadd.f32 %v323, %v555
  %v557 = vpop.f32.mrf.mxu0
  %558 = vmatprep.mubr.bf16.mxu0 0
  %559 = vmatmul.mubr.bf16.gmra.mxu0 %v424
  %v560 = vpop.f32.mrf.mxu0
  %v561 = vadd.f32 %v328, %v560
  %v562 = vpop.f32.mrf.mxu0
  %v563 = vpop.f32.mrf.mxu0
  %v564 = vadd.f32 %v331, %v563
  %v565 = vpop.f32.mrf.mxu0
  %566 = vmatprep.mubr.bf16.mxu0 0
  %567 = vmatmul.mubr.bf16.gmra.mxu0 %v427
  %v568 = vpop.f32.mrf.mxu0
  %v569 = vadd.f32 %v336, %v568
  %v570 = vpop.f32.mrf.mxu0
  %v571 = vpop.f32.mrf.mxu0
  %v572 = vadd.f32 %v339, %v571
  %v573 = vpop.f32.mrf.mxu0
  %574 = vmatprep.mubr.bf16.mxu0 0
  %575 = vmatmul.mubr.bf16.gmra.mxu0 %v430
  %v576 = vpop.f32.mrf.mxu0
  %v577 = vadd.f32 %v344, %v576
  %v578 = vpop.f32.mrf.mxu0
  %v579 = vpop.f32.mrf.mxu0
  %v580 = vadd.f32 %v347, %v579
  %v581 = vpop.f32.mrf.mxu0
  %582 = vmatprep.mubr.bf16.mxu0 0
  %583 = vmatmul.mubr.bf16.gmra.mxu0 %v433
  %v584 = vpop.f32.mrf.mxu0
  %v585 = vadd.f32 %v352, %v584
  %v586 = vpop.f32.mrf.mxu0
  %v587 = vpop.f32.mrf.mxu0
  %v588 = vadd.f32 %v355, %v587
  %v589 = vpop.f32.mrf.mxu0
  %590 = vmatprep.mubr.bf16.mxu0 0
  %591 = vmatmul.mubr.bf16.gmra.mxu0 %v436
  %v592 = vpop.f32.mrf.mxu0
  %v593 = vadd.f32 %v360, %v592
  %v594 = vpop.f32.mrf.mxu0
  %v595 = vpop.f32.mrf.mxu0
  %v596 = vadd.f32 %v363, %v595
  %v597 = vpop.f32.mrf.mxu0
  %598 = vdwg.mxu0
  %s599 = sadd.s32 %s15, 11
  %s600 = scalar_lea.vmem %s0, %s599
  %v601 = vld [vmem:[%s600] sm:$0xff]
  %v602 = vld [vmem:[%s600 + $0x8] sm:$0xff]
  %v603 = vld [vmem:[%s600 + $0x10] sm:$0xff]
  %v604 = vld [vmem:[%s600 + $0x18] sm:$0xff]
  %v605 = vld [vmem:[%s600 + $0x20] sm:$0xff]
  %v606 = vld [vmem:[%s600 + $0x28] sm:$0xff]
  %v607 = vld [vmem:[%s600 + $0x30] sm:$0xff]
  %v608 = vld [vmem:[%s600 + $0x38] sm:$0xff]
  %v609 = vld [vmem:[%s600 + $0x40] sm:$0xff]
  %v610 = vld [vmem:[%s600 + $0x48] sm:$0xff]
  %v611 = vld [vmem:[%s600 + $0x50] sm:$0xff]
  %v612 = vld [vmem:[%s600 + $0x58] sm:$0xff]
  %v613 = vld [vmem:[%s600 + $0x60] sm:$0xff]
  %v614 = vld [vmem:[%s600 + $0x68] sm:$0xff]
  %v615 = vld [vmem:[%s600 + $0x70] sm:$0xff]
  %v616 = vld [vmem:[%s600 + $0x78] sm:$0xff]
  %v617 = vld [vmem:[%s600 + $0x80] sm:$0xff]
  %v618 = vld [vmem:[%s600 + $0x88] sm:$0xff]
  %v619 = vld [vmem:[%s600 + $0x90] sm:$0xff]
  %v620 = vld [vmem:[%s600 + $0x98] sm:$0xff]
  %v621 = vld [vmem:[%s600 + $0xa0] sm:$0xff]
  %v622 = vld [vmem:[%s600 + $0xa8] sm:$0xff]
  %v623 = vld [vmem:[%s600 + $0xb0] sm:$0xff]
  %v624 = vld [vmem:[%s600 + $0xb8] sm:$0xff]
  %v625 = vld [vmem:[%s600 + $0xc0] sm:$0xff]
  %v626 = vld [vmem:[%s600 + $0xc8] sm:$0xff]
  %v627 = vld [vmem:[%s600 + $0xd0] sm:$0xff]
  %v628 = vld [vmem:[%s600 + $0xd8] sm:$0xff]
  %v629 = vld [vmem:[%s600 + $0xe0] sm:$0xff]
  %v630 = vld [vmem:[%s600 + $0xe8] sm:$0xff]
  %v631 = vld [vmem:[%s600 + $0xf0] sm:$0xff]
  %v632 = vld [vmem:[%s600 + $0xf8] sm:$0xff]
  %v633 = vpack.c.bf16 %v602, %v601
  %v634 = vpack.c.bf16 %v604, %v603
  %v635 = vpack.c.bf16 %v606, %v605
  %v636 = vpack.c.bf16 %v608, %v607
  %v637 = vpack.c.bf16 %v610, %v609
  %v638 = vpack.c.bf16 %v612, %v611
  %v639 = vpack.c.bf16 %v614, %v613
  %v640 = vpack.c.bf16 %v616, %v615
  %v641 = vpack.c.bf16 %v618, %v617
  %v642 = vpack.c.bf16 %v620, %v619
  %v643 = vpack.c.bf16 %v622, %v621
  %v644 = vpack.c.bf16 %v624, %v623
  %v645 = vpack.c.bf16 %v626, %v625
  %v646 = vpack.c.bf16 %v628, %v627
  %v647 = vpack.c.bf16 %v630, %v629
  %v648 = vpack.c.bf16 %v632, %v631
  %s649 = scalar_lea.vmem %s1, 64
  %v650 = vld [vmem:[%s649] sm:$0xf]
  %v651 = vld [vmem:[%s649 + $0x4] sm:$0xf]
  %v652 = vld [vmem:[%s649 + $0x8] sm:$0xf]
  %v653 = vld [vmem:[%s649 + $0xc] sm:$0xf]
  %v654 = vld [vmem:[%s649 + $0x10] sm:$0xf]
  %v655 = vld [vmem:[%s649 + $0x14] sm:$0xf]
  %v656 = vld [vmem:[%s649 + $0x18] sm:$0xf]
  %v657 = vld [vmem:[%s649 + $0x1c] sm:$0xf]
  %v666 = vunpack.c.l.b16 %v650
  %v667 = vunpack.c.l.b16 %v651
  %v668 = vunpack.c.l.b16 %v652
  %v669 = vunpack.c.l.b16 %v653
  %v670 = vunpack.c.l.b16 %v654
  %v671 = vunpack.c.l.b16 %v655
  %v672 = vunpack.c.l.b16 %v656
  %v673 = vunpack.c.l.b16 %v657
  %v674 = vpack.c.b16 %v667, %v666
  %v675 = vpack.c.b16 %v669, %v668
  %v676 = vpack.c.b16 %v671, %v670
  %v677 = vpack.c.b16 %v673, %v672
  %v683 = vsel %vm156, %v633, 0
  %v686 = vsel %vm156, %v634, 0
  %v689 = vsel %vm156, %v635, 0
  %v692 = vsel %vm156, %v636, 0
  %v695 = vsel %vm156, %v637, 0
  %v698 = vsel %vm156, %v638, 0
  %v701 = vsel %vm156, %v639, 0
  %v704 = vsel %vm156, %v640, 0
  %v707 = vsel %vm156, %v641, 0
  %v710 = vsel %vm156, %v642, 0
  %v713 = vsel %vm156, %v643, 0
  %v716 = vsel %vm156, %v644, 0
  %v719 = vsel %vm156, %v645, 0
  %v722 = vsel %vm156, %v646, 0
  %v725 = vsel %vm156, %v647, 0
  %v728 = vsel %vm156, %v648, 0
  %730 = vmatprep.subr.bf16.mxu0 0
  %731 = vmatpush1.bf16.msra.mxu0 0
  %732 = vmatprep.subr.bf16.mxu0 0
  %733 = vmatpush1.bf16.msra.mxu0 0
  %734 = vmatprep.subr.bf16.mxu0 0
  %735 = vmatpush1.bf16.msra.mxu0 0
  %736 = vmatprep.subr.bf16.mxu0 0
  %737 = vmatpush1.bf16.msra.mxu0 0
  %738 = vmatprep.subr.bf16.mxu0 0
  %739 = vmatpush1.bf16.msra.mxu0 %v677
  %740 = vmatprep.subr.bf16.mxu0 0
  %741 = vmatpush1.bf16.msra.mxu0 %v676
  %742 = vmatprep.subr.bf16.mxu0 0
  %743 = vmatpush1.bf16.msra.mxu0 %v675
  %744 = vmatprep.subr.bf16.mxu0 0
  %745 = vmatpush1.bf16.msra.mxu0 %v674
  %746 = vmatprep.subr.bf16.mxu0 0
  %747 = vmatpush2.bf16.msra.mxu0 0
  %748 = vmatprep.subr.bf16.mxu0 0
  %749 = vmatpush2.bf16.msra.mxu0 0
  %750 = vmatprep.subr.bf16.mxu0 0
  %751 = vmatpush2.bf16.msra.mxu0 0
  %752 = vmatprep.subr.bf16.mxu0 0
  %753 = vmatpush2.bf16.msra.mxu0 0
  %754 = vmatprep.subr.bf16.mxu0 0
  %755 = vmatpush2.bf16.msra.mxu0 0
  %756 = vmatprep.subr.bf16.mxu0 0
  %757 = vmatpush2.bf16.msra.mxu0 0
  %758 = vmatprep.subr.bf16.mxu0 0
  %759 = vmatpush2.bf16.msra.mxu0 0
  %760 = vmatprep.subr.bf16.mxu0 0
  %761 = vmatpush2.bf16.msra.mxu0 0
  %762 = vmatprep.mubr.bf16.mxu0 0
  %763 = vmatmul.mubr.bf16.gmra.mxu0 %v683
  %v764 = vpop.f32.mrf.mxu0
  %v765 = vadd.f32 0.0, %v764
  %v766 = vpop.f32.mrf.mxu0
  %v767 = vpop.f32.mrf.mxu0
  %v768 = vadd.f32 0.0, %v767
  %v769 = vpop.f32.mrf.mxu0
  %770 = vmatprep.mubr.bf16.mxu0 0
  %771 = vmatmul.mubr.bf16.gmra.mxu0 %v686
  %v772 = vpop.f32.mrf.mxu0
  %v773 = vadd.f32 0.0, %v772
  %v774 = vpop.f32.mrf.mxu0
  %v775 = vpop.f32.mrf.mxu0
  %v776 = vadd.f32 0.0, %v775
  %v777 = vpop.f32.mrf.mxu0
  %778 = vmatprep.mubr.bf16.mxu0 0
  %779 = vmatmul.mubr.bf16.gmra.mxu0 %v689
  %v780 = vpop.f32.mrf.mxu0
  %v781 = vadd.f32 0.0, %v780
  %v782 = vpop.f32.mrf.mxu0
  %v783 = vpop.f32.mrf.mxu0
  %v784 = vadd.f32 0.0, %v783
  %v785 = vpop.f32.mrf.mxu0
  %786 = vmatprep.mubr.bf16.mxu0 0
  %787 = vmatmul.mubr.bf16.gmra.mxu0 %v692
  %v788 = vpop.f32.mrf.mxu0
  %v789 = vadd.f32 0.0, %v788
  %v790 = vpop.f32.mrf.mxu0
  %v791 = vpop.f32.mrf.mxu0
  %v792 = vadd.f32 0.0, %v791
  %v793 = vpop.f32.mrf.mxu0
  %794 = vmatprep.mubr.bf16.mxu0 0
  %795 = vmatmul.mubr.bf16.gmra.mxu0 %v695
  %v796 = vpop.f32.mrf.mxu0
  %v797 = vadd.f32 0.0, %v796
  %v798 = vpop.f32.mrf.mxu0
  %v799 = vpop.f32.mrf.mxu0
  %v800 = vadd.f32 0.0, %v799
  %v801 = vpop.f32.mrf.mxu0
  %802 = vmatprep.mubr.bf16.mxu0 0
  %803 = vmatmul.mubr.bf16.gmra.mxu0 %v698
  %v804 = vpop.f32.mrf.mxu0
  %v805 = vadd.f32 0.0, %v804
  %v806 = vpop.f32.mrf.mxu0
  %v807 = vpop.f32.mrf.mxu0
  %v808 = vadd.f32 0.0, %v807
  %v809 = vpop.f32.mrf.mxu0
  %810 = vmatprep.mubr.bf16.mxu0 0
  %811 = vmatmul.mubr.bf16.gmra.mxu0 %v701
  %v812 = vpop.f32.mrf.mxu0
  %v813 = vadd.f32 0.0, %v812
  %v814 = vpop.f32.mrf.mxu0
  %v815 = vpop.f32.mrf.mxu0
  %v816 = vadd.f32 0.0, %v815
  %v817 = vpop.f32.mrf.mxu0
  %818 = vmatprep.mubr.bf16.mxu0 0
  %819 = vmatmul.mubr.bf16.gmra.mxu0 %v704
  %v820 = vpop.f32.mrf.mxu0
  %v821 = vadd.f32 0.0, %v820
  %v822 = vpop.f32.mrf.mxu0
  %v823 = vpop.f32.mrf.mxu0
  %v824 = vadd.f32 0.0, %v823
  %v825 = vpop.f32.mrf.mxu0
  %826 = vmatprep.mubr.bf16.mxu0 0
  %827 = vmatmul.mubr.bf16.gmra.mxu0 %v707
  %v828 = vpop.f32.mrf.mxu0
  %v829 = vadd.f32 0.0, %v828
  %v830 = vpop.f32.mrf.mxu0
  %v831 = vpop.f32.mrf.mxu0
  %v832 = vadd.f32 0.0, %v831
  %v833 = vpop.f32.mrf.mxu0
  %834 = vmatprep.mubr.bf16.mxu0 0
  %835 = vmatmul.mubr.bf16.gmra.mxu0 %v710
  %v836 = vpop.f32.mrf.mxu0
  %v837 = vadd.f32 0.0, %v836
  %v838 = vpop.f32.mrf.mxu0
  %v839 = vpop.f32.mrf.mxu0
  %v840 = vadd.f32 0.0, %v839
  %v841 = vpop.f32.mrf.mxu0
  %842 = vmatprep.mubr.bf16.mxu0 0
  %843 = vmatmul.mubr.bf16.gmra.mxu0 %v713
  %v844 = vpop.f32.mrf.mxu0
  %v845 = vadd.f32 0.0, %v844
  %v846 = vpop.f32.mrf.mxu0
  %v847 = vpop.f32.mrf.mxu0
  %v848 = vadd.f32 0.0, %v847
  %v849 = vpop.f32.mrf.mxu0
  %850 = vmatprep.mubr.bf16.mxu0 0
  %851 = vmatmul.mubr.bf16.gmra.mxu0 %v716
  %v852 = vpop.f32.mrf.mxu0
  %v853 = vadd.f32 0.0, %v852
  %v854 = vpop.f32.mrf.mxu0
  %v855 = vpop.f32.mrf.mxu0
  %v856 = vadd.f32 0.0, %v855
  %v857 = vpop.f32.mrf.mxu0
  %858 = vmatprep.mubr.bf16.mxu0 0
  %859 = vmatmul.mubr.bf16.gmra.mxu0 %v719
  %v860 = vpop.f32.mrf.mxu0
  %v861 = vadd.f32 0.0, %v860
  %v862 = vpop.f32.mrf.mxu0
  %v863 = vpop.f32.mrf.mxu0
  %v864 = vadd.f32 0.0, %v863
  %v865 = vpop.f32.mrf.mxu0
  %866 = vmatprep.mubr.bf16.mxu0 0
  %867 = vmatmul.mubr.bf16.gmra.mxu0 %v722
  %v868 = vpop.f32.mrf.mxu0
  %v869 = vadd.f32 0.0, %v868
  %v870 = vpop.f32.mrf.mxu0
  %v871 = vpop.f32.mrf.mxu0
  %v872 = vadd.f32 0.0, %v871
  %v873 = vpop.f32.mrf.mxu0
  %874 = vmatprep.mubr.bf16.mxu0 0
  %875 = vmatmul.mubr.bf16.gmra.mxu0 %v725
  %v876 = vpop.f32.mrf.mxu0
  %v877 = vadd.f32 0.0, %v876
  %v878 = vpop.f32.mrf.mxu0
  %v879 = vpop.f32.mrf.mxu0
  %v880 = vadd.f32 0.0, %v879
  %v881 = vpop.f32.mrf.mxu0
  %882 = vmatprep.mubr.bf16.mxu0 0
  %883 = vmatmul.mubr.bf16.gmra.mxu0 %v728
  %v884 = vpop.f32.mrf.mxu0
  %v885 = vadd.f32 0.0, %v884
  %v886 = vpop.f32.mrf.mxu0
  %v887 = vpop.f32.mrf.mxu0
  %v888 = vadd.f32 0.0, %v887
  %v889 = vpop.f32.mrf.mxu0
  %890 = vdwg.mxu0
  %v891 = vadd.f32 %v473, %v765
  %v892 = vadd.f32 %v476, %v768
  %v893 = vadd.f32 %v481, %v773
  %v894 = vadd.f32 %v484, %v776
  %v895 = vadd.f32 %v489, %v781
  %v896 = vadd.f32 %v492, %v784
  %v897 = vadd.f32 %v497, %v789
  %v898 = vadd.f32 %v500, %v792
  %v899 = vadd.f32 %v505, %v797
  %v900 = vadd.f32 %v508, %v800
  %v901 = vadd.f32 %v513, %v805
  %v902 = vadd.f32 %v516, %v808
  %v903 = vadd.f32 %v521, %v813
  %v904 = vadd.f32 %v524, %v816
  %v905 = vadd.f32 %v529, %v821
  %v906 = vadd.f32 %v532, %v824
  %v907 = vadd.f32 %v537, %v829
  %v908 = vadd.f32 %v540, %v832
  %v909 = vadd.f32 %v545, %v837
  %v910 = vadd.f32 %v548, %v840
  %v911 = vadd.f32 %v553, %v845
  %v912 = vadd.f32 %v556, %v848
  %v913 = vadd.f32 %v561, %v853
  %v914 = vadd.f32 %v564, %v856
  %v915 = vadd.f32 %v569, %v861
  %v916 = vadd.f32 %v572, %v864
  %v917 = vadd.f32 %v577, %v869
  %v918 = vadd.f32 %v580, %v872
  %v919 = vadd.f32 %v585, %v877
  %v920 = vadd.f32 %v588, %v880
  %v921 = vadd.f32 %v593, %v885
  %v922 = vadd.f32 %v596, %v888
  %s923 = sadd.s32 %s15, 12
  %s924 = scalar_lea.vmem %s0, %s923
  %v925 = vld [vmem:[%s924] sm:$0xff]
  %v926 = vld [vmem:[%s924 + $0x8] sm:$0xff]
  %v927 = vld [vmem:[%s924 + $0x10] sm:$0xff]
  %v928 = vld [vmem:[%s924 + $0x18] sm:$0xff]
  %v929 = vld [vmem:[%s924 + $0x20] sm:$0xff]
  %v930 = vld [vmem:[%s924 + $0x28] sm:$0xff]
  %v931 = vld [vmem:[%s924 + $0x30] sm:$0xff]
  %v932 = vld [vmem:[%s924 + $0x38] sm:$0xff]
  %v933 = vld [vmem:[%s924 + $0x40] sm:$0xff]
  %v934 = vld [vmem:[%s924 + $0x48] sm:$0xff]
  %v935 = vld [vmem:[%s924 + $0x50] sm:$0xff]
  %v936 = vld [vmem:[%s924 + $0x58] sm:$0xff]
  %v937 = vld [vmem:[%s924 + $0x60] sm:$0xff]
  %v938 = vld [vmem:[%s924 + $0x68] sm:$0xff]
  %v939 = vld [vmem:[%s924 + $0x70] sm:$0xff]
  %v940 = vld [vmem:[%s924 + $0x78] sm:$0xff]
  %v941 = vld [vmem:[%s924 + $0x80] sm:$0xff]
  %v942 = vld [vmem:[%s924 + $0x88] sm:$0xff]
  %v943 = vld [vmem:[%s924 + $0x90] sm:$0xff]
  %v944 = vld [vmem:[%s924 + $0x98] sm:$0xff]
  %v945 = vld [vmem:[%s924 + $0xa0] sm:$0xff]
  %v946 = vld [vmem:[%s924 + $0xa8] sm:$0xff]
  %v947 = vld [vmem:[%s924 + $0xb0] sm:$0xff]
  %v948 = vld [vmem:[%s924 + $0xb8] sm:$0xff]
  %v949 = vld [vmem:[%s924 + $0xc0] sm:$0xff]
  %v950 = vld [vmem:[%s924 + $0xc8] sm:$0xff]
  %v951 = vld [vmem:[%s924 + $0xd0] sm:$0xff]
  %v952 = vld [vmem:[%s924 + $0xd8] sm:$0xff]
  %v953 = vld [vmem:[%s924 + $0xe0] sm:$0xff]
  %v954 = vld [vmem:[%s924 + $0xe8] sm:$0xff]
  %v955 = vld [vmem:[%s924 + $0xf0] sm:$0xff]
  %v956 = vld [vmem:[%s924 + $0xf8] sm:$0xff]
  %v957 = vpack.c.bf16 %v926, %v925
  %v958 = vpack.c.bf16 %v928, %v927
  %v959 = vpack.c.bf16 %v930, %v929
  %v960 = vpack.c.bf16 %v932, %v931
  %v961 = vpack.c.bf16 %v934, %v933
  %v962 = vpack.c.bf16 %v936, %v935
  %v963 = vpack.c.bf16 %v938, %v937
  %v964 = vpack.c.bf16 %v940, %v939
  %v965 = vpack.c.bf16 %v942, %v941
  %v966 = vpack.c.bf16 %v944, %v943
  %v967 = vpack.c.bf16 %v946, %v945
  %v968 = vpack.c.bf16 %v948, %v947
  %v969 = vpack.c.bf16 %v950, %v949
  %v970 = vpack.c.bf16 %v952, %v951
  %v971 = vpack.c.bf16 %v954, %v953
  %v972 = vpack.c.bf16 %v956, %v955
  %s973 = scalar_lea.vmem %s1, 96
  %v974 = vld [vmem:[%s973] sm:$0xf]
  %v975 = vld [vmem:[%s973 + $0x4] sm:$0xf]
  %v976 = vld [vmem:[%s973 + $0x8] sm:$0xf]
  %v977 = vld [vmem:[%s973 + $0xc] sm:$0xf]
  %v978 = vld [vmem:[%s973 + $0x10] sm:$0xf]
  %v979 = vld [vmem:[%s973 + $0x14] sm:$0xf]
  %v980 = vld [vmem:[%s973 + $0x18] sm:$0xf]
  %v981 = vld [vmem:[%s973 + $0x1c] sm:$0xf]
  %v990 = vunpack.c.l.b16 %v974
  %v991 = vunpack.c.l.b16 %v975
  %v992 = vunpack.c.l.b16 %v976
  %v993 = vunpack.c.l.b16 %v977
  %v994 = vunpack.c.l.b16 %v978
  %v995 = vunpack.c.l.b16 %v979
  %v996 = vunpack.c.l.b16 %v980
  %v997 = vunpack.c.l.b16 %v981
  %v998 = vpack.c.b16 %v991, %v990
  %v999 = vpack.c.b16 %v993, %v992
  %v1000 = vpack.c.b16 %v995, %v994
  %v1001 = vpack.c.b16 %v997, %v996
  %v1007 = vsel %vm156, %v957, 0
  %v1010 = vsel %vm156, %v958, 0
  %v1013 = vsel %vm156, %v959, 0
  %v1016 = vsel %vm156, %v960, 0
  %v1019 = vsel %vm156, %v961, 0
  %v1022 = vsel %vm156, %v962, 0
  %v1025 = vsel %vm156, %v963, 0
  %v1028 = vsel %vm156, %v964, 0
  %v1031 = vsel %vm156, %v965, 0
  %v1034 = vsel %vm156, %v966, 0
  %v1037 = vsel %vm156, %v967, 0
  %v1040 = vsel %vm156, %v968, 0
  %v1043 = vsel %vm156, %v969, 0
  %v1046 = vsel %vm156, %v970, 0
  %v1049 = vsel %vm156, %v971, 0
  %v1052 = vsel %vm156, %v972, 0
  %1054 = vmatprep.subr.bf16.mxu0 0
  %1055 = vmatpush1.bf16.msra.mxu0 0
  %1056 = vmatprep.subr.bf16.mxu0 0
  %1057 = vmatpush1.bf16.msra.mxu0 0
  %1058 = vmatprep.subr.bf16.mxu0 0
  %1059 = vmatpush1.bf16.msra.mxu0 0
  %1060 = vmatprep.subr.bf16.mxu0 0
  %1061 = vmatpush1.bf16.msra.mxu0 0
  %1062 = vmatprep.subr.bf16.mxu0 0
  %1063 = vmatpush1.bf16.msra.mxu0 %v1001
  %1064 = vmatprep.subr.bf16.mxu0 0
  %1065 = vmatpush1.bf16.msra.mxu0 %v1000
  %1066 = vmatprep.subr.bf16.mxu0 0
  %1067 = vmatpush1.bf16.msra.mxu0 %v999
  %1068 = vmatprep.subr.bf16.mxu0 0
  %1069 = vmatpush1.bf16.msra.mxu0 %v998
  %1070 = vmatprep.subr.bf16.mxu0 0
  %1071 = vmatpush2.bf16.msra.mxu0 0
  %1072 = vmatprep.subr.bf16.mxu0 0
  %1073 = vmatpush2.bf16.msra.mxu0 0
  %1074 = vmatprep.subr.bf16.mxu0 0
  %1075 = vmatpush2.bf16.msra.mxu0 0
  %1076 = vmatprep.subr.bf16.mxu0 0
  %1077 = vmatpush2.bf16.msra.mxu0 0
  %1078 = vmatprep.subr.bf16.mxu0 0
  %1079 = vmatpush2.bf16.msra.mxu0 0
  %1080 = vmatprep.subr.bf16.mxu0 0
  %1081 = vmatpush2.bf16.msra.mxu0 0
  %1082 = vmatprep.subr.bf16.mxu0 0
  %1083 = vmatpush2.bf16.msra.mxu0 0
  %1084 = vmatprep.subr.bf16.mxu0 0
  %1085 = vmatpush2.bf16.msra.mxu0 0
  %1086 = vmatprep.mubr.bf16.mxu0 0
  %1087 = vmatmul.mubr.bf16.gmra.mxu0 %v1007
  %v1088 = vpop.f32.mrf.mxu0
  %v1089 = vadd.f32 0.0, %v1088
  %v1090 = vpop.f32.mrf.mxu0
  %v1091 = vpop.f32.mrf.mxu0
  %v1092 = vadd.f32 0.0, %v1091
  %v1093 = vpop.f32.mrf.mxu0
  %1094 = vmatprep.mubr.bf16.mxu0 0
  %1095 = vmatmul.mubr.bf16.gmra.mxu0 %v1010
  %v1096 = vpop.f32.mrf.mxu0
  %v1097 = vadd.f32 0.0, %v1096
  %v1098 = vpop.f32.mrf.mxu0
  %v1099 = vpop.f32.mrf.mxu0
  %v1100 = vadd.f32 0.0, %v1099
  %v1101 = vpop.f32.mrf.mxu0
  %1102 = vmatprep.mubr.bf16.mxu0 0
  %1103 = vmatmul.mubr.bf16.gmra.mxu0 %v1013
  %v1104 = vpop.f32.mrf.mxu0
  %v1105 = vadd.f32 0.0, %v1104
  %v1106 = vpop.f32.mrf.mxu0
  %v1107 = vpop.f32.mrf.mxu0
  %v1108 = vadd.f32 0.0, %v1107
  %v1109 = vpop.f32.mrf.mxu0
  %1110 = vmatprep.mubr.bf16.mxu0 0
  %1111 = vmatmul.mubr.bf16.gmra.mxu0 %v1016
  %v1112 = vpop.f32.mrf.mxu0
  %v1113 = vadd.f32 0.0, %v1112
  %v1114 = vpop.f32.mrf.mxu0
  %v1115 = vpop.f32.mrf.mxu0
  %v1116 = vadd.f32 0.0, %v1115
  %v1117 = vpop.f32.mrf.mxu0
  %1118 = vmatprep.mubr.bf16.mxu0 0
  %1119 = vmatmul.mubr.bf16.gmra.mxu0 %v1019
  %v1120 = vpop.f32.mrf.mxu0
  %v1121 = vadd.f32 0.0, %v1120
  %v1122 = vpop.f32.mrf.mxu0
  %v1123 = vpop.f32.mrf.mxu0
  %v1124 = vadd.f32 0.0, %v1123
  %v1125 = vpop.f32.mrf.mxu0
  %1126 = vmatprep.mubr.bf16.mxu0 0
  %1127 = vmatmul.mubr.bf16.gmra.mxu0 %v1022
  %v1128 = vpop.f32.mrf.mxu0
  %v1129 = vadd.f32 0.0, %v1128
  %v1130 = vpop.f32.mrf.mxu0
  %v1131 = vpop.f32.mrf.mxu0
  %v1132 = vadd.f32 0.0, %v1131
  %v1133 = vpop.f32.mrf.mxu0
  %1134 = vmatprep.mubr.bf16.mxu0 0
  %1135 = vmatmul.mubr.bf16.gmra.mxu0 %v1025
  %v1136 = vpop.f32.mrf.mxu0
  %v1137 = vadd.f32 0.0, %v1136
  %v1138 = vpop.f32.mrf.mxu0
  %v1139 = vpop.f32.mrf.mxu0
  %v1140 = vadd.f32 0.0, %v1139
  %v1141 = vpop.f32.mrf.mxu0
  %1142 = vmatprep.mubr.bf16.mxu0 0
  %1143 = vmatmul.mubr.bf16.gmra.mxu0 %v1028
  %v1144 = vpop.f32.mrf.mxu0
  %v1145 = vadd.f32 0.0, %v1144
  %v1146 = vpop.f32.mrf.mxu0
  %v1147 = vpop.f32.mrf.mxu0
  %v1148 = vadd.f32 0.0, %v1147
  %v1149 = vpop.f32.mrf.mxu0
  %1150 = vmatprep.mubr.bf16.mxu0 0
  %1151 = vmatmul.mubr.bf16.gmra.mxu0 %v1031
  %v1152 = vpop.f32.mrf.mxu0
  %v1153 = vadd.f32 0.0, %v1152
  %v1154 = vpop.f32.mrf.mxu0
  %v1155 = vpop.f32.mrf.mxu0
  %v1156 = vadd.f32 0.0, %v1155
  %v1157 = vpop.f32.mrf.mxu0
  %1158 = vmatprep.mubr.bf16.mxu0 0
  %1159 = vmatmul.mubr.bf16.gmra.mxu0 %v1034
  %v1160 = vpop.f32.mrf.mxu0
  %v1161 = vadd.f32 0.0, %v1160
  %v1162 = vpop.f32.mrf.mxu0
  %v1163 = vpop.f32.mrf.mxu0
  %v1164 = vadd.f32 0.0, %v1163
  %v1165 = vpop.f32.mrf.mxu0
  %1166 = vmatprep.mubr.bf16.mxu0 0
  %1167 = vmatmul.mubr.bf16.gmra.mxu0 %v1037
  %v1168 = vpop.f32.mrf.mxu0
  %v1169 = vadd.f32 0.0, %v1168
  %v1170 = vpop.f32.mrf.mxu0
  %v1171 = vpop.f32.mrf.mxu0
  %v1172 = vadd.f32 0.0, %v1171
  %v1173 = vpop.f32.mrf.mxu0
  %1174 = vmatprep.mubr.bf16.mxu0 0
  %1175 = vmatmul.mubr.bf16.gmra.mxu0 %v1040
  %v1176 = vpop.f32.mrf.mxu0
  %v1177 = vadd.f32 0.0, %v1176
  %v1178 = vpop.f32.mrf.mxu0
  %v1179 = vpop.f32.mrf.mxu0
  %v1180 = vadd.f32 0.0, %v1179
  %v1181 = vpop.f32.mrf.mxu0
  %1182 = vmatprep.mubr.bf16.mxu0 0
  %1183 = vmatmul.mubr.bf16.gmra.mxu0 %v1043
  %v1184 = vpop.f32.mrf.mxu0
  %v1185 = vadd.f32 0.0, %v1184
  %v1186 = vpop.f32.mrf.mxu0
  %v1187 = vpop.f32.mrf.mxu0
  %v1188 = vadd.f32 0.0, %v1187
  %v1189 = vpop.f32.mrf.mxu0
  %1190 = vmatprep.mubr.bf16.mxu0 0
  %1191 = vmatmul.mubr.bf16.gmra.mxu0 %v1046
  %v1192 = vpop.f32.mrf.mxu0
  %v1193 = vadd.f32 0.0, %v1192
  %v1194 = vpop.f32.mrf.mxu0
  %v1195 = vpop.f32.mrf.mxu0
  %v1196 = vadd.f32 0.0, %v1195
  %v1197 = vpop.f32.mrf.mxu0
  %1198 = vmatprep.mubr.bf16.mxu0 0
  %1199 = vmatmul.mubr.bf16.gmra.mxu0 %v1049
  %v1200 = vpop.f32.mrf.mxu0
  %v1201 = vadd.f32 0.0, %v1200
  %v1202 = vpop.f32.mrf.mxu0
  %v1203 = vpop.f32.mrf.mxu0
  %v1204 = vadd.f32 0.0, %v1203
  %v1205 = vpop.f32.mrf.mxu0
  %1206 = vmatprep.mubr.bf16.mxu0 0
  %1207 = vmatmul.mubr.bf16.gmra.mxu0 %v1052
  %v1208 = vpop.f32.mrf.mxu0
  %v1209 = vadd.f32 0.0, %v1208
  %v1210 = vpop.f32.mrf.mxu0
  %v1211 = vpop.f32.mrf.mxu0
  %v1212 = vadd.f32 0.0, %v1211
  %v1213 = vpop.f32.mrf.mxu0
  %1214 = vdwg.mxu0
  %v1215 = vadd.f32 %v891, %v1089
  %v1216 = vadd.f32 %v892, %v1092
  %v1217 = vadd.f32 %v893, %v1097
  %v1218 = vadd.f32 %v894, %v1100
  %v1219 = vadd.f32 %v895, %v1105
  %v1220 = vadd.f32 %v896, %v1108
  %v1221 = vadd.f32 %v897, %v1113
  %v1222 = vadd.f32 %v898, %v1116
  %v1223 = vadd.f32 %v899, %v1121
  %v1224 = vadd.f32 %v900, %v1124
  %v1225 = vadd.f32 %v901, %v1129
  %v1226 = vadd.f32 %v902, %v1132
  %v1227 = vadd.f32 %v903, %v1137
  %v1228 = vadd.f32 %v904, %v1140
  %v1229 = vadd.f32 %v905, %v1145
  %v1230 = vadd.f32 %v906, %v1148
  %v1231 = vadd.f32 %v907, %v1153
  %v1232 = vadd.f32 %v908, %v1156
  %v1233 = vadd.f32 %v909, %v1161
  %v1234 = vadd.f32 %v910, %v1164
  %v1235 = vadd.f32 %v911, %v1169
  %v1236 = vadd.f32 %v912, %v1172
  %v1237 = vadd.f32 %v913, %v1177
  %v1238 = vadd.f32 %v914, %v1180
  %v1239 = vadd.f32 %v915, %v1185
  %v1240 = vadd.f32 %v916, %v1188
  %v1241 = vadd.f32 %v917, %v1193
  %v1242 = vadd.f32 %v918, %v1196
  %v1243 = vadd.f32 %v919, %v1201
  %v1244 = vadd.f32 %v920, %v1204
  %v1245 = vadd.f32 %v921, %v1209
  %v1246 = vadd.f32 %v922, %v1212
  %v1247 = vld [vmem:[%s2] sm:$0x1]
  %v1249 = vlaneseq
  %v1250 = vshrl.u32 %v1249, 7
  %v1251 = vsub.s32 0, %v1250
  %v1252 = vrot.slane %v1247, %v1251
  %v1254 = vadd.f32 %v1215, %v1252
  %v1255 = vadd.f32 %v1216, %v1252
  %v1256 = vadd.f32 %v1217, %v1252
  %v1257 = vadd.f32 %v1218, %v1252
  %v1258 = vadd.f32 %v1219, %v1252
  %v1259 = vadd.f32 %v1220, %v1252
  %v1260 = vadd.f32 %v1221, %v1252
  %v1261 = vadd.f32 %v1222, %v1252
  %v1262 = vadd.f32 %v1223, %v1252
  %v1263 = vadd.f32 %v1224, %v1252
  %v1264 = vadd.f32 %v1225, %v1252
  %v1265 = vadd.f32 %v1226, %v1252
  %v1266 = vadd.f32 %v1227, %v1252
  %v1267 = vadd.f32 %v1228, %v1252
  %v1268 = vadd.f32 %v1229, %v1252
  %v1269 = vadd.f32 %v1230, %v1252
  %v1270 = vadd.f32 %v1231, %v1252
  %v1271 = vadd.f32 %v1232, %v1252
  %v1272 = vadd.f32 %v1233, %v1252
  %v1273 = vadd.f32 %v1234, %v1252
  %v1274 = vadd.f32 %v1235, %v1252
  %v1275 = vadd.f32 %v1236, %v1252
  %v1276 = vadd.f32 %v1237, %v1252
  %v1277 = vadd.f32 %v1238, %v1252
  %v1278 = vadd.f32 %v1239, %v1252
  %v1279 = vadd.f32 %v1240, %v1252
  %v1280 = vadd.f32 %v1241, %v1252
  %v1281 = vadd.f32 %v1242, %v1252
  %v1282 = vadd.f32 %v1243, %v1252
  %v1283 = vadd.f32 %v1244, %v1252
  %v1284 = vadd.f32 %v1245, %v1252
  %v1285 = vadd.f32 %v1246, %v1252
  %v1286 = vmax.f32 %v1254, 0.0
  %v1287 = vmax.f32 %v1255, 0.0
  %v1288 = vmax.f32 %v1256, 0.0
  %v1289 = vmax.f32 %v1257, 0.0
  %v1290 = vmax.f32 %v1258, 0.0
  %v1291 = vmax.f32 %v1259, 0.0
  %v1292 = vmax.f32 %v1260, 0.0
  %v1293 = vmax.f32 %v1261, 0.0
  %v1294 = vmax.f32 %v1262, 0.0
  %v1295 = vmax.f32 %v1263, 0.0
  %v1296 = vmax.f32 %v1264, 0.0
  %v1297 = vmax.f32 %v1265, 0.0
  %v1298 = vmax.f32 %v1266, 0.0
  %v1299 = vmax.f32 %v1267, 0.0
  %v1300 = vmax.f32 %v1268, 0.0
  %v1301 = vmax.f32 %v1269, 0.0
  %v1302 = vmax.f32 %v1270, 0.0
  %v1303 = vmax.f32 %v1271, 0.0
  %v1304 = vmax.f32 %v1272, 0.0
  %v1305 = vmax.f32 %v1273, 0.0
  %v1306 = vmax.f32 %v1274, 0.0
  %v1307 = vmax.f32 %v1275, 0.0
  %v1308 = vmax.f32 %v1276, 0.0
  %v1309 = vmax.f32 %v1277, 0.0
  %v1310 = vmax.f32 %v1278, 0.0
  %v1311 = vmax.f32 %v1279, 0.0
  %v1312 = vmax.f32 %v1280, 0.0
  %v1313 = vmax.f32 %v1281, 0.0
  %v1314 = vmax.f32 %v1282, 0.0
  %v1315 = vmax.f32 %v1283, 0.0
  %v1316 = vmax.f32 %v1284, 0.0
  %v1317 = vmax.f32 %v1285, 0.0
  %1318 = vst [vmem:[%s3] sm:$0xff] %v1286
  %1319 = vst [vmem:[%s3 + $0x8] sm:$0xff] %v1287
  %1320 = vst [vmem:[%s3 + $0x10] sm:$0xff] %v1288
  %1321 = vst [vmem:[%s3 + $0x18] sm:$0xff] %v1289
  %1322 = vst [vmem:[%s3 + $0x20] sm:$0xff] %v1290
  %1323 = vst [vmem:[%s3 + $0x28] sm:$0xff] %v1291
  %1324 = vst [vmem:[%s3 + $0x30] sm:$0xff] %v1292
  %1325 = vst [vmem:[%s3 + $0x38] sm:$0xff] %v1293
  %1326 = vst [vmem:[%s3 + $0x40] sm:$0xff] %v1294
  %1327 = vst [vmem:[%s3 + $0x48] sm:$0xff] %v1295
  %1328 = vst [vmem:[%s3 + $0x50] sm:$0xff] %v1296
  %1329 = vst [vmem:[%s3 + $0x58] sm:$0xff] %v1297
  %1330 = vst [vmem:[%s3 + $0x60] sm:$0xff] %v1298
  %1331 = vst [vmem:[%s3 + $0x68] sm:$0xff] %v1299
  %1332 = vst [vmem:[%s3 + $0x70] sm:$0xff] %v1300
  %1333 = vst [vmem:[%s3 + $0x78] sm:$0xff] %v1301
  %1334 = vst [vmem:[%s3 + $0x80] sm:$0xff] %v1302
  %1335 = vst [vmem:[%s3 + $0x88] sm:$0xff] %v1303
  %1336 = vst [vmem:[%s3 + $0x90] sm:$0xff] %v1304
  %1337 = vst [vmem:[%s3 + $0x98] sm:$0xff] %v1305
  %1338 = vst [vmem:[%s3 + $0xa0] sm:$0xff] %v1306
  %1339 = vst [vmem:[%s3 + $0xa8] sm:$0xff] %v1307
  %1340 = vst [vmem:[%s3 + $0xb0] sm:$0xff] %v1308
  %1341 = vst [vmem:[%s3 + $0xb8] sm:$0xff] %v1309
  %1342 = vst [vmem:[%s3 + $0xc0] sm:$0xff] %v1310
  %1343 = vst [vmem:[%s3 + $0xc8] sm:$0xff] %v1311
  %1344 = vst [vmem:[%s3 + $0xd0] sm:$0xff] %v1312
  %1345 = vst [vmem:[%s3 + $0xd8] sm:$0xff] %v1313
  %1346 = vst [vmem:[%s3 + $0xe0] sm:$0xff] %v1314
  %1347 = vst [vmem:[%s3 + $0xe8] sm:$0xff] %v1315
  %1348 = vst [vmem:[%s3 + $0xf0] sm:$0xff] %v1316
  %1349 = vst [vmem:[%s3 + $0xf8] sm:$0xff] %v1317
  // Predicated region
  $region14: #{forward.4} parent=0 // pred_check
    _
  $region15: #{forward.4} parent=0 // pred_check_branch
    %1351 = sbr.rel (0) target = $region17
  $region16: #{forward.4} parent=0 // pred_region
    _
  $region17: #{forward.4} parent=0 // pred_fallthru
    _
  // Predicated region
  $region18: #{forward.4} parent=0 // pred_check
    _
  $region19: #{forward.4} parent=0 // pred_check_branch
    %1353 = sbr.rel (0) target = $region21
  $region20: #{forward.4} parent=0 // pred_region
    _
  $region21: #{forward.4} parent=0 // pred_fallthru
    _

// kernel: forward.5
$region0: #{forward.5}
  #allocation0 [shape = 'u32[]', space=smem, size = 0x4, offset = 0x4, fixed_abs, tag = 'smem constant byte address 0x4 - core index']
  #allocation1 [shape = 'u32[144,128]{1,0:T(1,128)}', space=vmem, size = 0x12000, scoped, tag = 'internal scratch']
  %s0 = inlined_call_operand.vmem [shape: f32[70,128], index: 0, kind: input, shape index: {}]
  %s1 = inlined_call_operand.vmem [shape: bf16[4,128,128], index: 1, kind: input, shape index: {}]
  %s2 = inlined_call_operand.vmem [shape: f32[1,128], index: 2, kind: input, shape index: {}]
  %s3 = inlined_call_operand.vmem [shape: f32[64,128], index: 3, kind: output, shape index: {}]
  %s4 = sld [smem:[#allocation0]]
  $region22: #{forward.5} parent=0
    _
  %s6 = ssub.s32 1, %s4
  %s7 = scalar_select 0, %s6, %s4
  // Predicated region
  $region2: #{forward.5} parent=0 // pred_check
    _
  $region3: #{forward.5} parent=0 // pred_check_branch
    %9 = sbr.rel (0) target = $region5
  $region4: #{forward.5} parent=0 // pred_region
    _
  $region5: #{forward.5} parent=0 // pred_fallthru
    _
  // Predicated region
  $region6: #{forward.5} parent=0 // pred_check
    _
  $region7: #{forward.5} parent=0 // pred_check_branch
    %11 = sbr.rel (0) target = $region9
  $region8: #{forward.5} parent=0 // pred_region
    _
  $region9: #{forward.5} parent=0 // pred_fallthru
    _
  // Predicated region
  $region10: #{forward.5} parent=0 // pred_check
    _
  $region11: #{forward.5} parent=0 // pred_check_branch
    %13 = sbr.rel (0) target = $region13
  $region12: #{forward.5} parent=0 // pred_region
    _
  $region13: #{forward.5} parent=0 // pred_fallthru
    _
  %s15 = smul.u32 0, 64
  %s16 = scalar_lea.vmem %s0, %s15
  %v17 = vld [vmem:[%s16] sm:$0xff]
  %v18 = vld [vmem:[%s16 + $0x8] sm:$0xff]
  %v19 = vld [vmem:[%s16 + $0x10] sm:$0xff]
  %v20 = vld [vmem:[%s16 + $0x18] sm:$0xff]
  %v21 = vld [vmem:[%s16 + $0x20] sm:$0xff]
  %v22 = vld [vmem:[%s16 + $0x28] sm:$0xff]
  %v23 = vld [vmem:[%s16 + $0x30] sm:$0xff]
  %v24 = vld [vmem:[%s16 + $0x38] sm:$0xff]
  %v25 = vpack.c.bf16 %v18, %v17
  %v26 = vpack.c.bf16 %v20, %v19
  %v27 = vpack.c.bf16 %v22, %v21
  %v28 = vpack.c.bf16 %v24, %v23
  %v29 = vld [vmem:[%s1] sm:$0xf]
  %v30 = vld [vmem:[%s1 + $0x4] sm:$0xf]
  %v31 = vld [vmem:[%s1 + $0x8] sm:$0xf]
  %v32 = vld [vmem:[%s1 + $0xc] sm:$0xf]
  %v33 = vld [vmem:[%s1 + $0x10] sm:$0xf]
  %v34 = vld [vmem:[%s1 + $0x14] sm:$0xf]
  %v35 = vld [vmem:[%s1 + $0x18] sm:$0xf]
  %v36 = vld [vmem:[%s1 + $0x1c] sm:$0xf]
  %v37 = vld [vmem:[%s1 + $0x20] sm:$0xf]
  %v38 = vld [vmem:[%s1 + $0x24] sm:$0xf]
  %v39 = vld [vmem:[%s1 + $0x28] sm:$0xf]
  %v40 = vld [vmem:[%s1 + $0x2c] sm:$0xf]
  %v41 = vld [vmem:[%s1 + $0x30] sm:$0xf]
  %v42 = vld [vmem:[%s1 + $0x34] sm:$0xf]
  %v43 = vld [vmem:[%s1 + $0x38] sm:$0xf]
  %v44 = vld [vmem:[%s1 + $0x3c] sm:$0xf]
  %s45 = sadd.s32 %s15, 1
  %s46 = scalar_lea.vmem %s0, %s45
  %v47 = vld [vmem:[%s46] sm:$0xff]
  %v48 = vld [vmem:[%s46 + $0x8] sm:$0xff]
  %v49 = vld [vmem:[%s46 + $0x10] sm:$0xff]
  %v50 = vld [vmem:[%s46 + $0x18] sm:$0xff]
  %v51 = vld [vmem:[%s46 + $0x20] sm:$0xff]
  %v52 = vld [vmem:[%s46 + $0x28] sm:$0xff]
  %v53 = vld [vmem:[%s46 + $0x30] sm:$0xff]
  %v54 = vld [vmem:[%s46 + $0x38] sm:$0xff]
  %v55 = vpack.c.bf16 %v48, %v47
  %v56 = vpack.c.bf16 %v50, %v49
  %v57 = vpack.c.bf16 %v52, %v51
  %v58 = vpack.c.bf16 %v54, %v53
  %s59 = scalar_lea.vmem %s1, 64
  %v60 = vld [vmem:[%s59] sm:$0xf]
  %v61 = vld [vmem:[%s59 + $0x4] sm:$0xf]
  %v62 = vld [vmem:[%s59 + $0x8] sm:$0xf]
  %v63 = vld [vmem:[%s59 + $0xc] sm:$0xf]
  %v64 = vld [vmem:[%s59 + $0x10] sm:$0xf]
  %v65 = vld [vmem:[%s59 + $0x14] sm:$0xf]
  %v66 = vld [vmem:[%s59 + $0x18] sm:$0xf]
  %v67 = vld [vmem:[%s59 + $0x1c] sm:$0xf]
  %v68 = vld [vmem:[%s59 + $0x20] sm:$0xf]
  %v69 = vld [vmem:[%s59 + $0x24] sm:$0xf]
  %v70 = vld [vmem:[%s59 + $0x28] sm:$0xf]
  %v71 = vld [vmem:[%s59 + $0x2c] sm:$0xf]
  %v72 = vld [vmem:[%s59 + $0x30] sm:$0xf]
  %v73 = vld [vmem:[%s59 + $0x34] sm:$0xf]
  %v74 = vld [vmem:[%s59 + $0x38] sm:$0xf]
  %v75 = vld [vmem:[%s59 + $0x3c] sm:$0xf]
  %v92 = vunpack.c.l.b16 %v60
  %v93 = vunpack.c.l.b16 %v61
  %v94 = vunpack.c.l.b16 %v62
  %v95 = vunpack.c.l.b16 %v63
  %v96 = vunpack.c.l.b16 %v64
  %v97 = vunpack.c.l.b16 %v65
  %v98 = vunpack.c.l.b16 %v66
  %v99 = vunpack.c.l.b16 %v67
  %v100 = vunpack.c.l.b16 %v68
  %v101 = vunpack.c.l.b16 %v69
  %v102 = vunpack.c.l.b16 %v70
  %v103 = vunpack.c.l.b16 %v71
  %v104 = vunpack.c.l.b16 %v72
  %v105 = vunpack.c.l.b16 %v73
  %v106 = vunpack.c.l.b16 %v74
  %v107 = vunpack.c.l.b16 %v75
  %v108 = vpack.c.b16 %v93, %v92
  %v109 = vpack.c.b16 %v95, %v94
  %v110 = vpack.c.b16 %v97, %v96
  %v111 = vpack.c.b16 %v99, %v98
  %v112 = vpack.c.b16 %v101, %v100
  %v113 = vpack.c.b16 %v103, %v102
  %v114 = vpack.c.b16 %v105, %v104
  %v115 = vpack.c.b16 %v107, %v106
  %124 = vmatprep.subr.bf16.mxu0 0
  %125 = vmatpush1.bf16.msra.mxu0 %v115
  %126 = vmatprep.subr.bf16.mxu0 0
  %127 = vmatpush1.bf16.msra.mxu0 %v114
  %128 = vmatprep.subr.bf16.mxu0 0
  %129 = vmatpush1.bf16.msra.mxu0 %v113
  %130 = vmatprep.subr.bf16.mxu0 0
  %131 = vmatpush1.bf16.msra.mxu0 %v112
  %132 = vmatprep.subr.bf16.mxu0 0
  %133 = vmatpush1.bf16.msra.mxu0 %v111
  %134 = vmatprep.subr.bf16.mxu0 0
  %135 = vmatpush1.bf16.msra.mxu0 %v110
  %136 = vmatprep.subr.bf16.mxu0 0
  %137 = vmatpush1.bf16.msra.mxu0 %v109
  %138 = vmatprep.subr.bf16.mxu0 0
  %139 = vmatpush1.bf16.msra.mxu0 %v108
  %140 = vmatprep.subr.bf16.mxu0 0
  %141 = vmatpush2.bf16.msra.mxu0 0
  %142 = vmatprep.subr.bf16.mxu0 0
  %143 = vmatpush2.bf16.msra.mxu0 0
  %144 = vmatprep.subr.bf16.mxu0 0
  %145 = vmatpush2.bf16.msra.mxu0 0
  %146 = vmatprep.subr.bf16.mxu0 0
  %147 = vmatpush2.bf16.msra.mxu0 0
  %148 = vmatprep.subr.bf16.mxu0 0
  %149 = vmatpush2.bf16.msra.mxu0 0
  %150 = vmatprep.subr.bf16.mxu0 0
  %151 = vmatpush2.bf16.msra.mxu0 0
  %152 = vmatprep.subr.bf16.mxu0 0
  %153 = vmatpush2.bf16.msra.mxu0 0
  %154 = vmatprep.subr.bf16.mxu0 0
  %155 = vmatpush2.bf16.msra.mxu0 0
  %156 = vmatprep.mubr.bf16.mxu0 0
  %157 = vmatmul.mubr.bf16.gmra.mxu0 %v55
  %v158 = vpop.f32.mrf.mxu0
  %v159 = vadd.f32 0.0, %v158
  %v160 = vpop.f32.mrf.mxu0
  %v161 = vpop.f32.mrf.mxu0
  %v162 = vadd.f32 0.0, %v161
  %v163 = vpop.f32.mrf.mxu0
  %164 = vmatprep.mubr.bf16.mxu0 0
  %165 = vmatmul.mubr.bf16.gmra.mxu0 %v56
  %v166 = vpop.f32.mrf.mxu0
  %v167 = vadd.f32 0.0, %v166
  %v168 = vpop.f32.mrf.mxu0
  %v169 = vpop.f32.mrf.mxu0
  %v170 = vadd.f32 0.0, %v169
  %v171 = vpop.f32.mrf.mxu0
  %172 = vmatprep.mubr.bf16.mxu0 0
  %173 = vmatmul.mubr.bf16.gmra.mxu0 %v57
  %v174 = vpop.f32.mrf.mxu0
  %v175 = vadd.f32 0.0, %v174
  %v176 = vpop.f32.mrf.mxu0
  %v177 = vpop.f32.mrf.mxu0
  %v178 = vadd.f32 0.0, %v177
  %v179 = vpop.f32.mrf.mxu0
  %180 = vmatprep.mubr.bf16.mxu0 0
  %181 = vmatmul.mubr.bf16.gmra.mxu0 %v58
  %v182 = vpop.f32.mrf.mxu0
  %v183 = vadd.f32 0.0, %v182
  %v184 = vpop.f32.mrf.mxu0
  %v185 = vpop.f32.mrf.mxu0
  %v186 = vadd.f32 0.0, %v185
  %v187 = vpop.f32.mrf.mxu0
  %188 = vdwg.mxu0
  %v205 = vunpack.c.l.b16 %v29
  %v206 = vunpack.c.l.b16 %v30
  %v207 = vunpack.c.l.b16 %v31
  %v208 = vunpack.c.l.b16 %v32
  %v209 = vunpack.c.l.b16 %v33
  %v210 = vunpack.c.l.b16 %v34
  %v211 = vunpack.c.l.b16 %v35
  %v212 = vunpack.c.l.b16 %v36
  %v213 = vunpack.c.l.b16 %v37
  %v214 = vunpack.c.l.b16 %v38
  %v215 = vunpack.c.l.b16 %v39
  %v216 = vunpack.c.l.b16 %v40
  %v217 = vunpack.c.l.b16 %v41
  %v218 = vunpack.c.l.b16 %v42
  %v219 = vunpack.c.l.b16 %v43
  %v220 = vunpack.c.l.b16 %v44
  %v221 = vpack.c.b16 %v206, %v205
  %v222 = vpack.c.b16 %v208, %v207
  %v223 = vpack.c.b16 %v210, %v209
  %v224 = vpack.c.b16 %v212, %v211
  %v225 = vpack.c.b16 %v214, %v213
  %v226 = vpack.c.b16 %v216, %v215
  %v227 = vpack.c.b16 %v218, %v217
  %v228 = vpack.c.b16 %v220, %v219
  %237 = vmatprep.subr.bf16.mxu0 0
  %238 = vmatpush1.bf16.msra.mxu0 %v228
  %239 = vmatprep.subr.bf16.mxu0 0
  %240 = vmatpush1.bf16.msra.mxu0 %v227
  %241 = vmatprep.subr.bf16.mxu0 0
  %242 = vmatpush1.bf16.msra.mxu0 %v226
  %243 = vmatprep.subr.bf16.mxu0 0
  %244 = vmatpush1.bf16.msra.mxu0 %v225
  %245 = vmatprep.subr.bf16.mxu0 0
  %246 = vmatpush1.bf16.msra.mxu0 %v224
  %247 = vmatprep.subr.bf16.mxu0 0
  %248 = vmatpush1.bf16.msra.mxu0 %v223
  %249 = vmatprep.subr.bf16.mxu0 0
  %250 = vmatpush1.bf16.msra.mxu0 %v222
  %251 = vmatprep.subr.bf16.mxu0 0
  %252 = vmatpush1.bf16.msra.mxu0 %v221
  %253 = vmatprep.subr.bf16.mxu0 0
  %254 = vmatpush2.bf16.msra.mxu0 0
  %255 = vmatprep.subr.bf16.mxu0 0
  %256 = vmatpush2.bf16.msra.mxu0 0
  %257 = vmatprep.subr.bf16.mxu0 0
  %258 = vmatpush2.bf16.msra.mxu0 0
  %259 = vmatprep.subr.bf16.mxu0 0
  %260 = vmatpush2.bf16.msra.mxu0 0
  %261 = vmatprep.subr.bf16.mxu0 0
  %262 = vmatpush2.bf16.msra.mxu0 0
  %263 = vmatprep.subr.bf16.mxu0 0
  %264 = vmatpush2.bf16.msra.mxu0 0
  %265 = vmatprep.subr.bf16.mxu0 0
  %266 = vmatpush2.bf16.msra.mxu0 0
  %267 = vmatprep.subr.bf16.mxu0 0
  %268 = vmatpush2.bf16.msra.mxu0 0
  %269 = vmatprep.mubr.bf16.mxu0 0
  %270 = vmatmul.mubr.bf16.gmra.mxu0 %v25
  %v271 = vpop.f32.mrf.mxu0
  %v272 = vadd.f32 %v159, %v271
  %v273 = vpop.f32.mrf.mxu0
  %v274 = vpop.f32.mrf.mxu0
  %v275 = vadd.f32 %v162, %v274
  %v276 = vpop.f32.mrf.mxu0
  %277 = vmatprep.mubr.bf16.mxu0 0
  %278 = vmatmul.mubr.bf16.gmra.mxu0 %v26
  %v279 = vpop.f32.mrf.mxu0
  %v280 = vadd.f32 %v167, %v279
  %v281 = vpop.f32.mrf.mxu0
  %v282 = vpop.f32.mrf.mxu0
  %v283 = vadd.f32 %v170, %v282
  %v284 = vpop.f32.mrf.mxu0
  %285 = vmatprep.mubr.bf16.mxu0 0
  %286 = vmatmul.mubr.bf16.gmra.mxu0 %v27
  %v287 = vpop.f32.mrf.mxu0
  %v288 = vadd.f32 %v175, %v287
  %v289 = vpop.f32.mrf.mxu0
  %v290 = vpop.f32.mrf.mxu0
  %v291 = vadd.f32 %v178, %v290
  %v292 = vpop.f32.mrf.mxu0
  %293 = vmatprep.mubr.bf16.mxu0 0
  %294 = vmatmul.mubr.bf16.gmra.mxu0 %v28
  %v295 = vpop.f32.mrf.mxu0
  %v296 = vadd.f32 %v183, %v295
  %v297 = vpop.f32.mrf.mxu0
  %v298 = vpop.f32.mrf.mxu0
  %v299 = vadd.f32 %v186, %v298
  %v300 = vpop.f32.mrf.mxu0
  %301 = vdwg.mxu0
  %s302 = sadd.s32 %s15, 5
  %s303 = scalar_lea.vmem %s0, %s302
  %v304 = vld [vmem:[%s303] sm:$0xff]
  %v305 = vld [vmem:[%s303 + $0x8] sm:$0xff]
  %v306 = vld [vmem:[%s303 + $0x10] sm:$0xff]
  %v307 = vld [vmem:[%s303 + $0x18] sm:$0xff]
  %v308 = vld [vmem:[%s303 + $0x20] sm:$0xff]
  %v309 = vld [vmem:[%s303 + $0x28] sm:$0xff]
  %v310 = vld [vmem:[%s303 + $0x30] sm:$0xff]
  %v311 = vld [vmem:[%s303 + $0x38] sm:$0xff]
  %v312 = vpack.c.bf16 %v305, %v304
  %v313 = vpack.c.bf16 %v307, %v306
  %v314 = vpack.c.bf16 %v309, %v308
  %v315 = vpack.c.bf16 %v311, %v310
  %s316 = scalar_lea.vmem %s1, 128
  %v317 = vld [vmem:[%s316] sm:$0xf]
  %v318 = vld [vmem:[%s316 + $0x4] sm:$0xf]
  %v319 = vld [vmem:[%s316 + $0x8] sm:$0xf]
  %v320 = vld [vmem:[%s316 + $0xc] sm:$0xf]
  %v321 = vld [vmem:[%s316 + $0x10] sm:$0xf]
  %v322 = vld [vmem:[%s316 + $0x14] sm:$0xf]
  %v323 = vld [vmem:[%s316 + $0x18] sm:$0xf]
  %v324 = vld [vmem:[%s316 + $0x1c] sm:$0xf]
  %v325 = vld [vmem:[%s316 + $0x20] sm:$0xf]
  %v326 = vld [vmem:[%s316 + $0x24] sm:$0xf]
  %v327 = vld [vmem:[%s316 + $0x28] sm:$0xf]
  %v328 = vld [vmem:[%s316 + $0x2c] sm:$0xf]
  %v329 = vld [vmem:[%s316 + $0x30] sm:$0xf]
  %v330 = vld [vmem:[%s316 + $0x34] sm:$0xf]
  %v331 = vld [vmem:[%s316 + $0x38] sm:$0xf]
  %v332 = vld [vmem:[%s316 + $0x3c] sm:$0xf]
  %v349 = vunpack.c.l.b16 %v317
  %v350 = vunpack.c.l.b16 %v318
  %v351 = vunpack.c.l.b16 %v319
  %v352 = vunpack.c.l.b16 %v320
  %v353 = vunpack.c.l.b16 %v321
  %v354 = vunpack.c.l.b16 %v322
  %v355 = vunpack.c.l.b16 %v323
  %v356 = vunpack.c.l.b16 %v324
  %v357 = vunpack.c.l.b16 %v325
  %v358 = vunpack.c.l.b16 %v326
  %v359 = vunpack.c.l.b16 %v327
  %v360 = vunpack.c.l.b16 %v328
  %v361 = vunpack.c.l.b16 %v329
  %v362 = vunpack.c.l.b16 %v330
  %v363 = vunpack.c.l.b16 %v331
  %v364 = vunpack.c.l.b16 %v332
  %v365 = vpack.c.b16 %v350, %v349
  %v366 = vpack.c.b16 %v352, %v351
  %v367 = vpack.c.b16 %v354, %v353
  %v368 = vpack.c.b16 %v356, %v355
  %v369 = vpack.c.b16 %v358, %v357
  %v370 = vpack.c.b16 %v360, %v359
  %v371 = vpack.c.b16 %v362, %v361
  %v372 = vpack.c.b16 %v364, %v363
  %381 = vmatprep.subr.bf16.mxu0 0
  %382 = vmatpush1.bf16.msra.mxu0 %v372
  %383 = vmatprep.subr.bf16.mxu0 0
  %384 = vmatpush1.bf16.msra.mxu0 %v371
  %385 = vmatprep.subr.bf16.mxu0 0
  %386 = vmatpush1.bf16.msra.mxu0 %v370
  %387 = vmatprep.subr.bf16.mxu0 0
  %388 = vmatpush1.bf16.msra.mxu0 %v369
  %389 = vmatprep.subr.bf16.mxu0 0
  %390 = vmatpush1.bf16.msra.mxu0 %v368
  %391 = vmatprep.subr.bf16.mxu0 0
  %392 = vmatpush1.bf16.msra.mxu0 %v367
  %393 = vmatprep.subr.bf16.mxu0 0
  %394 = vmatpush1.bf16.msra.mxu0 %v366
  %395 = vmatprep.subr.bf16.mxu0 0
  %396 = vmatpush1.bf16.msra.mxu0 %v365
  %397 = vmatprep.subr.bf16.mxu0 0
  %398 = vmatpush2.bf16.msra.mxu0 0
  %399 = vmatprep.subr.bf16.mxu0 0
  %400 = vmatpush2.bf16.msra.mxu0 0
  %401 = vmatprep.subr.bf16.mxu0 0
  %402 = vmatpush2.bf16.msra.mxu0 0
  %403 = vmatprep.subr.bf16.mxu0 0
  %404 = vmatpush2.bf16.msra.mxu0 0
  %405 = vmatprep.subr.bf16.mxu0 0
  %406 = vmatpush2.bf16.msra.mxu0 0
  %407 = vmatprep.subr.bf16.mxu0 0
  %408 = vmatpush2.bf16.msra.mxu0 0
  %409 = vmatprep.subr.bf16.mxu0 0
  %410 = vmatpush2.bf16.msra.mxu0 0
  %411 = vmatprep.subr.bf16.mxu0 0
  %412 = vmatpush2.bf16.msra.mxu0 0
  %413 = vmatprep.mubr.bf16.mxu0 0
  %414 = vmatmul.mubr.bf16.gmra.mxu0 %v312
  %v415 = vpop.f32.mrf.mxu0
  %v416 = vadd.f32 0.0, %v415
  %v417 = vpop.f32.mrf.mxu0
  %v418 = vpop.f32.mrf.mxu0
  %v419 = vadd.f32 0.0, %v418
  %v420 = vpop.f32.mrf.mxu0
  %421 = vmatprep.mubr.bf16.mxu0 0
  %422 = vmatmul.mubr.bf16.gmra.mxu0 %v313
  %v423 = vpop.f32.mrf.mxu0
  %v424 = vadd.f32 0.0, %v423
  %v425 = vpop.f32.mrf.mxu0
  %v426 = vpop.f32.mrf.mxu0
  %v427 = vadd.f32 0.0, %v426
  %v428 = vpop.f32.mrf.mxu0
  %429 = vmatprep.mubr.bf16.mxu0 0
  %430 = vmatmul.mubr.bf16.gmra.mxu0 %v314
  %v431 = vpop.f32.mrf.mxu0
  %v432 = vadd.f32 0.0, %v431
  %v433 = vpop.f32.mrf.mxu0
  %v434 = vpop.f32.mrf.mxu0
  %v435 = vadd.f32 0.0, %v434
  %v436 = vpop.f32.mrf.mxu0
  %437 = vmatprep.mubr.bf16.mxu0 0
  %438 = vmatmul.mubr.bf16.gmra.mxu0 %v315
  %v439 = vpop.f32.mrf.mxu0
  %v440 = vadd.f32 0.0, %v439
  %v441 = vpop.f32.mrf.mxu0
  %v442 = vpop.f32.mrf.mxu0
  %v443 = vadd.f32 0.0, %v442
  %v444 = vpop.f32.mrf.mxu0
  %445 = vdwg.mxu0
  %v446 = vadd.f32 %v272, %v416
  %v447 = vadd.f32 %v275, %v419
  %v448 = vadd.f32 %v280, %v424
  %v449 = vadd.f32 %v283, %v427
  %v450 = vadd.f32 %v288, %v432
  %v451 = vadd.f32 %v291, %v435
  %v452 = vadd.f32 %v296, %v440
  %v453 = vadd.f32 %v299, %v443
  %s454 = sadd.s32 %s15, 6
  %s455 = scalar_lea.vmem %s0, %s454
  %v456 = vld [vmem:[%s455] sm:$0xff]
  %v457 = vld [vmem:[%s455 + $0x8] sm:$0xff]
  %v458 = vld [vmem:[%s455 + $0x10] sm:$0xff]
  %v459 = vld [vmem:[%s455 + $0x18] sm:$0xff]
  %v460 = vld [vmem:[%s455 + $0x20] sm:$0xff]
  %v461 = vld [vmem:[%s455 + $0x28] sm:$0xff]
  %v462 = vld [vmem:[%s455 + $0x30] sm:$0xff]
  %v463 = vld [vmem:[%s455 + $0x38] sm:$0xff]
  %v464 = vpack.c.bf16 %v457, %v456
  %v465 = vpack.c.bf16 %v459, %v458
  %v466 = vpack.c.bf16 %v461, %v460
  %v467 = vpack.c.bf16 %v463, %v462
  %s468 = scalar_lea.vmem %s1, 192
  %v469 = vld [vmem:[%s468] sm:$0xf]
  %v470 = vld [vmem:[%s468 + $0x4] sm:$0xf]
  %v471 = vld [vmem:[%s468 + $0x8] sm:$0xf]
  %v472 = vld [vmem:[%s468 + $0xc] sm:$0xf]
  %v473 = vld [vmem:[%s468 + $0x10] sm:$0xf]
  %v474 = vld [vmem:[%s468 + $0x14] sm:$0xf]
  %v475 = vld [vmem:[%s468 + $0x18] sm:$0xf]
  %v476 = vld [vmem:[%s468 + $0x1c] sm:$0xf]
  %v477 = vld [vmem:[%s468 + $0x20] sm:$0xf]
  %v478 = vld [vmem:[%s468 + $0x24] sm:$0xf]
  %v479 = vld [vmem:[%s468 + $0x28] sm:$0xf]
  %v480 = vld [vmem:[%s468 + $0x2c] sm:$0xf]
  %v481 = vld [vmem:[%s468 + $0x30] sm:$0xf]
  %v482 = vld [vmem:[%s468 + $0x34] sm:$0xf]
  %v483 = vld [vmem:[%s468 + $0x38] sm:$0xf]
  %v484 = vld [vmem:[%s468 + $0x3c] sm:$0xf]
  %v501 = vunpack.c.l.b16 %v469
  %v502 = vunpack.c.l.b16 %v470
  %v503 = vunpack.c.l.b16 %v471
  %v504 = vunpack.c.l.b16 %v472
  %v505 = vunpack.c.l.b16 %v473
  %v506 = vunpack.c.l.b16 %v474
  %v507 = vunpack.c.l.b16 %v475
  %v508 = vunpack.c.l.b16 %v476
  %v509 = vunpack.c.l.b16 %v477
  %v510 = vunpack.c.l.b16 %v478
  %v511 = vunpack.c.l.b16 %v479
  %v512 = vunpack.c.l.b16 %v480
  %v513 = vunpack.c.l.b16 %v481
  %v514 = vunpack.c.l.b16 %v482
  %v515 = vunpack.c.l.b16 %v483
  %v516 = vunpack.c.l.b16 %v484
  %v517 = vpack.c.b16 %v502, %v501
  %v518 = vpack.c.b16 %v504, %v503
  %v519 = vpack.c.b16 %v506, %v505
  %v520 = vpack.c.b16 %v508, %v507
  %v521 = vpack.c.b16 %v510, %v509
  %v522 = vpack.c.b16 %v512, %v511
  %v523 = vpack.c.b16 %v514, %v513
  %v524 = vpack.c.b16 %v516, %v515
  %533 = vmatprep.subr.bf16.mxu0 0
  %534 = vmatpush1.bf16.msra.mxu0 %v524
  %535 = vmatprep.subr.bf16.mxu0 0
  %536 = vmatpush1.bf16.msra.mxu0 %v523
  %537 = vmatprep.subr.bf16.mxu0 0
  %538 = vmatpush1.bf16.msra.mxu0 %v522
  %539 = vmatprep.subr.bf16.mxu0 0
  %540 = vmatpush1.bf16.msra.mxu0 %v521
  %541 = vmatprep.subr.bf16.mxu0 0
  %542 = vmatpush1.bf16.msra.mxu0 %v520
  %543 = vmatprep.subr.bf16.mxu0 0
  %544 = vmatpush1.bf16.msra.mxu0 %v519
  %545 = vmatprep.subr.bf16.mxu0 0
  %546 = vmatpush1.bf16.msra.mxu0 %v518
  %547 = vmatprep.subr.bf16.mxu0 0
  %548 = vmatpush1.bf16.msra.mxu0 %v517
  %549 = vmatprep.subr.bf16.mxu0 0
  %550 = vmatpush2.bf16.msra.mxu0 0
  %551 = vmatprep.subr.bf16.mxu0 0
  %552 = vmatpush2.bf16.msra.mxu0 0
  %553 = vmatprep.subr.bf16.mxu0 0
  %554 = vmatpush2.bf16.msra.mxu0 0
  %555 = vmatprep.subr.bf16.mxu0 0
  %556 = vmatpush2.bf16.msra.mxu0 0
  %557 = vmatprep.subr.bf16.mxu0 0
  %558 = vmatpush2.bf16.msra.mxu0 0
  %559 = vmatprep.subr.bf16.mxu0 0
  %560 = vmatpush2.bf16.msra.mxu0 0
  %561 = vmatprep.subr.bf16.mxu0 0
  %562 = vmatpush2.bf16.msra.mxu0 0
  %563 = vmatprep.subr.bf16.mxu0 0
  %564 = vmatpush2.bf16.msra.mxu0 0
  %565 = vmatprep.mubr.bf16.mxu0 0
  %566 = vmatmul.mubr.bf16.gmra.mxu0 %v464
  %v567 = vpop.f32.mrf.mxu0
  %v568 = vadd.f32 0.0, %v567
  %v569 = vpop.f32.mrf.mxu0
  %v570 = vpop.f32.mrf.mxu0
  %v571 = vadd.f32 0.0, %v570
  %v572 = vpop.f32.mrf.mxu0
  %573 = vmatprep.mubr.bf16.mxu0 0
  %574 = vmatmul.mubr.bf16.gmra.mxu0 %v465
  %v575 = vpop.f32.mrf.mxu0
  %v576 = vadd.f32 0.0, %v575
  %v577 = vpop.f32.mrf.mxu0
  %v578 = vpop.f32.mrf.mxu0
  %v579 = vadd.f32 0.0, %v578
  %v580 = vpop.f32.mrf.mxu0
  %581 = vmatprep.mubr.bf16.mxu0 0
  %582 = vmatmul.mubr.bf16.gmra.mxu0 %v466
  %v583 = vpop.f32.mrf.mxu0
  %v584 = vadd.f32 0.0, %v583
  %v585 = vpop.f32.mrf.mxu0
  %v586 = vpop.f32.mrf.mxu0
  %v587 = vadd.f32 0.0, %v586
  %v588 = vpop.f32.mrf.mxu0
  %589 = vmatprep.mubr.bf16.mxu0 0
  %590 = vmatmul.mubr.bf16.gmra.mxu0 %v467
  %v591 = vpop.f32.mrf.mxu0
  %v592 = vadd.f32 0.0, %v591
  %v593 = vpop.f32.mrf.mxu0
  %v594 = vpop.f32.mrf.mxu0
  %v595 = vadd.f32 0.0, %v594
  %v596 = vpop.f32.mrf.mxu0
  %597 = vdwg.mxu0
  %v598 = vadd.f32 %v446, %v568
  %v599 = vadd.f32 %v447, %v571
  %v600 = vadd.f32 %v448, %v576
  %v601 = vadd.f32 %v449, %v579
  %v602 = vadd.f32 %v450, %v584
  %v603 = vadd.f32 %v451, %v587
  %v604 = vadd.f32 %v452, %v592
  %v605 = vadd.f32 %v453, %v595
  %v606 = vld [vmem:[%s2] sm:$0x1]
  %v608 = vlaneseq
  %v609 = vshrl.u32 %v608, 7
  %v610 = vsub.s32 0, %v609
  %v611 = vrot.slane %v606, %v610
  %v613 = vadd.f32 %v598, %v611
  %v614 = vadd.f32 %v599, %v611
  %v615 = vadd.f32 %v600, %v611
  %v616 = vadd.f32 %v601, %v611
  %v617 = vadd.f32 %v602, %v611
  %v618 = vadd.f32 %v603, %v611
  %v619 = vadd.f32 %v604, %v611
  %v620 = vadd.f32 %v605, %v611
  %v621 = vmax.f32 %v613, 0.0
  %v622 = vmax.f32 %v614, 0.0
  %v623 = vmax.f32 %v615, 0.0
  %v624 = vmax.f32 %v616, 0.0
  %v625 = vmax.f32 %v617, 0.0
  %v626 = vmax.f32 %v618, 0.0
  %v627 = vmax.f32 %v619, 0.0
  %v628 = vmax.f32 %v620, 0.0
  %629 = vst [vmem:[%s3] sm:$0xff] %v621
  %630 = vst [vmem:[%s3 + $0x8] sm:$0xff] %v622
  %631 = vst [vmem:[%s3 + $0x10] sm:$0xff] %v623
  %632 = vst [vmem:[%s3 + $0x18] sm:$0xff] %v624
  %633 = vst [vmem:[%s3 + $0x20] sm:$0xff] %v625
  %634 = vst [vmem:[%s3 + $0x28] sm:$0xff] %v626
  %635 = vst [vmem:[%s3 + $0x30] sm:$0xff] %v627
  %636 = vst [vmem:[%s3 + $0x38] sm:$0xff] %v628
  // Predicated region
  $region14: #{forward.5} parent=0 // pred_check
    _
  $region15: #{forward.5} parent=0 // pred_check_branch
    %638 = sbr.rel (0) target = $region17
  $region16: #{forward.5} parent=0 // pred_region
    _
  $region17: #{forward.5} parent=0 // pred_fallthru
    _
  // Predicated region
  $region18: #{forward.5} parent=0 // pred_check
    _
  $region19: #{forward.5} parent=0 // pred_check_branch
    %640 = sbr.rel (0) target = $region21
  $region20: #{forward.5} parent=0 // pred_region
    _
  $region21: #{forward.5} parent=0 // pred_fallthru
    _

// kernel: forward.6
$region0: #{forward.6}
  #allocation0 [shape = 'u32[]', space=smem, size = 0x4, offset = 0x4, fixed_abs, tag = 'smem constant byte address 0x4 - core index']
  #allocation1 [shape = 'u32[144,128]{1,0:T(1,128)}', space=vmem, size = 0x12000, scoped, tag = 'internal scratch']
  %s0 = inlined_call_operand.vmem [shape: f32[42,64], index: 0, kind: input, shape index: {}]
  %s1 = inlined_call_operand.vmem [shape: bf16[9,64,128], index: 1, kind: input, shape index: {}]
  %s2 = inlined_call_operand.vmem [shape: f32[1,128], index: 2, kind: input, shape index: {}]
  %s3 = inlined_call_operand.vmem [shape: f32[32,128], index: 3, kind: output, shape index: {}]
  %s4 = sld [smem:[#allocation0]]
  $region22: #{forward.6} parent=0
    _
  %s6 = ssub.s32 1, %s4
  %s7 = scalar_select 0, %s6, %s4
  // Predicated region
  $region2: #{forward.6} parent=0 // pred_check
    _
  $region3: #{forward.6} parent=0 // pred_check_branch
    %9 = sbr.rel (0) target = $region5
  $region4: #{forward.6} parent=0 // pred_region
    _
  $region5: #{forward.6} parent=0 // pred_fallthru
    _
  // Predicated region
  $region6: #{forward.6} parent=0 // pred_check
    _
  $region7: #{forward.6} parent=0 // pred_check_branch
    %11 = sbr.rel (0) target = $region9
  $region8: #{forward.6} parent=0 // pred_region
    _
  $region9: #{forward.6} parent=0 // pred_fallthru
    _
  // Predicated region
  $region10: #{forward.6} parent=0 // pred_check
    _
  $region11: #{forward.6} parent=0 // pred_check_branch
    %13 = sbr.rel (0) target = $region13
  $region12: #{forward.6} parent=0 // pred_region
    _
  $region13: #{forward.6} parent=0 // pred_fallthru
    _
  %s15 = smul.u32 0, 32
  %s16 = scalar_lea.vmem %s0, %s15
  %v17 = vld [vmem:[%s16] sm:$0xff]
  %v18 = vld [vmem:[%s16 + $0x8] sm:$0xff]
  %v19 = vld [vmem:[%s16 + $0x10] sm:$0xff]
  %v20 = vld [vmem:[%s16 + $0x18] sm:$0xff]
  %v21 = vpack.c.bf16 %v18, %v17
  %v22 = vpack.c.bf16 %v20, %v19
  %v23 = vld [vmem:[%s1] sm:$0xf]
  %v24 = vld [vmem:[%s1 + $0x4] sm:$0xf]
  %v25 = vld [vmem:[%s1 + $0x8] sm:$0xf]
  %v26 = vld [vmem:[%s1 + $0xc] sm:$0xf]
  %v27 = vld [vmem:[%s1 + $0x10] sm:$0xf]
  %v28 = vld [vmem:[%s1 + $0x14] sm:$0xf]
  %v29 = vld [vmem:[%s1 + $0x18] sm:$0xf]
  %v30 = vld [vmem:[%s1 + $0x1c] sm:$0xf]
  %s31 = sadd.s32 %s15, 1
  %s32 = scalar_lea.vmem %s0, %s31
  %v33 = vld [vmem:[%s32] sm:$0xff]
  %v34 = vld [vmem:[%s32 + $0x8] sm:$0xff]
  %v35 = vld [vmem:[%s32 + $0x10] sm:$0xff]
  %v36 = vld [vmem:[%s32 + $0x18] sm:$0xff]
  %v37 = vpack.c.bf16 %v34, %v33
  %v38 = vpack.c.bf16 %v36, %v35
  %s39 = scalar_lea.vmem %s1, 32
  %v40 = vld [vmem:[%s39] sm:$0xf]
  %v41 = vld [vmem:[%s39 + $0x4] sm:$0xf]
  %v42 = vld [vmem:[%s39 + $0x8] sm:$0xf]
  %v43 = vld [vmem:[%s39 + $0xc] sm:$0xf]
  %v44 = vld [vmem:[%s39 + $0x10] sm:$0xf]
  %v45 = vld [vmem:[%s39 + $0x14] sm:$0xf]
  %v46 = vld [vmem:[%s39 + $0x18] sm:$0xf]
  %v47 = vld [vmem:[%s39 + $0x1c] sm:$0xf]
  %v56 = vunpack.c.l.b16 %v40
  %v57 = vunpack.c.l.b16 %v41
  %v58 = vunpack.c.l.b16 %v42
  %v59 = vunpack.c.l.b16 %v43
  %v60 = vunpack.c.l.b16 %v44
  %v61 = vunpack.c.l.b16 %v45
  %v62 = vunpack.c.l.b16 %v46
  %v63 = vunpack.c.l.b16 %v47
  %v64 = vpack.c.b16 %v57, %v56
  %v65 = vpack.c.b16 %v59, %v58
  %v66 = vpack.c.b16 %v61, %v60
  %v67 = vpack.c.b16 %v63, %v62
  %vm72 = vcmask 523264
  %v74 = vsel %vm72, %v37, 0
  %v77 = vsel %vm72, %v38, 0
  %79 = vmatprep.subr.bf16.mxu0 0
  %80 = vmatpush1.bf16.msra.mxu0 0
  %81 = vmatprep.subr.bf16.mxu0 0
  %82 = vmatpush1.bf16.msra.mxu0 0
  %83 = vmatprep.subr.bf16.mxu0 0
  %84 = vmatpush1.bf16.msra.mxu0 0
  %85 = vmatprep.subr.bf16.mxu0 0
  %86 = vmatpush1.bf16.msra.mxu0 0
  %87 = vmatprep.subr.bf16.mxu0 0
  %88 = vmatpush1.bf16.msra.mxu0 %v67
  %89 = vmatprep.subr.bf16.mxu0 0
  %90 = vmatpush1.bf16.msra.mxu0 %v66
  %91 = vmatprep.subr.bf16.mxu0 0
  %92 = vmatpush1.bf16.msra.mxu0 %v65
  %93 = vmatprep.subr.bf16.mxu0 0
  %94 = vmatpush1.bf16.msra.mxu0 %v64
  %95 = vmatprep.subr.bf16.mxu0 0
  %96 = vmatpush2.bf16.msra.mxu0 0
  %97 = vmatprep.subr.bf16.mxu0 0
  %98 = vmatpush2.bf16.msra.mxu0 0
  %99 = vmatprep.subr.bf16.mxu0 0
  %100 = vmatpush2.bf16.msra.mxu0 0
  %101 = vmatprep.subr.bf16.mxu0 0
  %102 = vmatpush2.bf16.msra.mxu0 0
  %103 = vmatprep.subr.bf16.mxu0 0
  %104 = vmatpush2.bf16.msra.mxu0 0
  %105 = vmatprep.subr.bf16.mxu0 0
  %106 = vmatpush2.bf16.msra.mxu0 0
  %107 = vmatprep.subr.bf16.mxu0 0
  %108 = vmatpush2.bf16.msra.mxu0 0
  %109 = vmatprep.subr.bf16.mxu0 0
  %110 = vmatpush2.bf16.msra.mxu0 0
  %111 = vmatprep.mubr.bf16.mxu0 0
  %112 = vmatmul.mubr.bf16.gmra.mxu0 %v74
  %v113 = vpop.f32.mrf.mxu0
  %v114 = vadd.f32 0.0, %v113
  %v115 = vpop.f32.mrf.mxu0
  %v116 = vpop.f32.mrf.mxu0
  %v117 = vadd.f32 0.0, %v116
  %v118 = vpop.f32.mrf.mxu0
  %119 = vmatprep.mubr.bf16.mxu0 0
  %120 = vmatmul.mubr.bf16.gmra.mxu0 %v77
  %v121 = vpop.f32.mrf.mxu0
  %v122 = vadd.f32 0.0, %v121
  %v123 = vpop.f32.mrf.mxu0
  %v124 = vpop.f32.mrf.mxu0
  %v125 = vadd.f32 0.0, %v124
  %v126 = vpop.f32.mrf.mxu0
  %127 = vdwg.mxu0
  %v136 = vunpack.c.l.b16 %v23
  %v137 = vunpack.c.l.b16 %v24
  %v138 = vunpack.c.l.b16 %v25
  %v139 = vunpack.c.l.b16 %v26
  %v140 = vunpack.c.l.b16 %v27
  %v141 = vunpack.c.l.b16 %v28
  %v142 = vunpack.c.l.b16 %v29
  %v143 = vunpack.c.l.b16 %v30
  %v144 = vpack.c.b16 %v137, %v136
  %v145 = vpack.c.b16 %v139, %v138
  %v146 = vpack.c.b16 %v141, %v140
  %v147 = vpack.c.b16 %v143, %v142
  %v153 = vsel %vm72, %v21, 0
  %v156 = vsel %vm72, %v22, 0
  %158 = vmatprep.subr.bf16.mxu0 0
  %159 = vmatpush1.bf16.msra.mxu0 0
  %160 = vmatprep.subr.bf16.mxu0 0
  %161 = vmatpush1.bf16.msra.mxu0 0
  %162 = vmatprep.subr.bf16.mxu0 0
  %163 = vmatpush1.bf16.msra.mxu0 0
  %164 = vmatprep.subr.bf16.mxu0 0
  %165 = vmatpush1.bf16.msra.mxu0 0
  %166 = vmatprep.subr.bf16.mxu0 0
  %167 = vmatpush1.bf16.msra.mxu0 %v147
  %168 = vmatprep.subr.bf16.mxu0 0
  %169 = vmatpush1.bf16.msra.mxu0 %v146
  %170 = vmatprep.subr.bf16.mxu0 0
  %171 = vmatpush1.bf16.msra.mxu0 %v145
  %172 = vmatprep.subr.bf16.mxu0 0
  %173 = vmatpush1.bf16.msra.mxu0 %v144
  %174 = vmatprep.subr.bf16.mxu0 0
  %175 = vmatpush2.bf16.msra.mxu0 0
  %176 = vmatprep.subr.bf16.mxu0 0
  %177 = vmatpush2.bf16.msra.mxu0 0
  %178 = vmatprep.subr.bf16.mxu0 0
  %179 = vmatpush2.bf16.msra.mxu0 0
  %180 = vmatprep.subr.bf16.mxu0 0
  %181 = vmatpush2.bf16.msra.mxu0 0
  %182 = vmatprep.subr.bf16.mxu0 0
  %183 = vmatpush2.bf16.msra.mxu0 0
  %184 = vmatprep.subr.bf16.mxu0 0
  %185 = vmatpush2.bf16.msra.mxu0 0
  %186 = vmatprep.subr.bf16.mxu0 0
  %187 = vmatpush2.bf16.msra.mxu0 0
  %188 = vmatprep.subr.bf16.mxu0 0
  %189 = vmatpush2.bf16.msra.mxu0 0
  %190 = vmatprep.mubr.bf16.mxu0 0
  %191 = vmatmul.mubr.bf16.gmra.mxu0 %v153
  %v192 = vpop.f32.mrf.mxu0
  %v193 = vadd.f32 %v114, %v192
  %v194 = vpop.f32.mrf.mxu0
  %v195 = vpop.f32.mrf.mxu0
  %v196 = vadd.f32 %v117, %v195
  %v197 = vpop.f32.mrf.mxu0
  %198 = vmatprep.mubr.bf16.mxu0 0
  %199 = vmatmul.mubr.bf16.gmra.mxu0 %v156
  %v200 = vpop.f32.mrf.mxu0
  %v201 = vadd.f32 %v122, %v200
  %v202 = vpop.f32.mrf.mxu0
  %v203 = vpop.f32.mrf.mxu0
  %v204 = vadd.f32 %v125, %v203
  %v205 = vpop.f32.mrf.mxu0
  %206 = vdwg.mxu0
  %s207 = sadd.s32 %s15, 2
  %s208 = scalar_lea.vmem %s0, %s207
  %v209 = vld [vmem:[%s208] sm:$0xff]
  %v210 = vld [vmem:[%s208 + $0x8] sm:$0xff]
  %v211 = vld [vmem:[%s208 + $0x10] sm:$0xff]
  %v212 = vld [vmem:[%s208 + $0x18] sm:$0xff]
  %v213 = vpack.c.bf16 %v210, %v209
  %v214 = vpack.c.bf16 %v212, %v211
  %s215 = scalar_lea.vmem %s1, 64
  %v216 = vld [vmem:[%s215] sm:$0xf]
  %v217 = vld [vmem:[%s215 + $0x4] sm:$0xf]
  %v218 = vld [vmem:[%s215 + $0x8] sm:$0xf]
  %v219 = vld [vmem:[%s215 + $0xc] sm:$0xf]
  %v220 = vld [vmem:[%s215 + $0x10] sm:$0xf]
  %v221 = vld [vmem:[%s215 + $0x14] sm:$0xf]
  %v222 = vld [vmem:[%s215 + $0x18] sm:$0xf]
  %v223 = vld [vmem:[%s215 + $0x1c] sm:$0xf]
  %v232 = vunpack.c.l.b16 %v216
  %v233 = vunpack.c.l.b16 %v217
  %v234 = vunpack.c.l.b16 %v218
  %v235 = vunpack.c.l.b16 %v219
  %v236 = vunpack.c.l.b16 %v220
  %v237 = vunpack.c.l.b16 %v221
  %v238 = vunpack.c.l.b16 %v222
  %v239 = vunpack.c.l.b16 %v223
  %v240 = vpack.c.b16 %v233, %v232
  %v241 = vpack.c.b16 %v235, %v234
  %v242 = vpack.c.b16 %v237, %v236
  %v243 = vpack.c.b16 %v239, %v238
  %v249 = vsel %vm72, %v213, 0
  %v252 = vsel %vm72, %v214, 0
  %254 = vmatprep.subr.bf16.mxu0 0
  %255 = vmatpush1.bf16.msra.mxu0 0
  %256 = vmatprep.subr.bf16.mxu0 0
  %257 = vmatpush1.bf16.msra.mxu0 0
  %258 = vmatprep.subr.bf16.mxu0 0
  %259 = vmatpush1.bf16.msra.mxu0 0
  %260 = vmatprep.subr.bf16.mxu0 0
  %261 = vmatpush1.bf16.msra.mxu0 0
  %262 = vmatprep.subr.bf16.mxu0 0
  %263 = vmatpush1.bf16.msra.mxu0 %v243
  %264 = vmatprep.subr.bf16.mxu0 0
  %265 = vmatpush1.bf16.msra.mxu0 %v242
  %266 = vmatprep.subr.bf16.mxu0 0
  %267 = vmatpush1.bf16.msra.mxu0 %v241
  %268 = vmatprep.subr.bf16.mxu0 0
  %269 = vmatpush1.bf16.msra.mxu0 %v240
  %270 = vmatprep.subr.bf16.mxu0 0
  %271 = vmatpush2.bf16.msra.mxu0 0
  %272 = vmatprep.subr.bf16.mxu0 0
  %273 = vmatpush2.bf16.msra.mxu0 0
  %274 = vmatprep.subr.bf16.mxu0 0
  %275 = vmatpush2.bf16.msra.mxu0 0
  %276 = vmatprep.subr.bf16.mxu0 0
  %277 = vmatpush2.bf16.msra.mxu0 0
  %278 = vmatprep.subr.bf16.mxu0 0
  %279 = vmatpush2.bf16.msra.mxu0 0
  %280 = vmatprep.subr.bf16.mxu0 0
  %281 = vmatpush2.bf16.msra.mxu0 0
  %282 = vmatprep.subr.bf16.mxu0 0
  %283 = vmatpush2.bf16.msra.mxu0 0
  %284 = vmatprep.subr.bf16.mxu0 0
  %285 = vmatpush2.bf16.msra.mxu0 0
  %286 = vmatprep.mubr.bf16.mxu0 0
  %287 = vmatmul.mubr.bf16.gmra.mxu0 %v249
  %v288 = vpop.f32.mrf.mxu0
  %v289 = vadd.f32 0.0, %v288
  %v290 = vpop.f32.mrf.mxu0
  %v291 = vpop.f32.mrf.mxu0
  %v292 = vadd.f32 0.0, %v291
  %v293 = vpop.f32.mrf.mxu0
  %294 = vmatprep.mubr.bf16.mxu0 0
  %295 = vmatmul.mubr.bf16.gmra.mxu0 %v252
  %v296 = vpop.f32.mrf.mxu0
  %v297 = vadd.f32 0.0, %v296
  %v298 = vpop.f32.mrf.mxu0
  %v299 = vpop.f32.mrf.mxu0
  %v300 = vadd.f32 0.0, %v299
  %v301 = vpop.f32.mrf.mxu0
  %302 = vdwg.mxu0
  %v303 = vadd.f32 %v193, %v289
  %v304 = vadd.f32 %v196, %v292
  %v305 = vadd.f32 %v201, %v297
  %v306 = vadd.f32 %v204, %v300
  %s307 = sadd.s32 %s15, 4
  %s308 = scalar_lea.vmem %s0, %s307
  %v309 = vld [vmem:[%s308] sm:$0xff]
  %v310 = vld [vmem:[%s308 + $0x8] sm:$0xff]
  %v311 = vld [vmem:[%s308 + $0x10] sm:$0xff]
  %v312 = vld [vmem:[%s308 + $0x18] sm:$0xff]
  %v313 = vpack.c.bf16 %v310, %v309
  %v314 = vpack.c.bf16 %v312, %v311
  %s315 = scalar_lea.vmem %s1, 96
  %v316 = vld [vmem:[%s315] sm:$0xf]
  %v317 = vld [vmem:[%s315 + $0x4] sm:$0xf]
  %v318 = vld [vmem:[%s315 + $0x8] sm:$0xf]
  %v319 = vld [vmem:[%s315 + $0xc] sm:$0xf]
  %v320 = vld [vmem:[%s315 + $0x10] sm:$0xf]
  %v321 = vld [vmem:[%s315 + $0x14] sm:$0xf]
  %v322 = vld [vmem:[%s315 + $0x18] sm:$0xf]
  %v323 = vld [vmem:[%s315 + $0x1c] sm:$0xf]
  %v332 = vunpack.c.l.b16 %v316
  %v333 = vunpack.c.l.b16 %v317
  %v334 = vunpack.c.l.b16 %v318
  %v335 = vunpack.c.l.b16 %v319
  %v336 = vunpack.c.l.b16 %v320
  %v337 = vunpack.c.l.b16 %v321
  %v338 = vunpack.c.l.b16 %v322
  %v339 = vunpack.c.l.b16 %v323
  %v340 = vpack.c.b16 %v333, %v332
  %v341 = vpack.c.b16 %v335, %v334
  %v342 = vpack.c.b16 %v337, %v336
  %v343 = vpack.c.b16 %v339, %v338
  %v349 = vsel %vm72, %v313, 0
  %v352 = vsel %vm72, %v314, 0
  %354 = vmatprep.subr.bf16.mxu0 0
  %355 = vmatpush1.bf16.msra.mxu0 0
  %356 = vmatprep.subr.bf16.mxu0 0
  %357 = vmatpush1.bf16.msra.mxu0 0
  %358 = vmatprep.subr.bf16.mxu0 0
  %359 = vmatpush1.bf16.msra.mxu0 0
  %360 = vmatprep.subr.bf16.mxu0 0
  %361 = vmatpush1.bf16.msra.mxu0 0
  %362 = vmatprep.subr.bf16.mxu0 0
  %363 = vmatpush1.bf16.msra.mxu0 %v343
  %364 = vmatprep.subr.bf16.mxu0 0
  %365 = vmatpush1.bf16.msra.mxu0 %v342
  %366 = vmatprep.subr.bf16.mxu0 0
  %367 = vmatpush1.bf16.msra.mxu0 %v341
  %368 = vmatprep.subr.bf16.mxu0 0
  %369 = vmatpush1.bf16.msra.mxu0 %v340
  %370 = vmatprep.subr.bf16.mxu0 0
  %371 = vmatpush2.bf16.msra.mxu0 0
  %372 = vmatprep.subr.bf16.mxu0 0
  %373 = vmatpush2.bf16.msra.mxu0 0
  %374 = vmatprep.subr.bf16.mxu0 0
  %375 = vmatpush2.bf16.msra.mxu0 0
  %376 = vmatprep.subr.bf16.mxu0 0
  %377 = vmatpush2.bf16.msra.mxu0 0
  %378 = vmatprep.subr.bf16.mxu0 0
  %379 = vmatpush2.bf16.msra.mxu0 0
  %380 = vmatprep.subr.bf16.mxu0 0
  %381 = vmatpush2.bf16.msra.mxu0 0
  %382 = vmatprep.subr.bf16.mxu0 0
  %383 = vmatpush2.bf16.msra.mxu0 0
  %384 = vmatprep.subr.bf16.mxu0 0
  %385 = vmatpush2.bf16.msra.mxu0 0
  %386 = vmatprep.mubr.bf16.mxu0 0
  %387 = vmatmul.mubr.bf16.gmra.mxu0 %v349
  %v388 = vpop.f32.mrf.mxu0
  %v389 = vadd.f32 0.0, %v388
  %v390 = vpop.f32.mrf.mxu0
  %v391 = vpop.f32.mrf.mxu0
  %v392 = vadd.f32 0.0, %v391
  %v393 = vpop.f32.mrf.mxu0
  %394 = vmatprep.mubr.bf16.mxu0 0
  %395 = vmatmul.mubr.bf16.gmra.mxu0 %v352
  %v396 = vpop.f32.mrf.mxu0
  %v397 = vadd.f32 0.0, %v396
  %v398 = vpop.f32.mrf.mxu0
  %v399 = vpop.f32.mrf.mxu0
  %v400 = vadd.f32 0.0, %v399
  %v401 = vpop.f32.mrf.mxu0
  %402 = vdwg.mxu0
  %v403 = vadd.f32 %v303, %v389
  %v404 = vadd.f32 %v304, %v392
  %v405 = vadd.f32 %v305, %v397
  %v406 = vadd.f32 %v306, %v400
  %s407 = sadd.s32 %s15, 5
  %s408 = scalar_lea.vmem %s0, %s407
  %v409 = vld [vmem:[%s408] sm:$0xff]
  %v410 = vld [vmem:[%s408 + $0x8] sm:$0xff]
  %v411 = vld [vmem:[%s408 + $0x10] sm:$0xff]
  %v412 = vld [vmem:[%s408 + $0x18] sm:$0xff]
  %v413 = vpack.c.bf16 %v410, %v409
  %v414 = vpack.c.bf16 %v412, %v411
  %s415 = scalar_lea.vmem %s1, 128
  %v416 = vld [vmem:[%s415] sm:$0xf]
  %v417 = vld [vmem:[%s415 + $0x4] sm:$0xf]
  %v418 = vld [vmem:[%s415 + $0x8] sm:$0xf]
  %v419 = vld [vmem:[%s415 + $0xc] sm:$0xf]
  %v420 = vld [vmem:[%s415 + $0x10] sm:$0xf]
  %v421 = vld [vmem:[%s415 + $0x14] sm:$0xf]
  %v422 = vld [vmem:[%s415 + $0x18] sm:$0xf]
  %v423 = vld [vmem:[%s415 + $0x1c] sm:$0xf]
  %v432 = vunpack.c.l.b16 %v416
  %v433 = vunpack.c.l.b16 %v417
  %v434 = vunpack.c.l.b16 %v418
  %v435 = vunpack.c.l.b16 %v419
  %v436 = vunpack.c.l.b16 %v420
  %v437 = vunpack.c.l.b16 %v421
  %v438 = vunpack.c.l.b16 %v422
  %v439 = vunpack.c.l.b16 %v423
  %v440 = vpack.c.b16 %v433, %v432
  %v441 = vpack.c.b16 %v435, %v434
  %v442 = vpack.c.b16 %v437, %v436
  %v443 = vpack.c.b16 %v439, %v438
  %v449 = vsel %vm72, %v413, 0
  %v452 = vsel %vm72, %v414, 0
  %454 = vmatprep.subr.bf16.mxu0 0
  %455 = vmatpush1.bf16.msra.mxu0 0
  %456 = vmatprep.subr.bf16.mxu0 0
  %457 = vmatpush1.bf16.msra.mxu0 0
  %458 = vmatprep.subr.bf16.mxu0 0
  %459 = vmatpush1.bf16.msra.mxu0 0
  %460 = vmatprep.subr.bf16.mxu0 0
  %461 = vmatpush1.bf16.msra.mxu0 0
  %462 = vmatprep.subr.bf16.mxu0 0
  %463 = vmatpush1.bf16.msra.mxu0 %v443
  %464 = vmatprep.subr.bf16.mxu0 0
  %465 = vmatpush1.bf16.msra.mxu0 %v442
  %466 = vmatprep.subr.bf16.mxu0 0
  %467 = vmatpush1.bf16.msra.mxu0 %v441
  %468 = vmatprep.subr.bf16.mxu0 0
  %469 = vmatpush1.bf16.msra.mxu0 %v440
  %470 = vmatprep.subr.bf16.mxu0 0
  %471 = vmatpush2.bf16.msra.mxu0 0
  %472 = vmatprep.subr.bf16.mxu0 0
  %473 = vmatpush2.bf16.msra.mxu0 0
  %474 = vmatprep.subr.bf16.mxu0 0
  %475 = vmatpush2.bf16.msra.mxu0 0
  %476 = vmatprep.subr.bf16.mxu0 0
  %477 = vmatpush2.bf16.msra.mxu0 0
  %478 = vmatprep.subr.bf16.mxu0 0
  %479 = vmatpush2.bf16.msra.mxu0 0
  %480 = vmatprep.subr.bf16.mxu0 0
  %481 = vmatpush2.bf16.msra.mxu0 0
  %482 = vmatprep.subr.bf16.mxu0 0
  %483 = vmatpush2.bf16.msra.mxu0 0
  %484 = vmatprep.subr.bf16.mxu0 0
  %485 = vmatpush2.bf16.msra.mxu0 0
  %486 = vmatprep.mubr.bf16.mxu0 0
  %487 = vmatmul.mubr.bf16.gmra.mxu0 %v449
  %v488 = vpop.f32.mrf.mxu0
  %v489 = vadd.f32 0.0, %v488
  %v490 = vpop.f32.mrf.mxu0
  %v491 = vpop.f32.mrf.mxu0
  %v492 = vadd.f32 0.0, %v491
  %v493 = vpop.f32.mrf.mxu0
  %494 = vmatprep.mubr.bf16.mxu0 0
  %495 = vmatmul.mubr.bf16.gmra.mxu0 %v452
  %v496 = vpop.f32.mrf.mxu0
  %v497 = vadd.f32 0.0, %v496
  %v498 = vpop.f32.mrf.mxu0
  %v499 = vpop.f32.mrf.mxu0
  %v500 = vadd.f32 0.0, %v499
  %v501 = vpop.f32.mrf.mxu0
  %502 = vdwg.mxu0
  %v503 = vadd.f32 %v403, %v489
  %v504 = vadd.f32 %v404, %v492
  %v505 = vadd.f32 %v405, %v497
  %v506 = vadd.f32 %v406, %v500
  %s507 = sadd.s32 %s15, 6
  %s508 = scalar_lea.vmem %s0, %s507
  %v509 = vld [vmem:[%s508] sm:$0xff]
  %v510 = vld [vmem:[%s508 + $0x8] sm:$0xff]
  %v511 = vld [vmem:[%s508 + $0x10] sm:$0xff]
  %v512 = vld [vmem:[%s508 + $0x18] sm:$0xff]
  %v513 = vpack.c.bf16 %v510, %v509
  %v514 = vpack.c.bf16 %v512, %v511
  %s515 = scalar_lea.vmem %s1, 160
  %v516 = vld [vmem:[%s515] sm:$0xf]
  %v517 = vld [vmem:[%s515 + $0x4] sm:$0xf]
  %v518 = vld [vmem:[%s515 + $0x8] sm:$0xf]
  %v519 = vld [vmem:[%s515 + $0xc] sm:$0xf]
  %v520 = vld [vmem:[%s515 + $0x10] sm:$0xf]
  %v521 = vld [vmem:[%s515 + $0x14] sm:$0xf]
  %v522 = vld [vmem:[%s515 + $0x18] sm:$0xf]
  %v523 = vld [vmem:[%s515 + $0x1c] sm:$0xf]
  %v532 = vunpack.c.l.b16 %v516
  %v533 = vunpack.c.l.b16 %v517
  %v534 = vunpack.c.l.b16 %v518
  %v535 = vunpack.c.l.b16 %v519
  %v536 = vunpack.c.l.b16 %v520
  %v537 = vunpack.c.l.b16 %v521
  %v538 = vunpack.c.l.b16 %v522
  %v539 = vunpack.c.l.b16 %v523
  %v540 = vpack.c.b16 %v533, %v532
  %v541 = vpack.c.b16 %v535, %v534
  %v542 = vpack.c.b16 %v537, %v536
  %v543 = vpack.c.b16 %v539, %v538
  %v549 = vsel %vm72, %v513, 0
  %v552 = vsel %vm72, %v514, 0
  %554 = vmatprep.subr.bf16.mxu0 0
  %555 = vmatpush1.bf16.msra.mxu0 0
  %556 = vmatprep.subr.bf16.mxu0 0
  %557 = vmatpush1.bf16.msra.mxu0 0
  %558 = vmatprep.subr.bf16.mxu0 0
  %559 = vmatpush1.bf16.msra.mxu0 0
  %560 = vmatprep.subr.bf16.mxu0 0
  %561 = vmatpush1.bf16.msra.mxu0 0
  %562 = vmatprep.subr.bf16.mxu0 0
  %563 = vmatpush1.bf16.msra.mxu0 %v543
  %564 = vmatprep.subr.bf16.mxu0 0
  %565 = vmatpush1.bf16.msra.mxu0 %v542
  %566 = vmatprep.subr.bf16.mxu0 0
  %567 = vmatpush1.bf16.msra.mxu0 %v541
  %568 = vmatprep.subr.bf16.mxu0 0
  %569 = vmatpush1.bf16.msra.mxu0 %v540
  %570 = vmatprep.subr.bf16.mxu0 0
  %571 = vmatpush2.bf16.msra.mxu0 0
  %572 = vmatprep.subr.bf16.mxu0 0
  %573 = vmatpush2.bf16.msra.mxu0 0
  %574 = vmatprep.subr.bf16.mxu0 0
  %575 = vmatpush2.bf16.msra.mxu0 0
  %576 = vmatprep.subr.bf16.mxu0 0
  %577 = vmatpush2.bf16.msra.mxu0 0
  %578 = vmatprep.subr.bf16.mxu0 0
  %579 = vmatpush2.bf16.msra.mxu0 0
  %580 = vmatprep.subr.bf16.mxu0 0
  %581 = vmatpush2.bf16.msra.mxu0 0
  %582 = vmatprep.subr.bf16.mxu0 0
  %583 = vmatpush2.bf16.msra.mxu0 0
  %584 = vmatprep.subr.bf16.mxu0 0
  %585 = vmatpush2.bf16.msra.mxu0 0
  %586 = vmatprep.mubr.bf16.mxu0 0
  %587 = vmatmul.mubr.bf16.gmra.mxu0 %v549
  %v588 = vpop.f32.mrf.mxu0
  %v589 = vadd.f32 0.0, %v588
  %v590 = vpop.f32.mrf.mxu0
  %v591 = vpop.f32.mrf.mxu0
  %v592 = vadd.f32 0.0, %v591
  %v593 = vpop.f32.mrf.mxu0
  %594 = vmatprep.mubr.bf16.mxu0 0
  %595 = vmatmul.mubr.bf16.gmra.mxu0 %v552
  %v596 = vpop.f32.mrf.mxu0
  %v597 = vadd.f32 0.0, %v596
  %v598 = vpop.f32.mrf.mxu0
  %v599 = vpop.f32.mrf.mxu0
  %v600 = vadd.f32 0.0, %v599
  %v601 = vpop.f32.mrf.mxu0
  %602 = vdwg.mxu0
  %v603 = vadd.f32 %v503, %v589
  %v604 = vadd.f32 %v504, %v592
  %v605 = vadd.f32 %v505, %v597
  %v606 = vadd.f32 %v506, %v600
  %s607 = sadd.s32 %s15, 8
  %s608 = scalar_lea.vmem %s0, %s607
  %v609 = vld [vmem:[%s608] sm:$0xff]
  %v610 = vld [vmem:[%s608 + $0x8] sm:$0xff]
  %v611 = vld [vmem:[%s608 + $0x10] sm:$0xff]
  %v612 = vld [vmem:[%s608 + $0x18] sm:$0xff]
  %v613 = vpack.c.bf16 %v610, %v609
  %v614 = vpack.c.bf16 %v612, %v611
  %s615 = scalar_lea.vmem %s1, 192
  %v616 = vld [vmem:[%s615] sm:$0xf]
  %v617 = vld [vmem:[%s615 + $0x4] sm:$0xf]
  %v618 = vld [vmem:[%s615 + $0x8] sm:$0xf]
  %v619 = vld [vmem:[%s615 + $0xc] sm:$0xf]
  %v620 = vld [vmem:[%s615 + $0x10] sm:$0xf]
  %v621 = vld [vmem:[%s615 + $0x14] sm:$0xf]
  %v622 = vld [vmem:[%s615 + $0x18] sm:$0xf]
  %v623 = vld [vmem:[%s615 + $0x1c] sm:$0xf]
  %v632 = vunpack.c.l.b16 %v616
  %v633 = vunpack.c.l.b16 %v617
  %v634 = vunpack.c.l.b16 %v618
  %v635 = vunpack.c.l.b16 %v619
  %v636 = vunpack.c.l.b16 %v620
  %v637 = vunpack.c.l.b16 %v621
  %v638 = vunpack.c.l.b16 %v622
  %v639 = vunpack.c.l.b16 %v623
  %v640 = vpack.c.b16 %v633, %v632
  %v641 = vpack.c.b16 %v635, %v634
  %v642 = vpack.c.b16 %v637, %v636
  %v643 = vpack.c.b16 %v639, %v638
  %v649 = vsel %vm72, %v613, 0
  %v652 = vsel %vm72, %v614, 0
  %654 = vmatprep.subr.bf16.mxu0 0
  %655 = vmatpush1.bf16.msra.mxu0 0
  %656 = vmatprep.subr.bf16.mxu0 0
  %657 = vmatpush1.bf16.msra.mxu0 0
  %658 = vmatprep.subr.bf16.mxu0 0
  %659 = vmatpush1.bf16.msra.mxu0 0
  %660 = vmatprep.subr.bf16.mxu0 0
  %661 = vmatpush1.bf16.msra.mxu0 0
  %662 = vmatprep.subr.bf16.mxu0 0
  %663 = vmatpush1.bf16.msra.mxu0 %v643
  %664 = vmatprep.subr.bf16.mxu0 0
  %665 = vmatpush1.bf16.msra.mxu0 %v642
  %666 = vmatprep.subr.bf16.mxu0 0
  %667 = vmatpush1.bf16.msra.mxu0 %v641
  %668 = vmatprep.subr.bf16.mxu0 0
  %669 = vmatpush1.bf16.msra.mxu0 %v640
  %670 = vmatprep.subr.bf16.mxu0 0
  %671 = vmatpush2.bf16.msra.mxu0 0
  %672 = vmatprep.subr.bf16.mxu0 0
  %673 = vmatpush2.bf16.msra.mxu0 0
  %674 = vmatprep.subr.bf16.mxu0 0
  %675 = vmatpush2.bf16.msra.mxu0 0
  %676 = vmatprep.subr.bf16.mxu0 0
  %677 = vmatpush2.bf16.msra.mxu0 0
  %678 = vmatprep.subr.bf16.mxu0 0
  %679 = vmatpush2.bf16.msra.mxu0 0
  %680 = vmatprep.subr.bf16.mxu0 0
  %681 = vmatpush2.bf16.msra.mxu0 0
  %682 = vmatprep.subr.bf16.mxu0 0
  %683 = vmatpush2.bf16.msra.mxu0 0
  %684 = vmatprep.subr.bf16.mxu0 0
  %685 = vmatpush2.bf16.msra.mxu0 0
  %686 = vmatprep.mubr.bf16.mxu0 0
  %687 = vmatmul.mubr.bf16.gmra.mxu0 %v649
  %v688 = vpop.f32.mrf.mxu0
  %v689 = vadd.f32 0.0, %v688
  %v690 = vpop.f32.mrf.mxu0
  %v691 = vpop.f32.mrf.mxu0
  %v692 = vadd.f32 0.0, %v691
  %v693 = vpop.f32.mrf.mxu0
  %694 = vmatprep.mubr.bf16.mxu0 0
  %695 = vmatmul.mubr.bf16.gmra.mxu0 %v652
  %v696 = vpop.f32.mrf.mxu0
  %v697 = vadd.f32 0.0, %v696
  %v698 = vpop.f32.mrf.mxu0
  %v699 = vpop.f32.mrf.mxu0
  %v700 = vadd.f32 0.0, %v699
  %v701 = vpop.f32.mrf.mxu0
  %702 = vdwg.mxu0
  %v703 = vadd.f32 %v603, %v689
  %v704 = vadd.f32 %v604, %v692
  %v705 = vadd.f32 %v605, %v697
  %v706 = vadd.f32 %v606, %v700
  %s707 = sadd.s32 %s15, 9
  %s708 = scalar_lea.vmem %s0, %s707
  %v709 = vld [vmem:[%s708] sm:$0xff]
  %v710 = vld [vmem:[%s708 + $0x8] sm:$0xff]
  %v711 = vld [vmem:[%s708 + $0x10] sm:$0xff]
  %v712 = vld [vmem:[%s708 + $0x18] sm:$0xff]
  %v713 = vpack.c.bf16 %v710, %v709
  %v714 = vpack.c.bf16 %v712, %v711
  %s715 = scalar_lea.vmem %s1, 224
  %v716 = vld [vmem:[%s715] sm:$0xf]
  %v717 = vld [vmem:[%s715 + $0x4] sm:$0xf]
  %v718 = vld [vmem:[%s715 + $0x8] sm:$0xf]
  %v719 = vld [vmem:[%s715 + $0xc] sm:$0xf]
  %v720 = vld [vmem:[%s715 + $0x10] sm:$0xf]
  %v721 = vld [vmem:[%s715 + $0x14] sm:$0xf]
  %v722 = vld [vmem:[%s715 + $0x18] sm:$0xf]
  %v723 = vld [vmem:[%s715 + $0x1c] sm:$0xf]
  %v732 = vunpack.c.l.b16 %v716
  %v733 = vunpack.c.l.b16 %v717
  %v734 = vunpack.c.l.b16 %v718
  %v735 = vunpack.c.l.b16 %v719
  %v736 = vunpack.c.l.b16 %v720
  %v737 = vunpack.c.l.b16 %v721
  %v738 = vunpack.c.l.b16 %v722
  %v739 = vunpack.c.l.b16 %v723
  %v740 = vpack.c.b16 %v733, %v732
  %v741 = vpack.c.b16 %v735, %v734
  %v742 = vpack.c.b16 %v737, %v736
  %v743 = vpack.c.b16 %v739, %v738
  %v749 = vsel %vm72, %v713, 0
  %v752 = vsel %vm72, %v714, 0
  %754 = vmatprep.subr.bf16.mxu0 0
  %755 = vmatpush1.bf16.msra.mxu0 0
  %756 = vmatprep.subr.bf16.mxu0 0
  %757 = vmatpush1.bf16.msra.mxu0 0
  %758 = vmatprep.subr.bf16.mxu0 0
  %759 = vmatpush1.bf16.msra.mxu0 0
  %760 = vmatprep.subr.bf16.mxu0 0
  %761 = vmatpush1.bf16.msra.mxu0 0
  %762 = vmatprep.subr.bf16.mxu0 0
  %763 = vmatpush1.bf16.msra.mxu0 %v743
  %764 = vmatprep.subr.bf16.mxu0 0
  %765 = vmatpush1.bf16.msra.mxu0 %v742
  %766 = vmatprep.subr.bf16.mxu0 0
  %767 = vmatpush1.bf16.msra.mxu0 %v741
  %768 = vmatprep.subr.bf16.mxu0 0
  %769 = vmatpush1.bf16.msra.mxu0 %v740
  %770 = vmatprep.subr.bf16.mxu0 0
  %771 = vmatpush2.bf16.msra.mxu0 0
  %772 = vmatprep.subr.bf16.mxu0 0
  %773 = vmatpush2.bf16.msra.mxu0 0
  %774 = vmatprep.subr.bf16.mxu0 0
  %775 = vmatpush2.bf16.msra.mxu0 0
  %776 = vmatprep.subr.bf16.mxu0 0
  %777 = vmatpush2.bf16.msra.mxu0 0
  %778 = vmatprep.subr.bf16.mxu0 0
  %779 = vmatpush2.bf16.msra.mxu0 0
  %780 = vmatprep.subr.bf16.mxu0 0
  %781 = vmatpush2.bf16.msra.mxu0 0
  %782 = vmatprep.subr.bf16.mxu0 0
  %783 = vmatpush2.bf16.msra.mxu0 0
  %784 = vmatprep.subr.bf16.mxu0 0
  %785 = vmatpush2.bf16.msra.mxu0 0
  %786 = vmatprep.mubr.bf16.mxu0 0
  %787 = vmatmul.mubr.bf16.gmra.mxu0 %v749
  %v788 = vpop.f32.mrf.mxu0
  %v789 = vadd.f32 0.0, %v788
  %v790 = vpop.f32.mrf.mxu0
  %v791 = vpop.f32.mrf.mxu0
  %v792 = vadd.f32 0.0, %v791
  %v793 = vpop.f32.mrf.mxu0
  %794 = vmatprep.mubr.bf16.mxu0 0
  %795 = vmatmul.mubr.bf16.gmra.mxu0 %v752
  %v796 = vpop.f32.mrf.mxu0
  %v797 = vadd.f32 0.0, %v796
  %v798 = vpop.f32.mrf.mxu0
  %v799 = vpop.f32.mrf.mxu0
  %v800 = vadd.f32 0.0, %v799
  %v801 = vpop.f32.mrf.mxu0
  %802 = vdwg.mxu0
  %v803 = vadd.f32 %v703, %v789
  %v804 = vadd.f32 %v704, %v792
  %v805 = vadd.f32 %v705, %v797
  %v806 = vadd.f32 %v706, %v800
  %s807 = sadd.s32 %s15, 10
  %s808 = scalar_lea.vmem %s0, %s807
  %v809 = vld [vmem:[%s808] sm:$0xff]
  %v810 = vld [vmem:[%s808 + $0x8] sm:$0xff]
  %v811 = vld [vmem:[%s808 + $0x10] sm:$0xff]
  %v812 = vld [vmem:[%s808 + $0x18] sm:$0xff]
  %v813 = vpack.c.bf16 %v810, %v809
  %v814 = vpack.c.bf16 %v812, %v811
  %s815 = scalar_lea.vmem %s1, 256
  %v816 = vld [vmem:[%s815] sm:$0xf]
  %v817 = vld [vmem:[%s815 + $0x4] sm:$0xf]
  %v818 = vld [vmem:[%s815 + $0x8] sm:$0xf]
  %v819 = vld [vmem:[%s815 + $0xc] sm:$0xf]
  %v820 = vld [vmem:[%s815 + $0x10] sm:$0xf]
  %v821 = vld [vmem:[%s815 + $0x14] sm:$0xf]
  %v822 = vld [vmem:[%s815 + $0x18] sm:$0xf]
  %v823 = vld [vmem:[%s815 + $0x1c] sm:$0xf]
  %v832 = vunpack.c.l.b16 %v816
  %v833 = vunpack.c.l.b16 %v817
  %v834 = vunpack.c.l.b16 %v818
  %v835 = vunpack.c.l.b16 %v819
  %v836 = vunpack.c.l.b16 %v820
  %v837 = vunpack.c.l.b16 %v821
  %v838 = vunpack.c.l.b16 %v822
  %v839 = vunpack.c.l.b16 %v823
  %v840 = vpack.c.b16 %v833, %v832
  %v841 = vpack.c.b16 %v835, %v834
  %v842 = vpack.c.b16 %v837, %v836
  %v843 = vpack.c.b16 %v839, %v838
  %v849 = vsel %vm72, %v813, 0
  %v852 = vsel %vm72, %v814, 0
  %854 = vmatprep.subr.bf16.mxu0 0
  %855 = vmatpush1.bf16.msra.mxu0 0
  %856 = vmatprep.subr.bf16.mxu0 0
  %857 = vmatpush1.bf16.msra.mxu0 0
  %858 = vmatprep.subr.bf16.mxu0 0
  %859 = vmatpush1.bf16.msra.mxu0 0
  %860 = vmatprep.subr.bf16.mxu0 0
  %861 = vmatpush1.bf16.msra.mxu0 0
  %862 = vmatprep.subr.bf16.mxu0 0
  %863 = vmatpush1.bf16.msra.mxu0 %v843
  %864 = vmatprep.subr.bf16.mxu0 0
  %865 = vmatpush1.bf16.msra.mxu0 %v842
  %866 = vmatprep.subr.bf16.mxu0 0
  %867 = vmatpush1.bf16.msra.mxu0 %v841
  %868 = vmatprep.subr.bf16.mxu0 0
  %869 = vmatpush1.bf16.msra.mxu0 %v840
  %870 = vmatprep.subr.bf16.mxu0 0
  %871 = vmatpush2.bf16.msra.mxu0 0
  %872 = vmatprep.subr.bf16.mxu0 0
  %873 = vmatpush2.bf16.msra.mxu0 0
  %874 = vmatprep.subr.bf16.mxu0 0
  %875 = vmatpush2.bf16.msra.mxu0 0
  %876 = vmatprep.subr.bf16.mxu0 0
  %877 = vmatpush2.bf16.msra.mxu0 0
  %878 = vmatprep.subr.bf16.mxu0 0
  %879 = vmatpush2.bf16.msra.mxu0 0
  %880 = vmatprep.subr.bf16.mxu0 0
  %881 = vmatpush2.bf16.msra.mxu0 0
  %882 = vmatprep.subr.bf16.mxu0 0
  %883 = vmatpush2.bf16.msra.mxu0 0
  %884 = vmatprep.subr.bf16.mxu0 0
  %885 = vmatpush2.bf16.msra.mxu0 0
  %886 = vmatprep.mubr.bf16.mxu0 0
  %887 = vmatmul.mubr.bf16.gmra.mxu0 %v849
  %v888 = vpop.f32.mrf.mxu0
  %v889 = vadd.f32 0.0, %v888
  %v890 = vpop.f32.mrf.mxu0
  %v891 = vpop.f32.mrf.mxu0
  %v892 = vadd.f32 0.0, %v891
  %v893 = vpop.f32.mrf.mxu0
  %894 = vmatprep.mubr.bf16.mxu0 0
  %895 = vmatmul.mubr.bf16.gmra.mxu0 %v852
  %v896 = vpop.f32.mrf.mxu0
  %v897 = vadd.f32 0.0, %v896
  %v898 = vpop.f32.mrf.mxu0
  %v899 = vpop.f32.mrf.mxu0
  %v900 = vadd.f32 0.0, %v899
  %v901 = vpop.f32.mrf.mxu0
  %902 = vdwg.mxu0
  %v903 = vadd.f32 %v803, %v889
  %v904 = vadd.f32 %v804, %v892
  %v905 = vadd.f32 %v805, %v897
  %v906 = vadd.f32 %v806, %v900
  %v907 = vld [vmem:[%s2] sm:$0x1]
  %v909 = vlaneseq
  %v910 = vshrl.u32 %v909, 7
  %v911 = vsub.s32 0, %v910
  %v912 = vrot.slane %v907, %v911
  %v914 = vadd.f32 %v903, %v912
  %v915 = vadd.f32 %v904, %v912
  %v916 = vadd.f32 %v905, %v912
  %v917 = vadd.f32 %v906, %v912
  %v918 = vmax.f32 %v914, 0.0
  %v919 = vmax.f32 %v915, 0.0
  %v920 = vmax.f32 %v916, 0.0
  %v921 = vmax.f32 %v917, 0.0
  %922 = vst [vmem:[%s3] sm:$0xff] %v918
  %923 = vst [vmem:[%s3 + $0x8] sm:$0xff] %v919
  %924 = vst [vmem:[%s3 + $0x10] sm:$0xff] %v920
  %925 = vst [vmem:[%s3 + $0x18] sm:$0xff] %v921
  // Predicated region
  $region14: #{forward.6} parent=0 // pred_check
    _
  $region15: #{forward.6} parent=0 // pred_check_branch
    %927 = sbr.rel (0) target = $region17
  $region16: #{forward.6} parent=0 // pred_region
    _
  $region17: #{forward.6} parent=0 // pred_fallthru
    _
  // Predicated region
  $region18: #{forward.6} parent=0 // pred_check
    _
  $region19: #{forward.6} parent=0 // pred_check_branch
    %929 = sbr.rel (0) target = $region21
  $region20: #{forward.6} parent=0 // pred_region
    _
  $region21: #{forward.6} parent=0 // pred_fallthru
    _

// kernel: forward.7
$region0: #{forward.7}
  #allocation0 [shape = 'u32[]', space=smem, size = 0x4, offset = 0x4, fixed_abs, tag = 'smem constant byte address 0x4 - core index']
  #allocation1 [shape = 'u32[144,128]{1,0:T(1,128)}', space=vmem, size = 0x12000, scoped, tag = 'internal scratch']
  %s0 = inlined_call_operand.vmem [shape: f32[16,256], index: 0, kind: input, shape index: {}]
  %s1 = inlined_call_operand.vmem [shape: bf16[256,512], index: 1, kind: input, shape index: {}]
  %s2 = inlined_call_operand.vmem [shape: f32[1,512], index: 2, kind: input, shape index: {}]
  %s3 = inlined_call_operand.vmem [shape: bf16[512,128], index: 3, kind: input, shape index: {}]
  %s4 = inlined_call_operand.vmem [shape: f32[1,128], index: 4, kind: input, shape index: {}]
  %s5 = inlined_call_operand.vmem [shape: f32[16,128], index: 5, kind: output, shape index: {}]
  %s6 = sld [smem:[#allocation0]]
  $region30: #{forward.7} parent=0
    _
  %s8 = ssub.s32 1, %s6
  %s9 = scalar_select 0, %s8, %s6
  // Predicated region
  $region2: #{forward.7} parent=0 // pred_check
    _
  $region3: #{forward.7} parent=0 // pred_check_branch
    %11 = sbr.rel (0) target = $region5
  $region4: #{forward.7} parent=0 // pred_region
    _
  $region5: #{forward.7} parent=0 // pred_fallthru
    _
  // Predicated region
  $region6: #{forward.7} parent=0 // pred_check
    _
  $region7: #{forward.7} parent=0 // pred_check_branch
    %13 = sbr.rel (0) target = $region9
  $region8: #{forward.7} parent=0 // pred_region
    _
  $region9: #{forward.7} parent=0 // pred_fallthru
    _
  // Predicated region
  $region10: #{forward.7} parent=0 // pred_check
    _
  $region11: #{forward.7} parent=0 // pred_check_branch
    %15 = sbr.rel (0) target = $region13
  $region12: #{forward.7} parent=0 // pred_region
    _
  $region13: #{forward.7} parent=0 // pred_fallthru
    _
  // Predicated region
  $region14: #{forward.7} parent=0 // pred_check
    _
  $region15: #{forward.7} parent=0 // pred_check_branch
    %17 = sbr.rel (0) target = $region17
  $region16: #{forward.7} parent=0 // pred_region
    _
  $region17: #{forward.7} parent=0 // pred_fallthru
    _
  // Predicated region
  $region18: #{forward.7} parent=0 // pred_check
    _
  $region19: #{forward.7} parent=0 // pred_check_branch
    %19 = sbr.rel (0) target = $region21
  $region20: #{forward.7} parent=0 // pred_region
    _
  $region21: #{forward.7} parent=0 // pred_fallthru
    _
  %v21 = vld [vmem:[%s0] sm:$0xff]
  %v22 = vld [vmem:[%s0 + $0x8] sm:$0xff]
  %v23 = vld [vmem:[%s0 + $0x10] sm:$0xff]
  %v24 = vld [vmem:[%s0 + $0x18] sm:$0xff]
  %v25 = vpack.c.bf16 %v23, %v21
  %v26 = vpack.c.bf16 %v24, %v22
  %v27 = vld [vmem:[%s1] sm:$0xff]
  %v28 = vld [vmem:[%s1 + $0x8] sm:$0xff]
  %v29 = vld [vmem:[%s1 + $0x10] sm:$0xff]
  %v30 = vld [vmem:[%s1 + $0x18] sm:$0xff]
  %v31 = vld [vmem:[%s1 + $0x20] sm:$0xff]
  %v32 = vld [vmem:[%s1 + $0x28] sm:$0xff]
  %v33 = vld [vmem:[%s1 + $0x30] sm:$0xff]
  %v34 = vld [vmem:[%s1 + $0x38] sm:$0xff]
  %v35 = vld [vmem:[%s1 + $0x40] sm:$0xff]
  %v36 = vld [vmem:[%s1 + $0x48] sm:$0xff]
  %v37 = vld [vmem:[%s1 + $0x50] sm:$0xff]
  %v38 = vld [vmem:[%s1 + $0x58] sm:$0xff]
  %v39 = vld [vmem:[%s1 + $0x60] sm:$0xff]
  %v40 = vld [vmem:[%s1 + $0x68] sm:$0xff]
  %v41 = vld [vmem:[%s1 + $0x70] sm:$0xff]
  %v42 = vld [vmem:[%s1 + $0x78] sm:$0xff]
  %v43 = vld [vmem:[%s1 + $0x80] sm:$0xff]
  %v44 = vld [vmem:[%s1 + $0x88] sm:$0xff]
  %v45 = vld [vmem:[%s1 + $0x90] sm:$0xff]
  %v46 = vld [vmem:[%s1 + $0x98] sm:$0xff]
  %v47 = vld [vmem:[%s1 + $0xa0] sm:$0xff]
  %v48 = vld [vmem:[%s1 + $0xa8] sm:$0xff]
  %v49 = vld [vmem:[%s1 + $0xb0] sm:$0xff]
  %v50 = vld [vmem:[%s1 + $0xb8] sm:$0xff]
  %v51 = vld [vmem:[%s1 + $0xc0] sm:$0xff]
  %v52 = vld [vmem:[%s1 + $0xc8] sm:$0xff]
  %v53 = vld [vmem:[%s1 + $0xd0] sm:$0xff]
  %v54 = vld [vmem:[%s1 + $0xd8] sm:$0xff]
  %v55 = vld [vmem:[%s1 + $0xe0] sm:$0xff]
  %v56 = vld [vmem:[%s1 + $0xe8] sm:$0xff]
  %v57 = vld [vmem:[%s1 + $0xf0] sm:$0xff]
  %v58 = vld [vmem:[%s1 + $0xf8] sm:$0xff]
  %v59 = vld [vmem:[%s1 + $0x100] sm:$0xff]
  %v60 = vld [vmem:[%s1 + $0x108] sm:$0xff]
  %v61 = vld [vmem:[%s1 + $0x110] sm:$0xff]
  %v62 = vld [vmem:[%s1 + $0x118] sm:$0xff]
  %v63 = vld [vmem:[%s1 + $0x120] sm:$0xff]
  %v64 = vld [vmem:[%s1 + $0x128] sm:$0xff]
  %v65 = vld [vmem:[%s1 + $0x130] sm:$0xff]
  %v66 = vld [vmem:[%s1 + $0x138] sm:$0xff]
  %v67 = vld [vmem:[%s1 + $0x140] sm:$0xff]
  %v68 = vld [vmem:[%s1 + $0x148] sm:$0xff]
  %v69 = vld [vmem:[%s1 + $0x150] sm:$0xff]
  %v70 = vld [vmem:[%s1 + $0x158] sm:$0xff]
  %v71 = vld [vmem:[%s1 + $0x160] sm:$0xff]
  %v72 = vld [vmem:[%s1 + $0x168] sm:$0xff]
  %v73 = vld [vmem:[%s1 + $0x170] sm:$0xff]
  %v74 = vld [vmem:[%s1 + $0x178] sm:$0xff]
  %v75 = vld [vmem:[%s1 + $0x180] sm:$0xff]
  %v76 = vld [vmem:[%s1 + $0x188] sm:$0xff]
  %v77 = vld [vmem:[%s1 + $0x190] sm:$0xff]
  %v78 = vld [vmem:[%s1 + $0x198] sm:$0xff]
  %v79 = vld [vmem:[%s1 + $0x1a0] sm:$0xff]
  %v80 = vld [vmem:[%s1 + $0x1a8] sm:$0xff]
  %v81 = vld [vmem:[%s1 + $0x1b0] sm:$0xff]
  %v82 = vld [vmem:[%s1 + $0x1b8] sm:$0xff]
  %v83 = vld [vmem:[%s1 + $0x1c0] sm:$0xff]
  %v84 = vld [vmem:[%s1 + $0x1c8] sm:$0xff]
  %v85 = vld [vmem:[%s1 + $0x1d0] sm:$0xff]
  %v86 = vld [vmem:[%s1 + $0x1d8] sm:$0xff]
  %v87 = vld [vmem:[%s1 + $0x1e0] sm:$0xff]
  %v88 = vld [vmem:[%s1 + $0x1e8] sm:$0xff]
  %v89 = vld [vmem:[%s1 + $0x1f0] sm:$0xff]
  %v90 = vld [vmem:[%s1 + $0x1f8] sm:$0xff]
  %v91 = vld [vmem:[%s2] sm:$0xf]
  %v93 = vlaneseq
  %v94 = vshrl.u32 %v93, 7
  %v95 = vsub.s32 0, %v94
  %v96 = vrot.slane %v91, %v95
  %v97 = vlaneseq
  %v98 = vshrl.u32 %v97, 7
  %v99 = vsub.s32 1, %v98
  %v100 = vrot.slane %v91, %v99
  %v101 = vlaneseq
  %v102 = vshrl.u32 %v101, 7
  %v103 = vsub.s32 2, %v102
  %v104 = vrot.slane %v91, %v103
  %v105 = vlaneseq
  %v106 = vshrl.u32 %v105, 7
  %v107 = vsub.s32 3, %v106
  %v108 = vrot.slane %v91, %v107
  %v177 = vunpack.c.l.b16 %v27
  %v178 = vunpack.c.h.b16 %v27
  %v179 = vunpack.c.l.b16 %v28
  %v180 = vunpack.c.h.b16 %v28
  %v181 = vunpack.c.l.b16 %v29
  %v182 = vunpack.c.h.b16 %v29
  %v183 = vunpack.c.l.b16 %v30
  %v184 = vunpack.c.h.b16 %v30
  %v185 = vunpack.c.l.b16 %v31
  %v186 = vunpack.c.h.b16 %v31
  %v187 = vunpack.c.l.b16 %v32
  %v188 = vunpack.c.h.b16 %v32
  %v189 = vunpack.c.l.b16 %v33
  %v190 = vunpack.c.h.b16 %v33
  %v191 = vunpack.c.l.b16 %v34
  %v192 = vunpack.c.h.b16 %v34
  %v193 = vunpack.c.l.b16 %v35
  %v194 = vunpack.c.h.b16 %v35
  %v195 = vunpack.c.l.b16 %v36
  %v196 = vunpack.c.h.b16 %v36
  %v197 = vunpack.c.l.b16 %v37
  %v198 = vunpack.c.h.b16 %v37
  %v199 = vunpack.c.l.b16 %v38
  %v200 = vunpack.c.h.b16 %v38
  %v201 = vunpack.c.l.b16 %v39
  %v202 = vunpack.c.h.b16 %v39
  %v203 = vunpack.c.l.b16 %v40
  %v204 = vunpack.c.h.b16 %v40
  %v205 = vunpack.c.l.b16 %v41
  %v206 = vunpack.c.h.b16 %v41
  %v207 = vunpack.c.l.b16 %v42
  %v208 = vunpack.c.h.b16 %v42
  %v209 = vunpack.c.l.b16 %v43
  %v210 = vunpack.c.h.b16 %v43
  %v211 = vunpack.c.l.b16 %v44
  %v212 = vunpack.c.h.b16 %v44
  %v213 = vunpack.c.l.b16 %v45
  %v214 = vunpack.c.h.b16 %v45
  %v215 = vunpack.c.l.b16 %v46
  %v216 = vunpack.c.h.b16 %v46
  %v217 = vunpack.c.l.b16 %v47
  %v218 = vunpack.c.h.b16 %v47
  %v219 = vunpack.c.l.b16 %v48
  %v220 = vunpack.c.h.b16 %v48
  %v221 = vunpack.c.l.b16 %v49
  %v222 = vunpack.c.h.b16 %v49
  %v223 = vunpack.c.l.b16 %v50
  %v224 = vunpack.c.h.b16 %v50
  %v225 = vunpack.c.l.b16 %v51
  %v226 = vunpack.c.h.b16 %v51
  %v227 = vunpack.c.l.b16 %v52
  %v228 = vunpack.c.h.b16 %v52
  %v229 = vunpack.c.l.b16 %v53
  %v230 = vunpack.c.h.b16 %v53
  %v231 = vunpack.c.l.b16 %v54
  %v232 = vunpack.c.h.b16 %v54
  %v233 = vunpack.c.l.b16 %v55
  %v234 = vunpack.c.h.b16 %v55
  %v235 = vunpack.c.l.b16 %v56
  %v236 = vunpack.c.h.b16 %v56
  %v237 = vunpack.c.l.b16 %v57
  %v238 = vunpack.c.h.b16 %v57
  %v239 = vunpack.c.l.b16 %v58
  %v240 = vunpack.c.h.b16 %v58
  %v241 = vunpack.c.l.b16 %v59
  %v242 = vunpack.c.h.b16 %v59
  %v243 = vunpack.c.l.b16 %v60
  %v244 = vunpack.c.h.b16 %v60
  %v245 = vunpack.c.l.b16 %v61
  %v246 = vunpack.c.h.b16 %v61
  %v247 = vunpack.c.l.b16 %v62
  %v248 = vunpack.c.h.b16 %v62
  %v249 = vunpack.c.l.b16 %v63
  %v250 = vunpack.c.h.b16 %v63
  %v251 = vunpack.c.l.b16 %v64
  %v252 = vunpack.c.h.b16 %v64
  %v253 = vunpack.c.l.b16 %v65
  %v254 = vunpack.c.h.b16 %v65
  %v255 = vunpack.c.l.b16 %v66
  %v256 = vunpack.c.h.b16 %v66
  %v257 = vunpack.c.l.b16 %v67
  %v258 = vunpack.c.h.b16 %v67
  %v259 = vunpack.c.l.b16 %v68
  %v260 = vunpack.c.h.b16 %v68
  %v261 = vunpack.c.l.b16 %v69
  %v262 = vunpack.c.h.b16 %v69
  %v263 = vunpack.c.l.b16 %v70
  %v264 = vunpack.c.h.b16 %v70
  %v265 = vunpack.c.l.b16 %v71
  %v266 = vunpack.c.h.b16 %v71
  %v267 = vunpack.c.l.b16 %v72
  %v268 = vunpack.c.h.b16 %v72
  %v269 = vunpack.c.l.b16 %v73
  %v270 = vunpack.c.h.b16 %v73
  %v271 = vunpack.c.l.b16 %v74
  %v272 = vunpack.c.h.b16 %v74
  %v273 = vunpack.c.l.b16 %v75
  %v274 = vunpack.c.h.b16 %v75
  %v275 = vunpack.c.l.b16 %v76
  %v276 = vunpack.c.h.b16 %v76
  %v277 = vunpack.c.l.b16 %v77
  %v278 = vunpack.c.h.b16 %v77
  %v279 = vunpack.c.l.b16 %v78
  %v280 = vunpack.c.h.b16 %v78
  %v281 = vunpack.c.l.b16 %v79
  %v282 = vunpack.c.h.b16 %v79
  %v283 = vunpack.c.l.b16 %v80
  %v284 = vunpack.c.h.b16 %v80
  %v285 = vunpack.c.l.b16 %v81
  %v286 = vunpack.c.h.b16 %v81
  %v287 = vunpack.c.l.b16 %v82
  %v288 = vunpack.c.h.b16 %v82
  %v289 = vunpack.c.l.b16 %v83
  %v290 = vunpack.c.h.b16 %v83
  %v291 = vunpack.c.l.b16 %v84
  %v292 = vunpack.c.h.b16 %v84
  %v293 = vunpack.c.l.b16 %v85
  %v294 = vunpack.c.h.b16 %v85
  %v295 = vunpack.c.l.b16 %v86
  %v296 = vunpack.c.h.b16 %v86
  %v297 = vunpack.c.l.b16 %v87
  %v298 = vunpack.c.h.b16 %v87
  %v299 = vunpack.c.l.b16 %v88
  %v300 = vunpack.c.h.b16 %v88
  %v301 = vunpack.c.l.b16 %v89
  %v302 = vunpack.c.h.b16 %v89
  %v303 = vunpack.c.l.b16 %v90
  %v304 = vunpack.c.h.b16 %v90
  %v305 = vpack.c.b16 %v181, %v177
  %v306 = vpack.c.b16 %v182, %v178
  %v307 = vpack.c.b16 %v183, %v179
  %v308 = vpack.c.b16 %v184, %v180
  %v309 = vpack.c.b16 %v189, %v185
  %v310 = vpack.c.b16 %v190, %v186
  %v311 = vpack.c.b16 %v191, %v187
  %v312 = vpack.c.b16 %v192, %v188
  %v313 = vpack.c.b16 %v197, %v193
  %v314 = vpack.c.b16 %v198, %v194
  %v315 = vpack.c.b16 %v199, %v195
  %v316 = vpack.c.b16 %v200, %v196
  %v317 = vpack.c.b16 %v205, %v201
  %v318 = vpack.c.b16 %v206, %v202
  %v319 = vpack.c.b16 %v207, %v203
  %v320 = vpack.c.b16 %v208, %v204
  %v321 = vpack.c.b16 %v213, %v209
  %v322 = vpack.c.b16 %v214, %v210
  %v323 = vpack.c.b16 %v215, %v211
  %v324 = vpack.c.b16 %v216, %v212
  %v325 = vpack.c.b16 %v221, %v217
  %v326 = vpack.c.b16 %v222, %v218
  %v327 = vpack.c.b16 %v223, %v219
  %v328 = vpack.c.b16 %v224, %v220
  %v329 = vpack.c.b16 %v229, %v225
  %v330 = vpack.c.b16 %v230, %v226
  %v331 = vpack.c.b16 %v231, %v227
  %v332 = vpack.c.b16 %v232, %v228
  %v333 = vpack.c.b16 %v237, %v233
  %v334 = vpack.c.b16 %v238, %v234
  %v335 = vpack.c.b16 %v239, %v235
  %v336 = vpack.c.b16 %v240, %v236
  %v337 = vpack.c.b16 %v245, %v241
  %v338 = vpack.c.b16 %v246, %v242
  %v339 = vpack.c.b16 %v247, %v243
  %v340 = vpack.c.b16 %v248, %v244
  %v341 = vpack.c.b16 %v253, %v249
  %v342 = vpack.c.b16 %v254, %v250
  %v343 = vpack.c.b16 %v255, %v251
  %v344 = vpack.c.b16 %v256, %v252
  %v345 = vpack.c.b16 %v261, %v257
  %v346 = vpack.c.b16 %v262, %v258
  %v347 = vpack.c.b16 %v263, %v259
  %v348 = vpack.c.b16 %v264, %v260
  %v349 = vpack.c.b16 %v269, %v265
  %v350 = vpack.c.b16 %v270, %v266
  %v351 = vpack.c.b16 %v271, %v267
  %v352 = vpack.c.b16 %v272, %v268
  %v353 = vpack.c.b16 %v277, %v273
  %v354 = vpack.c.b16 %v278, %v274
  %v355 = vpack.c.b16 %v279, %v275
  %v356 = vpack.c.b16 %v280, %v276
  %v357 = vpack.c.b16 %v285, %v281
  %v358 = vpack.c.b16 %v286, %v282
  %v359 = vpack.c.b16 %v287, %v283
  %v360 = vpack.c.b16 %v288, %v284
  %v361 = vpack.c.b16 %v293, %v289
  %v362 = vpack.c.b16 %v294, %v290
  %v363 = vpack.c.b16 %v295, %v291
  %v364 = vpack.c.b16 %v296, %v292
  %v365 = vpack.c.b16 %v301, %v297
  %v366 = vpack.c.b16 %v302, %v298
  %v367 = vpack.c.b16 %v303, %v299
  %v368 = vpack.c.b16 %v304, %v300
  %433 = vmatprep.subr.bf16.mxu0 %v334
  %434 = vmatpush1.bf16.msra.mxu0 %v333
  %435 = vmatprep.subr.bf16.mxu0 %v330
  %436 = vmatpush1.bf16.msra.mxu0 %v329
  %437 = vmatprep.subr.bf16.mxu0 %v326
  %438 = vmatpush1.bf16.msra.mxu0 %v325
  %439 = vmatprep.subr.bf16.mxu0 %v322
  %440 = vmatpush1.bf16.msra.mxu0 %v321
  %441 = vmatprep.subr.bf16.mxu0 %v318
  %442 = vmatpush1.bf16.msra.mxu0 %v317
  %443 = vmatprep.subr.bf16.mxu0 %v314
  %444 = vmatpush1.bf16.msra.mxu0 %v313
  %445 = vmatprep.subr.bf16.mxu0 %v310
  %446 = vmatpush1.bf16.msra.mxu0 %v309
  %447 = vmatprep.subr.bf16.mxu0 %v306
  %448 = vmatpush1.bf16.msra.mxu0 %v305
  %449 = vmatprep.subr.bf16.mxu0 %v366
  %450 = vmatpush2.bf16.msra.mxu0 %v365
  %451 = vmatprep.subr.bf16.mxu0 %v362
  %452 = vmatpush2.bf16.msra.mxu0 %v361
  %453 = vmatprep.subr.bf16.mxu0 %v358
  %454 = vmatpush2.bf16.msra.mxu0 %v357
  %455 = vmatprep.subr.bf16.mxu0 %v354
  %456 = vmatpush2.bf16.msra.mxu0 %v353
  %457 = vmatprep.subr.bf16.mxu0 %v350
  %458 = vmatpush2.bf16.msra.mxu0 %v349
  %459 = vmatprep.subr.bf16.mxu0 %v346
  %460 = vmatpush2.bf16.msra.mxu0 %v345
  %461 = vmatprep.subr.bf16.mxu0 %v342
  %462 = vmatpush2.bf16.msra.mxu0 %v341
  %463 = vmatprep.subr.bf16.mxu0 %v338
  %464 = vmatpush2.bf16.msra.mxu0 %v337
  %465 = vmatprep.mubr.bf16.mxu0 %v26
  %466 = vmatmul.mubr.bf16.gmra.mxu0 %v25
  %v467 = vpop.f32.mrf.mxu0
  %v468 = vadd.f32 %v96, %v467
  %v469 = vpop.f32.mrf.mxu0
  %v470 = vadd.f32 %v100, %v469
  %v471 = vpop.f32.mrf.mxu0
  %v472 = vadd.f32 %v96, %v471
  %v473 = vpop.f32.mrf.mxu0
  %v474 = vadd.f32 %v100, %v473
  %475 = vdwg.mxu0
  %476 = vmatprep.subr.bf16.mxu0 %v336
  %477 = vmatpush1.bf16.msra.mxu0 %v335
  %478 = vmatprep.subr.bf16.mxu0 %v332
  %479 = vmatpush1.bf16.msra.mxu0 %v331
  %480 = vmatprep.subr.bf16.mxu0 %v328
  %481 = vmatpush1.bf16.msra.mxu0 %v327
  %482 = vmatprep.subr.bf16.mxu0 %v324
  %483 = vmatpush1.bf16.msra.mxu0 %v323
  %484 = vmatprep.subr.bf16.mxu0 %v320
  %485 = vmatpush1.bf16.msra.mxu0 %v319
  %486 = vmatprep.subr.bf16.mxu0 %v316
  %487 = vmatpush1.bf16.msra.mxu0 %v315
  %488 = vmatprep.subr.bf16.mxu0 %v312
  %489 = vmatpush1.bf16.msra.mxu0 %v311
  %490 = vmatprep.subr.bf16.mxu0 %v308
  %491 = vmatpush1.bf16.msra.mxu0 %v307
  %492 = vmatprep.subr.bf16.mxu0 %v368
  %493 = vmatpush2.bf16.msra.mxu0 %v367
  %494 = vmatprep.subr.bf16.mxu0 %v364
  %495 = vmatpush2.bf16.msra.mxu0 %v363
  %496 = vmatprep.subr.bf16.mxu0 %v360
  %497 = vmatpush2.bf16.msra.mxu0 %v359
  %498 = vmatprep.subr.bf16.mxu0 %v356
  %499 = vmatpush2.bf16.msra.mxu0 %v355
  %500 = vmatprep.subr.bf16.mxu0 %v352
  %501 = vmatpush2.bf16.msra.mxu0 %v351
  %502 = vmatprep.subr.bf16.mxu0 %v348
  %503 = vmatpush2.bf16.msra.mxu0 %v347
  %504 = vmatprep.subr.bf16.mxu0 %v344
  %505 = vmatpush2.bf16.msra.mxu0 %v343
  %506 = vmatprep.subr.bf16.mxu0 %v340
  %507 = vmatpush2.bf16.msra.mxu0 %v339
  %508 = vmatprep.mubr.bf16.mxu0 %v26
  %509 = vmatmul.mubr.bf16.gmra.mxu0 %v25
  %v510 = vpop.f32.mrf.mxu0
  %v511 = vadd.f32 %v104, %v510
  %v512 = vpop.f32.mrf.mxu0
  %v513 = vadd.f32 %v108, %v512
  %v514 = vpop.f32.mrf.mxu0
  %v515 = vadd.f32 %v104, %v514
  %v516 = vpop.f32.mrf.mxu0
  %v517 = vadd.f32 %v108, %v516
  %518 = vdwg.mxu0
  %v519 = vmax.f32 %v468, 0.0
  %v520 = vmax.f32 %v470, 0.0
  %v521 = vmax.f32 %v511, 0.0
  %v522 = vmax.f32 %v513, 0.0
  %v523 = vmax.f32 %v472, 0.0
  %v524 = vmax.f32 %v474, 0.0
  %v525 = vmax.f32 %v515, 0.0
  %v526 = vmax.f32 %v517, 0.0
  %v527 = vpack.c.bf16 %v523, %v519
  %v528 = vpack.c.bf16 %v524, %v520
  %v529 = vpack.c.bf16 %v525, %v521
  %v530 = vpack.c.bf16 %v526, %v522
  %v531 = vld [vmem:[%s3] sm:$0xf]
  %v532 = vld [vmem:[%s3 + $0x4] sm:$0xf]
  %v533 = vld [vmem:[%s3 + $0x8] sm:$0xf]
  %v534 = vld [vmem:[%s3 + $0xc] sm:$0xf]
  %v535 = vld [vmem:[%s3 + $0x10] sm:$0xf]
  %v536 = vld [vmem:[%s3 + $0x14] sm:$0xf]
  %v537 = vld [vmem:[%s3 + $0x18] sm:$0xf]
  %v538 = vld [vmem:[%s3 + $0x1c] sm:$0xf]
  %v539 = vld [vmem:[%s3 + $0x20] sm:$0xf]
  %v540 = vld [vmem:[%s3 + $0x24] sm:$0xf]
  %v541 = vld [vmem:[%s3 + $0x28] sm:$0xf]
  %v542 = vld [vmem:[%s3 + $0x2c] sm:$0xf]
  %v543 = vld [vmem:[%s3 + $0x30] sm:$0xf]
  %v544 = vld [vmem:[%s3 + $0x34] sm:$0xf]
  %v545 = vld [vmem:[%s3 + $0x38] sm:$0xf]
  %v546 = vld [vmem:[%s3 + $0x3c] sm:$0xf]
  %v547 = vld [vmem:[%s3 + $0x40] sm:$0xf]
  %v548 = vld [vmem:[%s3 + $0x44] sm:$0xf]
  %v549 = vld [vmem:[%s3 + $0x48] sm:$0xf]
  %v550 = vld [vmem:[%s3 + $0x4c] sm:$0xf]
  %v551 = vld [vmem:[%s3 + $0x50] sm:$0xf]
  %v552 = vld [vmem:[%s3 + $0x54] sm:$0xf]
  %v553 = vld [vmem:[%s3 + $0x58] sm:$0xf]
  %v554 = vld [vmem:[%s3 + $0x5c] sm:$0xf]
  %v555 = vld [vmem:[%s3 + $0x60] sm:$0xf]
  %v556 = vld [vmem:[%s3 + $0x64] sm:$0xf]
  %v557 = vld [vmem:[%s3 + $0x68] sm:$0xf]
  %v558 = vld [vmem:[%s3 + $0x6c] sm:$0xf]
  %v559 = vld [vmem:[%s3 + $0x70] sm:$0xf]
  %v560 = vld [vmem:[%s3 + $0x74] sm:$0xf]
  %v561 = vld [vmem:[%s3 + $0x78] sm:$0xf]
  %v562 = vld [vmem:[%s3 + $0x7c] sm:$0xf]
  %v563 = vld [vmem:[%s3 + $0x80] sm:$0xf]
  %v564 = vld [vmem:[%s3 + $0x84] sm:$0xf]
  %v565 = vld [vmem:[%s3 + $0x88] sm:$0xf]
  %v566 = vld [vmem:[%s3 + $0x8c] sm:$0xf]
  %v567 = vld [vmem:[%s3 + $0x90] sm:$0xf]
  %v568 = vld [vmem:[%s3 + $0x94] sm:$0xf]
  %v569 = vld [vmem:[%s3 + $0x98] sm:$0xf]
  %v570 = vld [vmem:[%s3 + $0x9c] sm:$0xf]
  %v571 = vld [vmem:[%s3 + $0xa0] sm:$0xf]
  %v572 = vld [vmem:[%s3 + $0xa4] sm:$0xf]
  %v573 = vld [vmem:[%s3 + $0xa8] sm:$0xf]
  %v574 = vld [vmem:[%s3 + $0xac] sm:$0xf]
  %v575 = vld [vmem:[%s3 + $0xb0] sm:$0xf]
  %v576 = vld [vmem:[%s3 + $0xb4] sm:$0xf]
  %v577 = vld [vmem:[%s3 + $0xb8] sm:$0xf]
  %v578 = vld [vmem:[%s3 + $0xbc] sm:$0xf]
  %v579 = vld [vmem:[%s3 + $0xc0] sm:$0xf]
  %v580 = vld [vmem:[%s3 + $0xc4] sm:$0xf]
  %v581 = vld [vmem:[%s3 + $0xc8] sm:$0xf]
  %v582 = vld [vmem:[%s3 + $0xcc] sm:$0xf]
  %v583 = vld [vmem:[%s3 + $0xd0] sm:$0xf]
  %v584 = vld [vmem:[%s3 + $0xd4] sm:$0xf]
  %v585 = vld [vmem:[%s3 + $0xd8] sm:$0xf]
  %v586 = vld [vmem:[%s3 + $0xdc] sm:$0xf]
  %v587 = vld [vmem:[%s3 + $0xe0] sm:$0xf]
  %v588 = vld [vmem:[%s3 + $0xe4] sm:$0xf]
  %v589 = vld [vmem:[%s3 + $0xe8] sm:$0xf]
  %v590 = vld [vmem:[%s3 + $0xec] sm:$0xf]
  %v591 = vld [vmem:[%s3 + $0xf0] sm:$0xf]
  %v592 = vld [vmem:[%s3 + $0xf4] sm:$0xf]
  %v593 = vld [vmem:[%s3 + $0xf8] sm:$0xf]
  %v594 = vld [vmem:[%s3 + $0xfc] sm:$0xf]
  %v595 = vld [vmem:[%s4] sm:$0x1]
  %v597 = vlaneseq
  %v598 = vshrl.u32 %v597, 7
  %v599 = vsub.s32 0, %v598
  %v600 = vrot.slane %v595, %v599
  %v666 = vunpack.c.l.b16 %v531
  %v667 = vunpack.c.l.b16 %v532
  %v668 = vunpack.c.l.b16 %v533
  %v669 = vunpack.c.l.b16 %v534
  %v670 = vunpack.c.l.b16 %v535
  %v671 = vunpack.c.l.b16 %v536
  %v672 = vunpack.c.l.b16 %v537
  %v673 = vunpack.c.l.b16 %v538
  %v674 = vunpack.c.l.b16 %v539
  %v675 = vunpack.c.l.b16 %v540
  %v676 = vunpack.c.l.b16 %v541
  %v677 = vunpack.c.l.b16 %v542
  %v678 = vunpack.c.l.b16 %v543
  %v679 = vunpack.c.l.b16 %v544
  %v680 = vunpack.c.l.b16 %v545
  %v681 = vunpack.c.l.b16 %v546
  %v682 = vunpack.c.l.b16 %v547
  %v683 = vunpack.c.l.b16 %v548
  %v684 = vunpack.c.l.b16 %v549
  %v685 = vunpack.c.l.b16 %v550
  %v686 = vunpack.c.l.b16 %v551
  %v687 = vunpack.c.l.b16 %v552
  %v688 = vunpack.c.l.b16 %v553
  %v689 = vunpack.c.l.b16 %v554
  %v690 = vunpack.c.l.b16 %v555
  %v691 = vunpack.c.l.b16 %v556
  %v692 = vunpack.c.l.b16 %v557
  %v693 = vunpack.c.l.b16 %v558
  %v694 = vunpack.c.l.b16 %v559
  %v695 = vunpack.c.l.b16 %v560
  %v696 = vunpack.c.l.b16 %v561
  %v697 = vunpack.c.l.b16 %v562
  %v698 = vunpack.c.l.b16 %v563
  %v699 = vunpack.c.l.b16 %v564
  %v700 = vunpack.c.l.b16 %v565
  %v701 = vunpack.c.l.b16 %v566
  %v702 = vunpack.c.l.b16 %v567
  %v703 = vunpack.c.l.b16 %v568
  %v704 = vunpack.c.l.b16 %v569
  %v705 = vunpack.c.l.b16 %v570
  %v706 = vunpack.c.l.b16 %v571
  %v707 = vunpack.c.l.b16 %v572
  %v708 = vunpack.c.l.b16 %v573
  %v709 = vunpack.c.l.b16 %v574
  %v710 = vunpack.c.l.b16 %v575
  %v711 = vunpack.c.l.b16 %v576
  %v712 = vunpack.c.l.b16 %v577
  %v713 = vunpack.c.l.b16 %v578
  %v714 = vunpack.c.l.b16 %v579
  %v715 = vunpack.c.l.b16 %v580
  %v716 = vunpack.c.l.b16 %v581
  %v717 = vunpack.c.l.b16 %v582
  %v718 = vunpack.c.l.b16 %v583
  %v719 = vunpack.c.l.b16 %v584
  %v720 = vunpack.c.l.b16 %v585
  %v721 = vunpack.c.l.b16 %v586
  %v722 = vunpack.c.l.b16 %v587
  %v723 = vunpack.c.l.b16 %v588
  %v724 = vunpack.c.l.b16 %v589
  %v725 = vunpack.c.l.b16 %v590
  %v726 = vunpack.c.l.b16 %v591
  %v727 = vunpack.c.l.b16 %v592
  %v728 = vunpack.c.l.b16 %v593
  %v729 = vunpack.c.l.b16 %v594
  %v730 = vpack.c.b16 %v667, %v666
  %v731 = vpack.c.b16 %v669, %v668
  %v732 = vpack.c.b16 %v671, %v670
  %v733 = vpack.c.b16 %v673, %v672
  %v734 = vpack.c.b16 %v675, %v674
  %v735 = vpack.c.b16 %v677, %v676
  %v736 = vpack.c.b16 %v679, %v678
  %v737 = vpack.c.b16 %v681, %v680
  %v738 = vpack.c.b16 %v683, %v682
  %v739 = vpack.c.b16 %v685, %v684
  %v740 = vpack.c.b16 %v687, %v686
  %v741 = vpack.c.b16 %v689, %v688
  %v742 = vpack.c.b16 %v691, %v690
  %v743 = vpack.c.b16 %v693, %v692
  %v744 = vpack.c.b16 %v695, %v694
  %v745 = vpack.c.b16 %v697, %v696
  %v746 = vpack.c.b16 %v699, %v698
  %v747 = vpack.c.b16 %v701, %v700
  %v748 = vpack.c.b16 %v703, %v702
  %v749 = vpack.c.b16 %v705, %v704
  %v750 = vpack.c.b16 %v707, %v706
  %v751 = vpack.c.b16 %v709, %v708
  %v752 = vpack.c.b16 %v711, %v710
  %v753 = vpack.c.b16 %v713, %v712
  %v754 = vpack.c.b16 %v715, %v714
  %v755 = vpack.c.b16 %v717, %v716
  %v756 = vpack.c.b16 %v719, %v718
  %v757 = vpack.c.b16 %v721, %v720
  %v758 = vpack.c.b16 %v723, %v722
  %v759 = vpack.c.b16 %v725, %v724
  %v760 = vpack.c.b16 %v727, %v726
  %v761 = vpack.c.b16 %v729, %v728
  %794 = vmatprep.subr.bf16.mxu0 0
  %795 = vmatpush1.bf16.msra.mxu0 %v737
  %796 = vmatprep.subr.bf16.mxu0 0
  %797 = vmatpush1.bf16.msra.mxu0 %v736
  %798 = vmatprep.subr.bf16.mxu0 0
  %799 = vmatpush1.bf16.msra.mxu0 %v735
  %800 = vmatprep.subr.bf16.mxu0 0
  %801 = vmatpush1.bf16.msra.mxu0 %v734
  %802 = vmatprep.subr.bf16.mxu0 0
  %803 = vmatpush1.bf16.msra.mxu0 %v733
  %804 = vmatprep.subr.bf16.mxu0 0
  %805 = vmatpush1.bf16.msra.mxu0 %v732
  %806 = vmatprep.subr.bf16.mxu0 0
  %807 = vmatpush1.bf16.msra.mxu0 %v731
  %808 = vmatprep.subr.bf16.mxu0 0
  %809 = vmatpush1.bf16.msra.mxu0 %v730
  %810 = vmatprep.subr.bf16.mxu0 0
  %811 = vmatpush2.bf16.msra.mxu0 %v745
  %812 = vmatprep.subr.bf16.mxu0 0
  %813 = vmatpush2.bf16.msra.mxu0 %v744
  %814 = vmatprep.subr.bf16.mxu0 0
  %815 = vmatpush2.bf16.msra.mxu0 %v743
  %816 = vmatprep.subr.bf16.mxu0 0
  %817 = vmatpush2.bf16.msra.mxu0 %v742
  %818 = vmatprep.subr.bf16.mxu0 0
  %819 = vmatpush2.bf16.msra.mxu0 %v741
  %820 = vmatprep.subr.bf16.mxu0 0
  %821 = vmatpush2.bf16.msra.mxu0 %v740
  %822 = vmatprep.subr.bf16.mxu0 0
  %823 = vmatpush2.bf16.msra.mxu0 %v739
  %824 = vmatprep.subr.bf16.mxu0 0
  %825 = vmatpush2.bf16.msra.mxu0 %v738
  %826 = vmatprep.mubr.bf16.mxu0 %v528
  %827 = vmatmul.mubr.bf16.gmra.mxu0 %v527
  %v828 = vpop.f32.mrf.mxu0
  %v829 = vadd.f32 %v600, %v828
  %v830 = vpop.f32.mrf.mxu0
  %v831 = vpop.f32.mrf.mxu0
  %v832 = vadd.f32 %v600, %v831
  %v833 = vpop.f32.mrf.mxu0
  %834 = vdwg.mxu0
  %835 = vmatprep.subr.bf16.mxu0 0
  %836 = vmatpush1.bf16.msra.mxu0 %v753
  %837 = vmatprep.subr.bf16.mxu0 0
  %838 = vmatpush1.bf16.msra.mxu0 %v752
  %839 = vmatprep.subr.bf16.mxu0 0
  %840 = vmatpush1.bf16.msra.mxu0 %v751
  %841 = vmatprep.subr.bf16.mxu0 0
  %842 = vmatpush1.bf16.msra.mxu0 %v750
  %843 = vmatprep.subr.bf16.mxu0 0
  %844 = vmatpush1.bf16.msra.mxu0 %v749
  %845 = vmatprep.subr.bf16.mxu0 0
  %846 = vmatpush1.bf16.msra.mxu0 %v748
  %847 = vmatprep.subr.bf16.mxu0 0
  %848 = vmatpush1.bf16.msra.mxu0 %v747
  %849 = vmatprep.subr.bf16.mxu0 0
  %850 = vmatpush1.bf16.msra.mxu0 %v746
  %851 = vmatprep.subr.bf16.mxu0 0
  %852 = vmatpush2.bf16.msra.mxu0 %v761
  %853 = vmatprep.subr.bf16.mxu0 0
  %854 = vmatpush2.bf16.msra.mxu0 %v760
  %855 = vmatprep.subr.bf16.mxu0 0
  %856 = vmatpush2.bf16.msra.mxu0 %v759
  %857 = vmatprep.subr.bf16.mxu0 0
  %858 = vmatpush2.bf16.msra.mxu0 %v758
  %859 = vmatprep.subr.bf16.mxu0 0
  %860 = vmatpush2.bf16.msra.mxu0 %v757
  %861 = vmatprep.subr.bf16.mxu0 0
  %862 = vmatpush2.bf16.msra.mxu0 %v756
  %863 = vmatprep.subr.bf16.mxu0 0
  %864 = vmatpush2.bf16.msra.mxu0 %v755
  %865 = vmatprep.subr.bf16.mxu0 0
  %866 = vmatpush2.bf16.msra.mxu0 %v754
  %867 = vmatprep.mubr.bf16.mxu0 %v530
  %868 = vmatmul.mubr.bf16.gmra.mxu0 %v529
  %v869 = vpop.f32.mrf.mxu0
  %v870 = vadd.f32 %v829, %v869
  %v871 = vpop.f32.mrf.mxu0
  %v872 = vpop.f32.mrf.mxu0
  %v873 = vadd.f32 %v832, %v872
  %v874 = vpop.f32.mrf.mxu0
  %875 = vdwg.mxu0
  %876 = vst [vmem:[%s5] sm:$0xff] %v870
  %877 = vst [vmem:[%s5 + $0x8] sm:$0xff] %v873
  // Predicated region
  $region22: #{forward.7} parent=0 // pred_check
    _
  $region23: #{forward.7} parent=0 // pred_check_branch
    %879 = sbr.rel (0) target = $region25
  $region24: #{forward.7} parent=0 // pred_region
    _
  $region25: #{forward.7} parent=0 // pred_fallthru
    _
  // Predicated region
  $region26: #{forward.7} parent=0 // pred_check
    _
  $region27: #{forward.7} parent=0 // pred_check_branch
    %881 = sbr.rel (0) target = $region29
  $region28: #{forward.7} parent=0 // pred_region
    _
  $region29: #{forward.7} parent=0 // pred_fallthru
    _

</llo_original>
